<compile_context>
chip_gen: v7x
topology: tpu7x:2x2x1
jax: 0.10.0
libtpu: 0.0.40
codegen_flags: <defaults>
</compile_context>

<pallas_src>
import functools

import jax
import jax.numpy as jnp
from jax import lax
from jax.experimental import pallas as pl
from jax.experimental.pallas import tpu as pltpu

# "opt" hyper-parameters (deterministic, in-script)
INS_TEMP = 0.1     # opt.ins_temp
INS_TEMP_A = 0.5   # opt.ins_tempa

_NEG = -1e30       # finite "minus infinity": exp() underflows to 0, no inf/NaN


def _supcon_kernel(inv_t, inv_ta, tm, tk, batch,
                   labA_ref, labC_ref, fA_ref, fT_ref, aA_ref, aT_ref,
                   out_ref,
                   m_f, den_f, m_a, den_a, pos_sum, pos_cnt, d_sum, d2_sum):
    i = pl.program_id(0)        # anchor row block   ("parallel"  -> megacore)
    k = pl.program_id(1)        # column chunk       ("arbitrary" -> reduction)
    nk = pl.num_programs(1)

    @pl.when(k == 0)
    def _init():
        m_f[...] = jnp.full_like(m_f, _NEG)
        m_a[...] = jnp.full_like(m_a, _NEG)
        den_f[...] = jnp.zeros_like(den_f)
        den_a[...] = jnp.zeros_like(den_a)
        pos_sum[...] = jnp.zeros_like(pos_sum)
        pos_cnt[...] = jnp.zeros_like(pos_cnt)
        d_sum[...] = jnp.zeros_like(d_sum)
        d2_sum[...] = jnp.zeros_like(d2_sum)

    # (TM, TK) logits strips.  1/temperature folded into the small anchor
    # operand; RHS pre-transposed in the wrapper -> plain NN matmul on the MXU
    # (no per-step relayout, lane-dense along B even for D_a = 64); f32 accum.
    f_blk = fA_ref[...] * jnp.asarray(inv_t, fA_ref.dtype)
    a_blk = aA_ref[...] * jnp.asarray(inv_ta, aA_ref.dtype)
    adc = jnp.dot(f_blk, fT_ref[...], preferred_element_type=jnp.float32)
    aac = jnp.dot(a_blk, aT_ref[...], preferred_element_type=jnp.float32)

    # Masks built in-kernel from the tiny label blocks + global iotas.
    eq = labA_ref[...] == labC_ref[...]                        # (TM, TK) bool
    row_g = lax.broadcasted_iota(jnp.int32, (tm, tk), 0) + i * tm
    col_g = lax.broadcasted_iota(jnp.int32, (tm, tk), 1) + k * tk
    diag = row_g == col_g

    # Online self-excluded softmax denominators (diag folded BEFORE the exp,
    # so it is also excluded from the running max -> no cancellation).
    adc_m = jnp.where(diag, _NEG, adc)
    aac_m = jnp.where(diag, _NEG, aac)

    mf_new = jnp.maximum(m_f[...], jnp.max(adc_m, axis=1, keepdims=True))
    den_f[...] = (den_f[...] * jnp.exp(m_f[...] - mf_new)
                  + jnp.sum(jnp.exp(adc_m - mf_new), axis=1, keepdims=True))
    m_f[...] = mf_new

    ma_new = jnp.maximum(m_a[...], jnp.max(aac_m, axis=1, keepdims=True))
    den_a[...] = (den_a[...] * jnp.exp(m_a[...] - ma_new)
                  + jnp.sum(jnp.exp(aac_m - ma_new), axis=1, keepdims=True))
    m_a[...] = ma_new

    # Positive-pair statistics (mask = eq \ diag).  log_prob is never formed:
    # sum(mask*log_prob) = sum(mask*adc) - count*LSE_f, applied at finalize.
    posm = jnp.logical_and(eq, jnp.logical_not(diag))
    pos_sum[...] += jnp.sum(jnp.where(posm, adc, 0.0), axis=1, keepdims=True)
    pos_cnt[...] += jnp.sum(posm.astype(jnp.float32), axis=1, keepdims=True)

    # Negative pairs (mask_n = !eq, diag already inside eq):
    # diff = (adc - aac) - (LSE_f - LSE_a); accumulate raw moments of d only.
    d = adc - aac
    d_valid = jnp.where(eq, 0.0, d)
    d_sum[...] += jnp.sum(d_valid, axis=1, keepdims=True)
    d2_sum[...] += jnp.sum(d_valid * d, axis=1, keepdims=True)

    @pl.when(k == nk - 1)
    def _finalize():
        lse_f = m_f[...] + jnp.log(den_f[...])     # log sum_{j!=i} exp(adc_ij)
        lse_a = m_a[...] + jnp.log(den_a[...])
        cnt = pos_cnt[...]
        single = (cnt == 0.0).astype(jnp.float32)  # rows with no positives

        # EUP reciprocal + 2 Newton steps (~f32 exact) for the positive count.
        dd = cnt + single
        r = pl.reciprocal(dd, approx=True)
        r = r * (2.0 - dd * r)
        r = r * (2.0 - dd * r)

        mean_log_prob_pos = (pos_sum[...] - cnt * lse_f) * r
        row_pos = -mean_log_prob_pos * (1.0 - single)            # (TM, 1)

        n_neg = jnp.float32(batch) - 1.0 - cnt                   # |{j: !eq}|
        c = lse_f - lse_a
        sq = d2_sum[...] - 2.0 * c * d_sum[...] + n_neg * c * c  # sum diff^2

        s_pos = jnp.sum(row_pos)
        s_single = jnp.sum(single)
        s_sq = jnp.sum(sq)

        # Lane-dense per-block partials: lanes 0/1/2 of sublane 0 are used by
        # the wrapper, the rest is replicated/zero padding.
        lane = lax.broadcasted_iota(jnp.int32, (1, 8, 128), 2)
        out_ref[...] = jnp.where(lane == 0, s_pos,
                        jnp.where(lane == 1, s_single,
                         jnp.where(lane == 2, s_sq, 0.0)))


def _pick_row_tile(B, target=256):
    for t in (target, 128, 64, 32, 16, 8):
        if t <= B and B % t == 0:
            return t
    return B   # block == full dim is always layout-legal


def _pick_col_tile(B, target=512):
    for t in (target, 256, 128):          # must be a multiple of 128 (lanes)
        if t <= B and B % t == 0:
            return t
    return B   # block == full dim is always layout-legal


def supcon_loss_clear_new(features, attributes, labels,
                          temperature=INS_TEMP, temperature_a=INS_TEMP_A,
                          block_rows=None, block_cols=None, operand_dtype=None):
    """features: (B, D_f), attributes: (B, D_a), labels: (B,) int.

    operand_dtype: set to jnp.bfloat16 on v6e/v7x to halve operand DMA/VMEM and
    double MXU throughput (softmax math stays f32; loosen test tolerances).
    """
    B, D_f = features.shape
    _, D_a = attributes.shape
    if operand_dtype is not None:
        features = features.astype(operand_dtype)
        attributes = attributes.astype(operand_dtype)

    tm = _pick_row_tile(B) if block_rows is None else block_rows
    tk = _pick_col_tile(B) if block_cols is None else block_cols
    assert B % tm == 0 and (tm % 8 == 0 or tm == B)
    assert B % tk == 0 and (tk % 128 == 0 or tk == B)
    n_i = B // tm

    lab = labels.astype(jnp.int32)
    lab_col = lab.reshape(B, 1)          # anchor labels, blocked (tm, 1)
    lab_row = lab.reshape(1, B)          # column labels, blocked (1, tk)
    fT = jnp.transpose(features)         # (D_f, B): column operand, lane-dense
    aT = jnp.transpose(attributes)       # (D_a, B)

    kernel = functools.partial(_supcon_kernel, float(1.0 / temperature),
                               float(1.0 / temperature_a), tm, tk, B)

    itm = jnp.dtype(features.dtype).itemsize
    cost = pl.CostEstimate(
        flops=int(2 * B * B * (D_f + D_a)),
        transcendentals=int(2 * B * B + 6 * B),
        bytes_accessed=int(2 * itm * B * (D_f + D_a) + 8 * B
                           + 4 * n_i * 8 * 128))

    # VMEM estimate from actual block sizes; floor 32 MiB, ceiling 56 MiB
    # (safe even inside v7x's 64 MiB/TC; 128 MiB chips have ample headroom).
    vmem_est = (2 * itm * (tm + tk) * (D_f + D_a)    # anchor + column blocks (2 bufs)
                + 2 * 4 * (tm * 128 + tk)            # lane-padded label blocks
                + 12 * 4 * tm * tk                   # live (TM, TK) temporaries
                + 8 * 4 * tm * 128                   # lane-padded (TM, 1) scratch
                + (4 << 20))
    vmem_limit = int(min(max(vmem_est, 32 << 20), 56 << 20))

    partials = pl.pallas_call(
        kernel,
        grid=(n_i, B // tk),
        in_specs=[
            pl.BlockSpec((tm, 1),   lambda i, k: (i, 0)),   # anchor labels
            pl.BlockSpec((1, tk),   lambda i, k: (0, k)),   # column labels
            pl.BlockSpec((tm, D_f), lambda i, k: (i, 0)),   # anchor features
            pl.BlockSpec((D_f, tk), lambda i, k: (0, k)),   # feature columns (pre-T)
            pl.BlockSpec((tm, D_a), lambda i, k: (i, 0)),   # anchor attributes
            pl.BlockSpec((D_a, tk), lambda i, k: (0, k)),   # attribute columns (pre-T)
        ],
        out_specs=pl.BlockSpec((1, 8, 128), lambda i, k: (i, 0, 0)),
        out_shape=jax.ShapeDtypeStruct((n_i, 8, 128), jnp.float32),
        scratch_shapes=[pltpu.VMEM((tm, 1), jnp.float32)] * 8,
        compiler_params=pltpu.CompilerParams(
            # row-block axis independent -> "parallel" (megacore on v7x);
            # column/reduction axis -> "arbitrary".
            dimension_semantics=("parallel", "arbitrary"),
            vmem_limit_bytes=vmem_limit),
        cost_estimate=cost,
    )(lab_col, lab_row, features, fT, attributes, aT)

    # Final tiny reductions + divisions in JAX glue (works with megacore).
    totals = jnp.sum(partials[:, 0, :], axis=0)          # (128,)
    # TODO(synk): divide-by-zero if every sample is a singleton (matches the
    # PyTorch reference, which is also unguarded).
    loss_pos = totals[0] / (jnp.float32(B) - totals[1])
    loss_neg = totals[2] / jnp.float32(B * B)
    return loss_pos, loss_neg


def _reference(features, attributes, labels, t, ta):
    # pure-JAX transcription of the PyTorch module, for validation
    B = features.shape[0]
    labels = labels.reshape(-1, 1)
    mask = (labels == labels.T).astype(jnp.float32)
    mask_n = 1.0 - mask
    adc = features @ features.T / t
    aac = attributes @ attributes.T / ta
    logits = adc - jnp.max(adc, axis=1, keepdims=True)
    aa_logits = aac - jnp.max(aac, axis=1, keepdims=True)
    logits_mask = 1.0 - jnp.eye(B, dtype=jnp.float32)
    mask = mask * logits_mask
    single = (jnp.sum(mask, axis=1) == 0).astype(jnp.float32)
    exp_logits = jnp.exp(logits) * logits_mask
    log_prob = logits - jnp.log(jnp.sum(exp_logits, axis=1, keepdims=True))
    exp_aalogits = jnp.exp(aa_logits) * logits_mask
    log_aaprob = aa_logits - jnp.log(jnp.sum(exp_aalogits, axis=1, keepdims=True))
    mlpp = jnp.sum(mask * log_prob, axis=1) / (jnp.sum(mask, axis=1) + single)
    loss_pos = jnp.sum(-mlpp * (1 - single)) / (B - jnp.sum(single))
    loss_neg = jnp.mean((mask_n * log_prob - mask_n * log_aaprob) ** 2)
    return loss_pos, loss_neg


if __name__ == "__main__":
    key = jax.random.PRNGKey(0)
    k1, k2 = jax.random.split(key)

    B, D_F, D_A = 256, 128, 64
    features = jax.random.normal(k1, (B, D_F), dtype=jnp.float32)
    attributes = jax.random.normal(k2, (B, D_A), dtype=jnp.float32)
    # SupCon operates on L2-normalized embeddings; raw Gaussians + t=0.1
    # underflow the self-excluded softmax denominator in any implementation.
    features = features / jnp.linalg.norm(features, axis=1, keepdims=True)
    attributes = attributes / jnp.linalg.norm(attributes, axis=1, keepdims=True)
    # 127 labels appearing twice + 2 singletons -> exercises `single_samples`.
    labels = jnp.concatenate([jnp.repeat(jnp.arange(127, dtype=jnp.int32), 2),
                              jnp.array([1000, 1001], dtype=jnp.int32)])

    # 128x128 tiles -> grid (2, 2): exercises both the multi-row-block and the
    # multi-column-chunk online-softmax paths.
    loss_pos, loss_neg = supcon_loss_clear_new(features, attributes, labels,
                                               block_rows=128, block_cols=128)
    loss_pos = jax.block_until_ready(loss_pos)
    loss_neg = jax.block_until_ready(loss_neg)

    ref_pos, ref_neg = _reference(features, attributes, labels,
                                  INS_TEMP, INS_TEMP_A)
    assert jnp.allclose(loss_pos, ref_pos, rtol=1e-4, atol=1e-4), (loss_pos, ref_pos)
    assert jnp.allclose(loss_neg, ref_neg, rtol=1e-4, atol=1e-4), (loss_neg, ref_neg)

    print("KERNEL_OK")
</pallas_src>

<mosaic_0001>
module attributes {stable_mosaic.version = 11 : i64} {
  func.func @_supcon_kernel(%arg0: i32, %arg1: i32, %arg2: memref<128x1xi32, #tpu.memory_space<vmem>>, %arg3: memref<1x128xi32, #tpu.memory_space<vmem>>, %arg4: memref<128x128xf32, #tpu.memory_space<vmem>>, %arg5: memref<128x128xf32, #tpu.memory_space<vmem>>, %arg6: memref<128x64xf32, #tpu.memory_space<vmem>>, %arg7: memref<64x128xf32, #tpu.memory_space<vmem>>, %arg8: memref<1x8x128xf32, #tpu.memory_space<vmem>>, %arg9: memref<128x1xf32, #tpu.memory_space<vmem>>, %arg10: memref<128x1xf32, #tpu.memory_space<vmem>>, %arg11: memref<128x1xf32, #tpu.memory_space<vmem>>, %arg12: memref<128x1xf32, #tpu.memory_space<vmem>>, %arg13: memref<128x1xf32, #tpu.memory_space<vmem>>, %arg14: memref<128x1xf32, #tpu.memory_space<vmem>>, %arg15: memref<128x1xf32, #tpu.memory_space<vmem>>, %arg16: memref<128x1xf32, #tpu.memory_space<vmem>>) attributes {dimension_semantics = [#tpu.dimension_semantics<parallel>, #tpu.dimension_semantics<arbitrary>], iteration_bounds = array<i64: 2, 2>, scalar_prefetch = 0 : i64, scratch_operands = 8 : i64, tpu.core_type = #tpu.core_type<tc>, window_params = [{transform_indices = @transform_0, window_bounds = array<i64: 128, 1>}, {transform_indices = @transform_1, window_bounds = array<i64: 1, 128>}, {transform_indices = @transform_2, window_bounds = array<i64: 128, 128>}, {transform_indices = @transform_3, window_bounds = array<i64: 128, 128>}, {transform_indices = @transform_4, window_bounds = array<i64: 128, 64>}, {transform_indices = @transform_5, window_bounds = array<i64: 64, 128>}, {transform_indices = @transform_6, window_bounds = array<i64: 1, 8, 128>}]} {
    %c0_i32 = arith.constant 0 : i32
    %0 = arith.cmpi eq, %arg1, %c0_i32 : i32
    %1 = arith.extui %0 : i1 to i32
    %c0_i32_0 = arith.constant 0 : i32
    %2 = arith.cmpi ne, %1, %c0_i32_0 : i32
    scf.if %2 {
      %cst_66 = arith.constant -1.000000e+30 : f32
      %98 = vector.broadcast %cst_66 : f32 to vector<128x1xf32>
      %c0_67 = arith.constant 0 : index
      %c0_68 = arith.constant 0 : index
      %99 = vector.load %arg9[%c0_67, %c0_68] : memref<128x1xf32, #tpu.memory_space<vmem>>, vector<128x1xf32>
      tpu.vector_store %arg9[%c0_67, %c0_68], %98 {strides = array<i32>} : memref<128x1xf32, #tpu.memory_space<vmem>>, vector<128x1xf32>,
      %cst_69 = arith.constant -1.000000e+30 : f32
      %100 = vector.broadcast %cst_69 : f32 to vector<128x1xf32>
      %c0_70 = arith.constant 0 : index
      %c0_71 = arith.constant 0 : index
      %101 = vector.load %arg11[%c0_70, %c0_71] : memref<128x1xf32, #tpu.memory_space<vmem>>, vector<128x1xf32>
      tpu.vector_store %arg11[%c0_70, %c0_71], %100 {strides = array<i32>} : memref<128x1xf32, #tpu.memory_space<vmem>>, vector<128x1xf32>,
      %cst_72 = arith.constant 0.000000e+00 : f32
      %102 = vector.broadcast %cst_72 : f32 to vector<128x1xf32>
      %c0_73 = arith.constant 0 : index
      %c0_74 = arith.constant 0 : index
      %103 = vector.load %arg10[%c0_73, %c0_74] : memref<128x1xf32, #tpu.memory_space<vmem>>, vector<128x1xf32>
      tpu.vector_store %arg10[%c0_73, %c0_74], %102 {strides = array<i32>} : memref<128x1xf32, #tpu.memory_space<vmem>>, vector<128x1xf32>,
      %cst_75 = arith.constant 0.000000e+00 : f32
      %104 = vector.broadcast %cst_75 : f32 to vector<128x1xf32>
      %c0_76 = arith.constant 0 : index
      %c0_77 = arith.constant 0 : index
      %105 = vector.load %arg12[%c0_76, %c0_77] : memref<128x1xf32, #tpu.memory_space<vmem>>, vector<128x1xf32>
      tpu.vector_store %arg12[%c0_76, %c0_77], %104 {strides = array<i32>} : memref<128x1xf32, #tpu.memory_space<vmem>>, vector<128x1xf32>,
      %cst_78 = arith.constant 0.000000e+00 : f32
      %106 = vector.broadcast %cst_78 : f32 to vector<128x1xf32>
      %c0_79 = arith.constant 0 : index
      %c0_80 = arith.constant 0 : index
      %107 = vector.load %arg13[%c0_79, %c0_80] : memref<128x1xf32, #tpu.memory_space<vmem>>, vector<128x1xf32>
      tpu.vector_store %arg13[%c0_79, %c0_80], %106 {strides = array<i32>} : memref<128x1xf32, #tpu.memory_space<vmem>>, vector<128x1xf32>,
      %cst_81 = arith.constant 0.000000e+00 : f32
      %108 = vector.broadcast %cst_81 : f32 to vector<128x1xf32>
      %c0_82 = arith.constant 0 : index
      %c0_83 = arith.constant 0 : index
      %109 = vector.load %arg14[%c0_82, %c0_83] : memref<128x1xf32, #tpu.memory_space<vmem>>, vector<128x1xf32>
      tpu.vector_store %arg14[%c0_82, %c0_83], %108 {strides = array<i32>} : memref<128x1xf32, #tpu.memory_space<vmem>>, vector<128x1xf32>,
      %cst_84 = arith.constant 0.000000e+00 : f32
      %110 = vector.broadcast %cst_84 : f32 to vector<128x1xf32>
      %c0_85 = arith.constant 0 : index
      %c0_86 = arith.constant 0 : index
      %111 = vector.load %arg15[%c0_85, %c0_86] : memref<128x1xf32, #tpu.memory_space<vmem>>, vector<128x1xf32>
      tpu.vector_store %arg15[%c0_85, %c0_86], %110 {strides = array<i32>} : memref<128x1xf32, #tpu.memory_space<vmem>>, vector<128x1xf32>,
      %cst_87 = arith.constant 0.000000e+00 : f32
      %112 = vector.broadcast %cst_87 : f32 to vector<128x1xf32>
      %c0_88 = arith.constant 0 : index
      %c0_89 = arith.constant 0 : index
      %113 = vector.load %arg16[%c0_88, %c0_89] : memref<128x1xf32, #tpu.memory_space<vmem>>, vector<128x1xf32>
      tpu.vector_store %arg16[%c0_88, %c0_89], %112 {strides = array<i32>} : memref<128x1xf32, #tpu.memory_space<vmem>>, vector<128x1xf32>,
    } else {
    }
    %c0 = arith.constant 0 : index
    %c0_1 = arith.constant 0 : index
    %3 = vector.load %arg4[%c0, %c0_1] : memref<128x128xf32, #tpu.memory_space<vmem>>, vector<128x128xf32>
    %cst = arith.constant 1.000000e+01 : f32
    %4 = vector.broadcast %cst : f32 to vector<128x128xf32>
    %5 = arith.mulf %3, %4 : vector<128x128xf32>
    %c0_2 = arith.constant 0 : index
    %c0_3 = arith.constant 0 : index
    %6 = vector.load %arg6[%c0_2, %c0_3] : memref<128x64xf32, #tpu.memory_space<vmem>>, vector<128x64xf32>
    %cst_4 = arith.constant 2.000000e+00 : f32
    %7 = vector.broadcast %cst_4 : f32 to vector<128x64xf32>
    %8 = arith.mulf %6, %7 : vector<128x64xf32>
    %c0_5 = arith.constant 0 : index
    %c0_6 = arith.constant 0 : index
    %9 = vector.load %arg5[%c0_5, %c0_6] : memref<128x128xf32, #tpu.memory_space<vmem>>, vector<128x128xf32>
    %cst_7 = arith.constant dense<0.000000e+00> : vector<128x128xf32>
    %10 = tpu.matmul %5, %9, %cst_7 {dimension_numbers = #tpu.dot_dimension_numbers<[1], [0], [0], [1], [0, 0, 1, 1], [], []>} : vector<128x128xf32>, vector<128x128xf32>, vector<128x128xf32> -> vector<128x128xf32>
    %c0_8 = arith.constant 0 : index
    %c0_9 = arith.constant 0 : index
    %11 = vector.load %arg7[%c0_8, %c0_9] : memref<64x128xf32, #tpu.memory_space<vmem>>, vector<64x128xf32>
    %cst_10 = arith.constant dense<0.000000e+00> : vector<128x128xf32>
    %12 = tpu.matmul %8, %11, %cst_10 {dimension_numbers = #tpu.dot_dimension_numbers<[1], [0], [0], [1], [0, 0, 1, 1], [], []>} : vector<128x64xf32>, vector<64x128xf32>, vector<128x128xf32> -> vector<128x128xf32>
    %c0_11 = arith.constant 0 : index
    %c0_12 = arith.constant 0 : index
    %13 = vector.load %arg2[%c0_11, %c0_12] : memref<128x1xi32, #tpu.memory_space<vmem>>, vector<128x1xi32>
    %c0_13 = arith.constant 0 : index
    %c0_14 = arith.constant 0 : index
    %14 = vector.load %arg3[%c0_13, %c0_14] : memref<1x128xi32, #tpu.memory_space<vmem>>, vector<1x128xi32>
    %15 = vector.broadcast %13 : vector<128x1xi32> to vector<128x128xi32>
    %16 = vector.broadcast %14 : vector<1x128xi32> to vector<128x128xi32>
    %17 = arith.cmpi eq, %15, %16 : vector<128x128xi32>
    %18 = tpu.iota {dimensions = array<i32: 0>} : vector<128x128xi32>
    %c128_i32 = arith.constant 128 : i32
    %19 = arith.muli %arg0, %c128_i32 : i32
    %20 = vector.broadcast %19 : i32 to vector<128x128xi32>
    %21 = arith.addi %18, %20 : vector<128x128xi32>
    %22 = tpu.iota {dimensions = array<i32: 1>} : vector<128x128xi32>
    %c128_i32_15 = arith.constant 128 : i32
    %23 = arith.muli %arg1, %c128_i32_15 : i32
    %24 = vector.broadcast %23 : i32 to vector<128x128xi32>
    %25 = arith.addi %22, %24 : vector<128x128xi32>
    %26 = arith.cmpi eq, %21, %25 : vector<128x128xi32>
    %cst_16 = arith.constant -1.000000e+30 : f32
    %27 = vector.broadcast %cst_16 : f32 to vector<128x128xf32>
    %28 = arith.select %26, %27, %10 : vector<128x128xi1>, vector<128x128xf32>
    %cst_17 = arith.constant -1.000000e+30 : f32
    %29 = vector.broadcast %cst_17 : f32 to vector<128x128xf32>
    %30 = arith.select %26, %29, %12 : vector<128x128xi1>, vector<128x128xf32>
    %c0_18 = arith.constant 0 : index
    %c0_19 = arith.constant 0 : index
    %31 = vector.load %arg9[%c0_18, %c0_19] : memref<128x1xf32, #tpu.memory_space<vmem>>, vector<128x1xf32>
    %cst_20 = arith.constant dense<0xFF800000> : vector<128xf32>
    %32 = vector.multi_reduction <maximumf>, %28, %cst_20 [1] : vector<128x128xf32> to vector<128xf32>
    %33 = vector.shape_cast %32 : vector<128xf32> to vector<128x1xf32>
    %34 = arith.maximumf %31, %33 : vector<128x1xf32>
    %c0_21 = arith.constant 0 : index
    %c0_22 = arith.constant 0 : index
    %35 = vector.load %arg10[%c0_21, %c0_22] : memref<128x1xf32, #tpu.memory_space<vmem>>, vector<128x1xf32>
    %c0_23 = arith.constant 0 : index
    %c0_24 = arith.constant 0 : index
    %36 = vector.load %arg9[%c0_23, %c0_24] : memref<128x1xf32, #tpu.memory_space<vmem>>, vector<128x1xf32>
    %37 = arith.subf %36, %34 : vector<128x1xf32>
    %38 = math.exp %37 : vector<128x1xf32>
    %39 = arith.mulf %35, %38 : vector<128x1xf32>
    %40 = vector.broadcast %34 : vector<128x1xf32> to vector<128x128xf32>
    %41 = arith.subf %28, %40 : vector<128x128xf32>
    %42 = math.exp %41 : vector<128x128xf32>
    %cst_25 = arith.constant dense<0.000000e+00> : vector<128xf32>
    %43 = vector.multi_reduction <add>, %42, %cst_25 [1] : vector<128x128xf32> to vector<128xf32>
    %44 = vector.shape_cast %43 : vector<128xf32> to vector<128x1xf32>
    %45 = arith.addf %39, %44 : vector<128x1xf32>
    %c0_26 = arith.constant 0 : index
    %c0_27 = arith.constant 0 : index
    %46 = vector.load %arg10[%c0_26, %c0_27] : memref<128x1xf32, #tpu.memory_space<vmem>>, vector<128x1xf32>
    tpu.vector_store %arg10[%c0_26, %c0_27], %45 {strides = array<i32>} : memref<128x1xf32, #tpu.memory_space<vmem>>, vector<128x1xf32>,
    %c0_28 = arith.constant 0 : index
    %c0_29 = arith.constant 0 : index
    %47 = vector.load %arg9[%c0_28, %c0_29] : memref<128x1xf32, #tpu.memory_space<vmem>>, vector<128x1xf32>
    tpu.vector_store %arg9[%c0_28, %c0_29], %34 {strides = array<i32>} : memref<128x1xf32, #tpu.memory_space<vmem>>, vector<128x1xf32>,
    %c0_30 = arith.constant 0 : index
    %c0_31 = arith.constant 0 : index
    %48 = vector.load %arg11[%c0_30, %c0_31] : memref<128x1xf32, #tpu.memory_space<vmem>>, vector<128x1xf32>
    %cst_32 = arith.constant dense<0xFF800000> : vector<128xf32>
    %49 = vector.multi_reduction <maximumf>, %30, %cst_32 [1] : vector<128x128xf32> to vector<128xf32>
    %50 = vector.shape_cast %49 : vector<128xf32> to vector<128x1xf32>
    %51 = arith.maximumf %48, %50 : vector<128x1xf32>
    %c0_33 = arith.constant 0 : index
    %c0_34 = arith.constant 0 : index
    %52 = vector.load %arg12[%c0_33, %c0_34] : memref<128x1xf32, #tpu.memory_space<vmem>>, vector<128x1xf32>
    %c0_35 = arith.constant 0 : index
    %c0_36 = arith.constant 0 : index
    %53 = vector.load %arg11[%c0_35, %c0_36] : memref<128x1xf32, #tpu.memory_space<vmem>>, vector<128x1xf32>
    %54 = arith.subf %53, %51 : vector<128x1xf32>
    %55 = math.exp %54 : vector<128x1xf32>
    %56 = arith.mulf %52, %55 : vector<128x1xf32>
    %57 = vector.broadcast %51 : vector<128x1xf32> to vector<128x128xf32>
    %58 = arith.subf %30, %57 : vector<128x128xf32>
    %59 = math.exp %58 : vector<128x128xf32>
    %cst_37 = arith.constant dense<0.000000e+00> : vector<128xf32>
    %60 = vector.multi_reduction <add>, %59, %cst_37 [1] : vector<128x128xf32> to vector<128xf32>
    %61 = vector.shape_cast %60 : vector<128xf32> to vector<128x1xf32>
    %62 = arith.addf %56, %61 : vector<128x1xf32>
    %c0_38 = arith.constant 0 : index
    %c0_39 = arith.constant 0 : index
    %63 = vector.load %arg12[%c0_38, %c0_39] : memref<128x1xf32, #tpu.memory_space<vmem>>, vector<128x1xf32>
    tpu.vector_store %arg12[%c0_38, %c0_39], %62 {strides = array<i32>} : memref<128x1xf32, #tpu.memory_space<vmem>>, vector<128x1xf32>,
    %c0_40 = arith.constant 0 : index
    %c0_41 = arith.constant 0 : index
    %64 = vector.load %arg11[%c0_40, %c0_41] : memref<128x1xf32, #tpu.memory_space<vmem>>, vector<128x1xf32>
    tpu.vector_store %arg11[%c0_40, %c0_41], %51 {strides = array<i32>} : memref<128x1xf32, #tpu.memory_space<vmem>>, vector<128x1xf32>,
    %cst_42 = arith.constant dense<true> : vector<128x128xi1>
    %65 = arith.xori %26, %cst_42 : vector<128x128xi1>
    %66 = arith.andi %17, %65 : vector<128x128xi1>
    %c0_43 = arith.constant 0 : index
    %c0_44 = arith.constant 0 : index
    %67 = vector.load %arg13[%c0_43, %c0_44] : memref<128x1xf32, #tpu.memory_space<vmem>>, vector<128x1xf32>
    %cst_45 = arith.constant 0.000000e+00 : f32
    %68 = vector.broadcast %cst_45 : f32 to vector<128x128xf32>
    %69 = arith.select %66, %10, %68 : vector<128x128xi1>, vector<128x128xf32>
    %cst_46 = arith.constant dense<0.000000e+00> : vector<128xf32>
    %70 = vector.multi_reduction <add>, %69, %cst_46 [1] : vector<128x128xf32> to vector<128xf32>
    %71 = vector.shape_cast %70 : vector<128xf32> to vector<128x1xf32>
    %72 = arith.addf %67, %71 : vector<128x1xf32>
    %c0_47 = arith.constant 0 : index
    %c0_48 = arith.constant 0 : index
    %73 = vector.load %arg13[%c0_47, %c0_48] : memref<128x1xf32, #tpu.memory_space<vmem>>, vector<128x1xf32>
    tpu.vector_store %arg13[%c0_47, %c0_48], %72 {strides = array<i32>} : memref<128x1xf32, #tpu.memory_space<vmem>>, vector<128x1xf32>,
    %c0_49 = arith.constant 0 : index
    %c0_50 = arith.constant 0 : index
    %74 = vector.load %arg14[%c0_49, %c0_50] : memref<128x1xf32, #tpu.memory_space<vmem>>, vector<128x1xf32>
    %75 = arith.extui %66 : vector<128x128xi1> to vector<128x128xi32>
    %76 = arith.sitofp %75 : vector<128x128xi32> to vector<128x128xf32>
    %cst_51 = arith.constant dense<0.000000e+00> : vector<128xf32>
    %77 = vector.multi_reduction <add>, %76, %cst_51 [1] : vector<128x128xf32> to vector<128xf32>
    %78 = vector.shape_cast %77 : vector<128xf32> to vector<128x1xf32>
    %79 = arith.addf %74, %78 : vector<128x1xf32>
    %c0_52 = arith.constant 0 : index
    %c0_53 = arith.constant 0 : index
    %80 = vector.load %arg14[%c0_52, %c0_53] : memref<128x1xf32, #tpu.memory_space<vmem>>, vector<128x1xf32>
    tpu.vector_store %arg14[%c0_52, %c0_53], %79 {strides = array<i32>} : memref<128x1xf32, #tpu.memory_space<vmem>>, vector<128x1xf32>,
    %81 = arith.subf %10, %12 : vector<128x128xf32>
    %cst_54 = arith.constant 0.000000e+00 : f32
    %82 = vector.broadcast %cst_54 : f32 to vector<128x128xf32>
    %83 = arith.select %17, %82, %81 : vector<128x128xi1>, vector<128x128xf32>
    %c0_55 = arith.constant 0 : index
    %c0_56 = arith.constant 0 : index
    %84 = vector.load %arg15[%c0_55, %c0_56] : memref<128x1xf32, #tpu.memory_space<vmem>>, vector<128x1xf32>
    %cst_57 = arith.constant dense<0.000000e+00> : vector<128xf32>
    %85 = vector.multi_reduction <add>, %83, %cst_57 [1] : vector<128x128xf32> to vector<128xf32>
    %86 = vector.shape_cast %85 : vector<128xf32> to vector<128x1xf32>
    %87 = arith.addf %84, %86 : vector<128x1xf32>
    %c0_58 = arith.constant 0 : index
    %c0_59 = arith.constant 0 : index
    %88 = vector.load %arg15[%c0_58, %c0_59] : memref<128x1xf32, #tpu.memory_space<vmem>>, vector<128x1xf32>
    tpu.vector_store %arg15[%c0_58, %c0_59], %87 {strides = array<i32>} : memref<128x1xf32, #tpu.memory_space<vmem>>, vector<128x1xf32>,
    %c0_60 = arith.constant 0 : index
    %c0_61 = arith.constant 0 : index
    %89 = vector.load %arg16[%c0_60, %c0_61] : memref<128x1xf32, #tpu.memory_space<vmem>>, vector<128x1xf32>
    %90 = arith.mulf %83, %81 : vector<128x128xf32>
    %cst_62 = arith.constant dense<0.000000e+00> : vector<128xf32>
    %91 = vector.multi_reduction <add>, %90, %cst_62 [1] : vector<128x128xf32> to vector<128xf32>
    %92 = vector.shape_cast %91 : vector<128xf32> to vector<128x1xf32>
    %93 = arith.addf %89, %92 : vector<128x1xf32>
    %c0_63 = arith.constant 0 : index
    %c0_64 = arith.constant 0 : index
    %94 = vector.load %arg16[%c0_63, %c0_64] : memref<128x1xf32, #tpu.memory_space<vmem>>, vector<128x1xf32>
    tpu.vector_store %arg16[%c0_63, %c0_64], %93 {strides = array<i32>} : memref<128x1xf32, #tpu.memory_space<vmem>>, vector<128x1xf32>,
    %c1_i32 = arith.constant 1 : i32
    %95 = arith.cmpi eq, %arg1, %c1_i32 : i32
    %96 = arith.extui %95 : i1 to i32
    %c0_i32_65 = arith.constant 0 : i32
    %97 = arith.cmpi ne, %96, %c0_i32_65 : i32
    scf.if %97 {
      %c0_66 = arith.constant 0 : index
      %c0_67 = arith.constant 0 : index
      %98 = vector.load %arg9[%c0_66, %c0_67] : memref<128x1xf32, #tpu.memory_space<vmem>>, vector<128x1xf32>
      %c0_68 = arith.constant 0 : index
      %c0_69 = arith.constant 0 : index
      %99 = vector.load %arg10[%c0_68, %c0_69] : memref<128x1xf32, #tpu.memory_space<vmem>>, vector<128x1xf32>
      %100 = math.log %99 : vector<128x1xf32>
      %101 = arith.addf %98, %100 : vector<128x1xf32>
      %c0_70 = arith.constant 0 : index
      %c0_71 = arith.constant 0 : index
      %102 = vector.load %arg11[%c0_70, %c0_71] : memref<128x1xf32, #tpu.memory_space<vmem>>, vector<128x1xf32>
      %c0_72 = arith.constant 0 : index
      %c0_73 = arith.constant 0 : index
      %103 = vector.load %arg12[%c0_72, %c0_73] : memref<128x1xf32, #tpu.memory_space<vmem>>, vector<128x1xf32>
      %104 = math.log %103 : vector<128x1xf32>
      %105 = arith.addf %102, %104 : vector<128x1xf32>
      %c0_74 = arith.constant 0 : index
      %c0_75 = arith.constant 0 : index
      %106 = vector.load %arg14[%c0_74, %c0_75] : memref<128x1xf32, #tpu.memory_space<vmem>>, vector<128x1xf32>
      %cst_76 = arith.constant 0.000000e+00 : f32
      %107 = vector.broadcast %cst_76 : f32 to vector<128x1xf32>
      %108 = arith.cmpf oeq, %106, %107 : vector<128x1xf32>
      %109 = arith.extui %108 : vector<128x1xi1> to vector<128x1xi32>
      %110 = arith.sitofp %109 : vector<128x1xi32> to vector<128x1xf32>
      %111 = arith.addf %106, %110 : vector<128x1xf32>
      %112 = tpu.reciprocal %111 {approx = true} : vector<128x1xf32> -> vector<128x1xf32>
      %113 = arith.mulf %111, %112 : vector<128x1xf32>
      %cst_77 = arith.constant 2.000000e+00 : f32
      %114 = vector.broadcast %cst_77 : f32 to vector<128x1xf32>
      %115 = arith.subf %114, %113 : vector<128x1xf32>
      %116 = arith.mulf %112, %115 : vector<128x1xf32>
      %117 = arith.mulf %111, %116 : vector<128x1xf32>
      %cst_78 = arith.constant 2.000000e+00 : f32
      %118 = vector.broadcast %cst_78 : f32 to vector<128x1xf32>
      %119 = arith.subf %118, %117 : vector<128x1xf32>
      %120 = arith.mulf %116, %119 : vector<128x1xf32>
      %c0_79 = arith.constant 0 : index
      %c0_80 = arith.constant 0 : index
      %121 = vector.load %arg13[%c0_79, %c0_80] : memref<128x1xf32, #tpu.memory_space<vmem>>, vector<128x1xf32>
      %122 = arith.mulf %106, %101 : vector<128x1xf32>
      %123 = arith.subf %121, %122 : vector<128x1xf32>
      %124 = arith.mulf %123, %120 : vector<128x1xf32>
      %cst_81 = arith.constant 0.000000e+00 : f32
      %125 = vector.broadcast %cst_81 : f32 to vector<128x1xf32>
      %126 = arith.subf %125, %124 : vector<128x1xf32>
      %cst_82 = arith.constant 1.000000e+00 : f32
      %127 = vector.broadcast %cst_82 : f32 to vector<128x1xf32>
      %128 = arith.subf %127, %110 : vector<128x1xf32>
      %129 = arith.mulf %126, %128 : vector<128x1xf32>
      %cst_83 = arith.constant 2.560000e+02 : f32
      %cst_84 = arith.constant 1.000000e+00 : f32
      %130 = arith.subf %cst_83, %cst_84 : f32
      %131 = vector.broadcast %130 : f32 to vector<128x1xf32>
      %132 = arith.subf %131, %106 : vector<128x1xf32>
      %133 = arith.subf %101, %105 : vector<128x1xf32>
      %c0_85 = arith.constant 0 : index
      %c0_86 = arith.constant 0 : index
      %134 = vector.load %arg16[%c0_85, %c0_86] : memref<128x1xf32, #tpu.memory_space<vmem>>, vector<128x1xf32>
      %cst_87 = arith.constant 2.000000e+00 : f32
      %135 = vector.broadcast %cst_87 : f32 to vector<128x1xf32>
      %136 = arith.mulf %135, %133 : vector<128x1xf32>
      %c0_88 = arith.constant 0 : index
      %c0_89 = arith.constant 0 : index
      %137 = vector.load %arg15[%c0_88, %c0_89] : memref<128x1xf32, #tpu.memory_space<vmem>>, vector<128x1xf32>
      %138 = arith.mulf %136, %137 : vector<128x1xf32>
      %139 = arith.subf %134, %138 : vector<128x1xf32>
      %140 = arith.mulf %132, %133 : vector<128x1xf32>
      %141 = arith.mulf %140, %133 : vector<128x1xf32>
      %142 = arith.addf %139, %141 : vector<128x1xf32>
      %143 = vector.shape_cast %129 : vector<128x1xf32> to vector<1x128x1xf32>
      %cst_90 = arith.constant dense<0.000000e+00> : vector<1xf32>
      %144 = vector.multi_reduction <add>, %143, %cst_90 [1, 2] : vector<1x128x1xf32> to vector<1xf32>
      %145 = vector.shape_cast %144 : vector<1xf32> to vector<1x1x1xf32>
      %146 = vector.extract %145[0, 0, 0] : f32 from vector<1x1x1xf32>
      %147 = vector.shape_cast %110 : vector<128x1xf32> to vector<1x128x1xf32>
      %cst_91 = arith.constant dense<0.000000e+00> : vector<1xf32>
      %148 = vector.multi_reduction <add>, %147, %cst_91 [1, 2] : vector<1x128x1xf32> to vector<1xf32>
      %149 = vector.shape_cast %148 : vector<1xf32> to vector<1x1x1xf32>
      %150 = vector.extract %149[0, 0, 0] : f32 from vector<1x1x1xf32>
      %151 = vector.shape_cast %142 : vector<128x1xf32> to vector<1x128x1xf32>
      %cst_92 = arith.constant dense<0.000000e+00> : vector<1xf32>
      %152 = vector.multi_reduction <add>, %151, %cst_92 [1, 2] : vector<1x128x1xf32> to vector<1xf32>
      %153 = vector.shape_cast %152 : vector<1xf32> to vector<1x1x1xf32>
      %154 = vector.extract %153[0, 0, 0] : f32 from vector<1x1x1xf32>
      %155 = tpu.iota {dimensions = array<i32: 2>} : vector<1x8x128xi32>
      %c0_i32_93 = arith.constant 0 : i32
      %156 = vector.broadcast %c0_i32_93 : i32 to vector<1x8x128xi32>
      %157 = arith.cmpi eq, %155, %156 : vector<1x8x128xi32>
      %c1_i32_94 = arith.constant 1 : i32
      %158 = vector.broadcast %c1_i32_94 : i32 to vector<1x8x128xi32>
      %159 = arith.cmpi eq, %155, %158 : vector<1x8x128xi32>
      %c2_i32 = arith.constant 2 : i32
      %160 = vector.broadcast %c2_i32 : i32 to vector<1x8x128xi32>
      %161 = arith.cmpi eq, %155, %160 : vector<1x8x128xi32>
      %cst_95 = arith.constant 0.000000e+00 : f32
      %162 = vector.broadcast %154 : f32 to vector<1x8x128xf32>
      %163 = vector.broadcast %cst_95 : f32 to vector<1x8x128xf32>
      %164 = arith.select %161, %162, %163 : vector<1x8x128xi1>, vector<1x8x128xf32>
      %165 = vector.broadcast %150 : f32 to vector<1x8x128xf32>
      %166 = arith.select %159, %165, %164 : vector<1x8x128xi1>, vector<1x8x128xf32>
      %167 = vector.broadcast %146 : f32 to vector<1x8x128xf32>
      %168 = arith.select %157, %167, %166 : vector<1x8x128xi1>, vector<1x8x128xf32>
      %c0_96 = arith.constant 0 : index
      %c0_97 = arith.constant 0 : index
      %c0_98 = arith.constant 0 : index
      %169 = vector.load %arg8[%c0_96, %c0_97, %c0_98] : memref<1x8x128xf32, #tpu.memory_space<vmem>>, vector<1x8x128xf32>
      tpu.vector_store %arg8[%c0_96, %c0_97, %c0_98], %168 {strides = array<i32>} : memref<1x8x128xf32, #tpu.memory_space<vmem>>, vector<1x8x128xf32>,
    } else {
    }
    return
  }
  func.func @transform_0(%arg0: i32, %arg1: i32) -> (i32, i32) {
    %c0_i32 = arith.constant 0 : i32
    %c0_i32_0 = arith.constant 0 : i32
    return %arg0, %c0_i32 : i32, i32
  }
  func.func @transform_1(%arg0: i32, %arg1: i32) -> (i32, i32) {
    %c0_i32 = arith.constant 0 : i32
    %c0_i32_0 = arith.constant 0 : i32
    return %c0_i32, %arg1 : i32, i32
  }
  func.func @transform_2(%arg0: i32, %arg1: i32) -> (i32, i32) {
    %c0_i32 = arith.constant 0 : i32
    %c0_i32_0 = arith.constant 0 : i32
    return %arg0, %c0_i32 : i32, i32
  }
  func.func @transform_3(%arg0: i32, %arg1: i32) -> (i32, i32) {
    %c0_i32 = arith.constant 0 : i32
    %c0_i32_0 = arith.constant 0 : i32
    return %c0_i32, %arg1 : i32, i32
  }
  func.func @transform_4(%arg0: i32, %arg1: i32) -> (i32, i32) {
    %c0_i32 = arith.constant 0 : i32
    %c0_i32_0 = arith.constant 0 : i32
    return %arg0, %c0_i32 : i32, i32
  }
  func.func @transform_5(%arg0: i32, %arg1: i32) -> (i32, i32) {
    %c0_i32 = arith.constant 0 : i32
    %c0_i32_0 = arith.constant 0 : i32
    return %c0_i32, %arg1 : i32, i32
  }
  func.func @transform_6(%arg0: i32, %arg1: i32) -> (i32, i32, i32) {
    %c0_i32 = arith.constant 0 : i32
    %c0_i32_0 = arith.constant 0 : i32
    %c0_i32_1 = arith.constant 0 : i32
    return %arg0, %c0_i32, %c0_i32_0 : i32, i32, i32
  }
}

</mosaic_0001>

<llo_original>
// kernel: tpu_custom_call.1
$region0: #{tpu_custom_call.1}
  #allocation0 [shape = 'u32[]', space=smem, size = 0x4, offset = 0x4, fixed_abs, tag = 'smem constant byte address 0x4 - core index']
  #allocation1 [shape = 'u32[144,128]{1,0:T(1,128)}', space=vmem, size = 0x12000, scoped, tag = 'internal scratch']
  #allocation2 [shape = 'f32[128,1]{1,0:T(8,128)}', space=vmem, size = 0x10000, scoped, tag = 'scratch operand']
  #allocation3 [shape = 'f32[128,1]{1,0:T(8,128)}', space=vmem, size = 0x10000, scoped, tag = 'scratch operand']
  #allocation4 [shape = 'f32[128,1]{1,0:T(8,128)}', space=vmem, size = 0x10000, scoped, tag = 'scratch operand']
  #allocation5 [shape = 'f32[128,1]{1,0:T(8,128)}', space=vmem, size = 0x10000, scoped, tag = 'scratch operand']
  #allocation6 [shape = 'f32[128,1]{1,0:T(8,128)}', space=vmem, size = 0x10000, scoped, tag = 'scratch operand']
  #allocation7 [shape = 'f32[128,1]{1,0:T(8,128)}', space=vmem, size = 0x10000, scoped, tag = 'scratch operand']
  #allocation8 [shape = 'f32[128,1]{1,0:T(8,128)}', space=vmem, size = 0x10000, scoped, tag = 'scratch operand']
  #allocation9 [shape = 'f32[128,1]{1,0:T(8,128)}', space=vmem, size = 0x10000, scoped, tag = 'scratch operand']
  %s0 = inlined_call_operand.vmem [shape: s32[256,1], index: 0, kind: input, shape index: {}]
  %s1 = inlined_call_operand.vmem [shape: s32[1,256], index: 1, kind: input, shape index: {}]
  %s2 = inlined_call_operand.vmem [shape: f32[256,128], index: 2, kind: input, shape index: {}]
  %s3 = inlined_call_operand.vmem [shape: f32[128,256], index: 3, kind: input, shape index: {}]
  %s4 = inlined_call_operand.vmem [shape: f32[256,64], index: 4, kind: input, shape index: {}]
  %s5 = inlined_call_operand.hbm [shape: f32[64,256], index: 5, kind: input, shape index: {}]
  %s6 = inlined_call_operand.hbm [shape: f32[2,8,128], index: 6, kind: output, shape index: {}]
  %s7 = sld [smem:[#allocation0]]
  $region107: #{tpu_custom_call.1} parent=0
    _
  %s9 = ssub.s32 1, %s7
  %s10 = scalar_select 0, %s9, %s7
  $region1: #{tpu_custom_call.1} parent=0
    #allocation10 [shape = 'u8[131072]{0}', space=vmem, size = 0x20000, scoped, tag = 'input window, operand 3']
    #allocation11 [shape = 'u8[65536]{0}', space=vmem, size = 0x10000, scoped, tag = 'input window, operand 5']
    #allocation12 [shape = 's32[2]{0}', space=sflag, size = 0x8, scoped, tag = 'scoped memory for tpu_custom_call.1']
    #allocation13 [shape = 's32[2]{0}', space=sflag, size = 0x8, scoped, tag = 'scoped memory for tpu_custom_call.1']
    #allocation14 [shape = 'u8[8192]{0}', space=vmem, size = 0x2000, scoped, tag = 'output window, operand 0']
    %11 = vsyncpa [#allocation12], 0
    %s12 = scalar_lea.sflag [#allocation12], 1
    %13 = vsyncpa %s12, 0
    %14 = vsyncpa [#allocation13], 0
    %s15 = scalar_lea.sflag [#allocation13], 1
    %16 = vsyncpa %s15, 0
    loop: start=0, step=1, limit=6
    $region2: #{tpu_custom_call.1} parent=1 // loop_pre_header
      _
    $region3: #{tpu_custom_call.1} parent=1 // loop_header
      %s18 = sphi 0, %s22
      %p19 = scmp.ge.s32.totalorder %s18, 6
      %s25 = sphi 0, %s37
      %s26 = sphi 0, %s33
      %s27 = sphi 0, %s25
      %s28 = sphi 0, %s26
      %s29 = sphi 0, %s27
      %s30 = sphi 0, %s28
      %s40 = sphi 0, %s42
      %s43 = sphi 0, %s40
      %s44 = sphi 0, %s43
      %s60 = sphi 0, %s44
      %s66 = sphi 0, %s68
      %s69 = sphi 0, %s66
      %s70 = sphi 0, %s69
      %s86 = sphi 0, %s70
      %s92 = sphi 0, %s94
      %s95 = sphi 0, %s92
      %s96 = sphi 0, %s95
      %s112 = sphi 0, %s96
      %s118 = sphi 0, %s120
      %s121 = sphi 0, %s118
      %s122 = sphi 0, %s121
      %s138 = sphi 0, %s122
      %s144 = sphi 0, %s146
      %s147 = sphi 0, %s144
      %s148 = sphi 0, %s147
      %s164 = sphi 0, %s148
      %s170 = sphi 0, %s172
      %s173 = sphi 0, %s170
      %s174 = sphi 0, %s173
      %s190 = sphi 0, %s174
      %s196 = sphi 0, %s198
      %s199 = sphi 0, %s196
      %s200 = sphi 0, %s199
      %s216 = sphi 0, %s200
    $region4: #{tpu_custom_call.1} parent=1 // loop_header_branch
      %21 = sbr.rel (%p19) target = $region8
    $region5: #{tpu_custom_call.1} parent=1 // loop_body
      %s23 = ssub.s32 %s18, 1
      %s24 = ssub.s32 %s18, 2
      %s31 = sadd.s32 1, %s26
      %p32 = scmp.ge.s32.totalorder %s31, 2
      %s33 = scalar_select %p32, 0, %s31
      %s34 = sadd.s32 1, %s25
      %s35 = scalar_select %p32, %s34, %s25
      %p36 = scmp.ge.s32.totalorder %s35, 2
      %s37 = scalar_select %p36, 0, %s35
      %s38 = ssub.s32 %s25, %s37
      %p39 = scmp.eq.s32.totalorder %s38, 0
      %s41 = sadd.s32 %s40, 1
      %s42 = scalar_select %p39, %s40, %s41
      %p45 = pneg %p39
      %p46 = scmp.eq.s32.totalorder %s18, 3
      %p47 = por %p45, %p46
      %p48 = scmp.ne.s32.totalorder %s40, %s43
      %p49 = scmp.eq.s32.totalorder %s18, 0
      %p50 = por %p48, %p49
      %p51 = scmp.ne.s32.totalorder %s40, %s43
      %p52 = scmp.eq.s32.totalorder %s23, 3
      %p53 = por %p51, %p52
      %p54 = scmp.ne.s32.totalorder %s43, %s44
      %p55 = scmp.eq.s32.totalorder %s23, 0
      %p56 = por %p54, %p55
      %p57 = scmp.ne.s32.totalorder %s43, %s44
      %p58 = scmp.eq.s32.totalorder %s24, 3
      %p59 = por %p57, %p58
      %p61 = scmp.ne.s32.totalorder %s44, %s60
      %p62 = scmp.eq.s32.totalorder %s24, 0
      %p63 = por %p61, %p62
      %s64 = ssub.s32 %s26, %s33
      %p65 = scmp.eq.s32.totalorder %s64, 0
      %s67 = sadd.s32 %s66, 1
      %s68 = scalar_select %p65, %s66, %s67
      %p71 = pneg %p65
      %p72 = scmp.eq.s32.totalorder %s18, 3
      %p73 = por %p71, %p72
      %p74 = scmp.ne.s32.totalorder %s66, %s69
      %p75 = scmp.eq.s32.totalorder %s18, 0
      %p76 = por %p74, %p75
      %p77 = scmp.ne.s32.totalorder %s66, %s69
      %p78 = scmp.eq.s32.totalorder %s23, 3
      %p79 = por %p77, %p78
      %p80 = scmp.ne.s32.totalorder %s69, %s70
      %p81 = scmp.eq.s32.totalorder %s23, 0
      %p82 = por %p80, %p81
      %p83 = scmp.ne.s32.totalorder %s69, %s70
      %p84 = scmp.eq.s32.totalorder %s24, 3
      %p85 = por %p83, %p84
      %p87 = scmp.ne.s32.totalorder %s70, %s86
      %p88 = scmp.eq.s32.totalorder %s24, 0
      %p89 = por %p87, %p88
      %s90 = ssub.s32 %s25, %s37
      %p91 = scmp.eq.s32.totalorder %s90, 0
      %s93 = sadd.s32 %s92, 1
      %s94 = scalar_select %p91, %s92, %s93
      %p97 = pneg %p91
      %p98 = scmp.eq.s32.totalorder %s18, 3
      %p99 = por %p97, %p98
      %p100 = scmp.ne.s32.totalorder %s92, %s95
      %p101 = scmp.eq.s32.totalorder %s18, 0
      %p102 = por %p100, %p101
      %p103 = scmp.ne.s32.totalorder %s92, %s95
      %p104 = scmp.eq.s32.totalorder %s23, 3
      %p105 = por %p103, %p104
      %p106 = scmp.ne.s32.totalorder %s95, %s96
      %p107 = scmp.eq.s32.totalorder %s23, 0
      %p108 = por %p106, %p107
      %p109 = scmp.ne.s32.totalorder %s95, %s96
      %p110 = scmp.eq.s32.totalorder %s24, 3
      %p111 = por %p109, %p110
      %p113 = scmp.ne.s32.totalorder %s96, %s112
      %p114 = scmp.eq.s32.totalorder %s24, 0
      %p115 = por %p113, %p114
      %s116 = ssub.s32 %s26, %s33
      %p117 = scmp.eq.s32.totalorder %s116, 0
      %s119 = sadd.s32 %s118, 1
      %s120 = scalar_select %p117, %s118, %s119
      %p123 = pneg %p117
      %p124 = scmp.eq.s32.totalorder %s18, 3
      %p125 = por %p123, %p124
      %p126 = scmp.ne.s32.totalorder %s118, %s121
      %p127 = scmp.eq.s32.totalorder %s18, 0
      %p128 = por %p126, %p127
      %p129 = scmp.ne.s32.totalorder %s118, %s121
      %p130 = scmp.eq.s32.totalorder %s23, 3
      %p131 = por %p129, %p130
      %p132 = scmp.ne.s32.totalorder %s121, %s122
      %p133 = scmp.eq.s32.totalorder %s23, 0
      %p134 = por %p132, %p133
      %p135 = scmp.ne.s32.totalorder %s121, %s122
      %p136 = scmp.eq.s32.totalorder %s24, 3
      %p137 = por %p135, %p136
      %p139 = scmp.ne.s32.totalorder %s122, %s138
      %p140 = scmp.eq.s32.totalorder %s24, 0
      %p141 = por %p139, %p140
      %s142 = ssub.s32 %s25, %s37
      %p143 = scmp.eq.s32.totalorder %s142, 0
      %s145 = sadd.s32 %s144, 1
      %s146 = scalar_select %p143, %s144, %s145
      %p149 = pneg %p143
      %p150 = scmp.eq.s32.totalorder %s18, 3
      %p151 = por %p149, %p150
      %p152 = scmp.ne.s32.totalorder %s144, %s147
      %p153 = scmp.eq.s32.totalorder %s18, 0
      %p154 = por %p152, %p153
      %p155 = scmp.ne.s32.totalorder %s144, %s147
      %p156 = scmp.eq.s32.totalorder %s23, 3
      %p157 = por %p155, %p156
      %p158 = scmp.ne.s32.totalorder %s147, %s148
      %p159 = scmp.eq.s32.totalorder %s23, 0
      %p160 = por %p158, %p159
      %p161 = scmp.ne.s32.totalorder %s147, %s148
      %p162 = scmp.eq.s32.totalorder %s24, 3
      %p163 = por %p161, %p162
      %p165 = scmp.ne.s32.totalorder %s148, %s164
      %p166 = scmp.eq.s32.totalorder %s24, 0
      %p167 = por %p165, %p166
      %s168 = ssub.s32 %s26, %s33
      %p169 = scmp.eq.s32.totalorder %s168, 0
      %s171 = sadd.s32 %s170, 1
      %s172 = scalar_select %p169, %s170, %s171
      %p175 = pneg %p169
      %p176 = scmp.eq.s32.totalorder %s18, 3
      %p177 = por %p175, %p176
      %p178 = scmp.ne.s32.totalorder %s170, %s173
      %p179 = scmp.eq.s32.totalorder %s18, 0
      %p180 = por %p178, %p179
      %p181 = scmp.ne.s32.totalorder %s170, %s173
      %p182 = scmp.eq.s32.totalorder %s23, 3
      %p183 = por %p181, %p182
      %p184 = scmp.ne.s32.totalorder %s173, %s174
      %p185 = scmp.eq.s32.totalorder %s23, 0
      %p186 = por %p184, %p185
      %p187 = scmp.ne.s32.totalorder %s173, %s174
      %p188 = scmp.eq.s32.totalorder %s24, 3
      %p189 = por %p187, %p188
      %p191 = scmp.ne.s32.totalorder %s174, %s190
      %p192 = scmp.eq.s32.totalorder %s24, 0
      %p193 = por %p191, %p192
      %s194 = ssub.s32 %s25, %s37
      %p195 = scmp.eq.s32.totalorder %s194, 0
      %s197 = sadd.s32 %s196, 1
      %s198 = scalar_select %p195, %s196, %s197
      %p201 = pneg %p195
      %p202 = scmp.eq.s32.totalorder %s18, 3
      %p203 = por %p201, %p202
      %p204 = scmp.ne.s32.totalorder %s196, %s199
      %p205 = scmp.eq.s32.totalorder %s18, 0
      %p206 = por %p204, %p205
      %p207 = scmp.ne.s32.totalorder %s196, %s199
      %p208 = scmp.eq.s32.totalorder %s23, 3
      %p209 = por %p207, %p208
      %p210 = scmp.ne.s32.totalorder %s199, %s200
      %p211 = scmp.eq.s32.totalorder %s23, 0
      %p212 = por %p210, %p211
      %p213 = scmp.ne.s32.totalorder %s199, %s200
      %p214 = scmp.eq.s32.totalorder %s24, 3
      %p215 = por %p213, %p214
      %p217 = scmp.ne.s32.totalorder %s200, %s216
      %p218 = scmp.eq.s32.totalorder %s24, 0
      %p219 = por %p217, %p218
      %p220 = scmp.le.s32.totalorder 1, %s18
      %p221 = scmp.lt.s32.totalorder %s18, 5
      %p222 = pnand %p220, %p221
      %p223 = pneg %p222
      // Predicated region
      $region9: #{tpu_custom_call.1} parent=5 // pred_check
        _
      $region10: #{tpu_custom_call.1} parent=5 // pred_check_branch
        %225 = sbr.rel (%p222) target = $region12
      $region11: #{tpu_custom_call.1} parent=5 // pred_region
        %s226 = ssub.s32 %s18, 1
      $region12: #{tpu_custom_call.1} parent=5 // pred_fallthru
        _
      %p227 = scmp.lt.s32.totalorder %s18, 4
      // Predicated region
      $region13: #{tpu_custom_call.1} parent=5 // pred_check
        %p228 = pneg %p227
      $region14: #{tpu_custom_call.1} parent=5 // pred_check_branch
        %230 = sbr.rel (%p228) target = $region16
      $region15: #{tpu_custom_call.1} parent=5 // pred_region
        // Predicated region
        $region17: #{tpu_custom_call.1} parent=15 // pred_check
          %p231 = pneg %p50
        $region18: #{tpu_custom_call.1} parent=15 // pred_check_branch
          %233 = sbr.rel (%p231) target = $region20
        $region19: #{tpu_custom_call.1} parent=15 // pred_region
          %s234 = smul.u32 16, %s25
          %p235 = scmp.lt.s32.totalorder %s234, 31
          %s236 = scalar_select %p235, %s234, 31
          %s237 = smul.addr %s236, 8
          %s238 = scalar_lea.vmem %s0, %s237
          %s239 = smul.u32 16, %s25
        $region20: #{tpu_custom_call.1} parent=15 // pred_fallthru
          _
        // Predicated region
        $region21: #{tpu_custom_call.1} parent=15 // pred_check
          %p240 = pneg %p76
        $region22: #{tpu_custom_call.1} parent=15 // pred_check_branch
          %242 = sbr.rel (%p240) target = $region24
        $region23: #{tpu_custom_call.1} parent=15 // pred_region
          %p243 = scmp.lt.s32.totalorder %s26, 1
          %s244 = scalar_select %p243, %s26, 1
          %s245 = scalar_lea.vmem %s1, %s244
        $region24: #{tpu_custom_call.1} parent=15 // pred_fallthru
          _
        // Predicated region
        $region25: #{tpu_custom_call.1} parent=15 // pred_check
          %p246 = pneg %p102
        $region26: #{tpu_custom_call.1} parent=15 // pred_check_branch
          %248 = sbr.rel (%p246) target = $region28
        $region27: #{tpu_custom_call.1} parent=15 // pred_region
          %s249 = smul.u32 16, %s25
          %p250 = scmp.lt.s32.totalorder %s249, 31
          %s251 = scalar_select %p250, %s249, 31
          %s252 = smul.addr %s251, 8
          %s253 = scalar_lea.vmem %s2, %s252
          %s254 = smul.u32 16, %s25
        $region28: #{tpu_custom_call.1} parent=15 // pred_fallthru
          _
        // Predicated region
        $region29: #{tpu_custom_call.1} parent=15 // pred_check
          %p255 = pneg %p128
        $region30: #{tpu_custom_call.1} parent=15 // pred_check_branch
          %257 = sbr.rel (%p255) target = $region32
        $region31: #{tpu_custom_call.1} parent=15 // pred_region
          %s258 = sand.u32 %s118, 1
          %s259 = sand.u32 %s118, 1
          %s260 = smul.addr %s259, 128
          %s261 = scalar_lea.vmem [#allocation10], %s260
          %s262 = smul.addr %s26, 8
          %s263 = scalar_lea.vmem %s3, %s262
          // Predicated region
          $region33: #{tpu_custom_call.1} parent=31 // pred_check
            _
          $region34: #{tpu_custom_call.1} parent=31 // pred_check_branch
            %265 = sbr.rel (0) target = $region36
          $region35: #{tpu_custom_call.1} parent=31 // pred_region
            // Predicated region
            $region37: #{tpu_custom_call.1} parent=35 // pred_check
              _
            $region38: #{tpu_custom_call.1} parent=35 // pred_check_branch
              %267 = sbr.rel (0) target = $region40
            $region39: #{tpu_custom_call.1} parent=35 // pred_region
              // Predicated region
              $region52: #{tpu_custom_call.1} parent=39 // pred_check
                _
              $region53: #{tpu_custom_call.1} parent=39 // pred_check_branch
                %312 = sbr.rel (0) target = $region55
              $region54: #{tpu_custom_call.1} parent=39 // pred_region
                loop: start=0, step=1, limit=1
                $region56: #{tpu_custom_call.1} parent=54 // loop_pre_header
                  _
                $region57: #{tpu_custom_call.1} parent=54 // loop_header
                  %s314 = sphi 0, %s318
                  %p315 = scmp.ge.s32.totalorder %s314, 1
                  %s319 = sphi %s263, %s263
                  %s320 = sphi %s261, %s261
                $region58: #{tpu_custom_call.1} parent=54 // loop_header_branch
                  %317 = sbr.rel (%p315) target = $region62
                $region59: #{tpu_custom_call.1} parent=54 // loop_body
                  %v321 = vld [vmem:[%s319] sm:$0xff]
                  %322 = vst [vmem:[%s320] sm:$0xff] %v321
                  %v323 = vld [vmem:[%s319 + $0x10] sm:$0xff]
                  %324 = vst [vmem:[%s320 + $0x8] sm:$0xff] %v323
                  %v325 = vld [vmem:[%s319 + $0x20] sm:$0xff]
                  %326 = vst [vmem:[%s320 + $0x10] sm:$0xff] %v325
                  %v327 = vld [vmem:[%s319 + $0x30] sm:$0xff]
                  %328 = vst [vmem:[%s320 + $0x18] sm:$0xff] %v327
                  %v329 = vld [vmem:[%s319 + $0x40] sm:$0xff]
                  %330 = vst [vmem:[%s320 + $0x20] sm:$0xff] %v329
                  %v331 = vld [vmem:[%s319 + $0x50] sm:$0xff]
                  %332 = vst [vmem:[%s320 + $0x28] sm:$0xff] %v331
                  %v333 = vld [vmem:[%s319 + $0x60] sm:$0xff]
                  %334 = vst [vmem:[%s320 + $0x30] sm:$0xff] %v333
                  %v335 = vld [vmem:[%s319 + $0x70] sm:$0xff]
                  %336 = vst [vmem:[%s320 + $0x38] sm:$0xff] %v335
                  %v337 = vld [vmem:[%s319 + $0x80] sm:$0xff]
                  %338 = vst [vmem:[%s320 + $0x40] sm:$0xff] %v337
                  %v339 = vld [vmem:[%s319 + $0x90] sm:$0xff]
                  %340 = vst [vmem:[%s320 + $0x48] sm:$0xff] %v339
                  %v341 = vld [vmem:[%s319 + $0xa0] sm:$0xff]
                  %342 = vst [vmem:[%s320 + $0x50] sm:$0xff] %v341
                  %v343 = vld [vmem:[%s319 + $0xb0] sm:$0xff]
                  %344 = vst [vmem:[%s320 + $0x58] sm:$0xff] %v343
                  %v345 = vld [vmem:[%s319 + $0xc0] sm:$0xff]
                  %346 = vst [vmem:[%s320 + $0x60] sm:$0xff] %v345
                  %v347 = vld [vmem:[%s319 + $0xd0] sm:$0xff]
                  %348 = vst [vmem:[%s320 + $0x68] sm:$0xff] %v347
                  %v349 = vld [vmem:[%s319 + $0xe0] sm:$0xff]
                  %350 = vst [vmem:[%s320 + $0x70] sm:$0xff] %v349
                  %v351 = vld [vmem:[%s319 + $0xf0] sm:$0xff]
                  %352 = vst [vmem:[%s320 + $0x78] sm:$0xff] %v351
                $region60: #{tpu_custom_call.1} parent=54 // loop_footer
                  %s318 = sadd.s32 1, %s314
                $region61: #{tpu_custom_call.1} parent=54 // loop_footer_branch
                  %313 = sbr.rel target = $region57
                $region62: #{tpu_custom_call.1} parent=54 // loop_exit
                  _
              $region55: #{tpu_custom_call.1} parent=39 // pred_fallthru
                _
              // Predicated region
              $region63: #{tpu_custom_call.1} parent=39 // pred_check
                _
              $region64: #{tpu_custom_call.1} parent=39 // pred_check_branch
                %354 = sbr.rel target = $region66
              $region65: #{tpu_custom_call.1} parent=39 // pred_region
                _
              $region66: #{tpu_custom_call.1} parent=39 // pred_fallthru
                _
            $region40: #{tpu_custom_call.1} parent=35 // pred_fallthru
              _
            // Predicated region
            $region41: #{tpu_custom_call.1} parent=35 // pred_check
              _
            $region42: #{tpu_custom_call.1} parent=35 // pred_check_branch
              %269 = sbr.rel target = $region44
            $region43: #{tpu_custom_call.1} parent=35 // pred_region
              loop: start=0, step=1, limit=1
              $region45: #{tpu_custom_call.1} parent=43 // loop_pre_header
                _
              $region46: #{tpu_custom_call.1} parent=43 // loop_header
                %s272 = sphi 0, %s276
                %p273 = scmp.ge.s32.totalorder %s272, 1
                %s277 = sphi %s263, %s263
                %s278 = sphi %s261, %s261
              $region47: #{tpu_custom_call.1} parent=43 // loop_header_branch
                %275 = sbr.rel (%p273) target = $region51
              $region48: #{tpu_custom_call.1} parent=43 // loop_body
                %v279 = vld [vmem:[%s277] sm:$0xff]
                %280 = vst [vmem:[%s278] sm:$0xff] %v279
                %v281 = vld [vmem:[%s277 + $0x10] sm:$0xff]
                %282 = vst [vmem:[%s278 + $0x8] sm:$0xff] %v281
                %v283 = vld [vmem:[%s277 + $0x20] sm:$0xff]
                %284 = vst [vmem:[%s278 + $0x10] sm:$0xff] %v283
                %v285 = vld [vmem:[%s277 + $0x30] sm:$0xff]
                %286 = vst [vmem:[%s278 + $0x18] sm:$0xff] %v285
                %v287 = vld [vmem:[%s277 + $0x40] sm:$0xff]
                %288 = vst [vmem:[%s278 + $0x20] sm:$0xff] %v287
                %v289 = vld [vmem:[%s277 + $0x50] sm:$0xff]
                %290 = vst [vmem:[%s278 + $0x28] sm:$0xff] %v289
                %v291 = vld [vmem:[%s277 + $0x60] sm:$0xff]
                %292 = vst [vmem:[%s278 + $0x30] sm:$0xff] %v291
                %v293 = vld [vmem:[%s277 + $0x70] sm:$0xff]
                %294 = vst [vmem:[%s278 + $0x38] sm:$0xff] %v293
                %v295 = vld [vmem:[%s277 + $0x80] sm:$0xff]
                %296 = vst [vmem:[%s278 + $0x40] sm:$0xff] %v295
                %v297 = vld [vmem:[%s277 + $0x90] sm:$0xff]
                %298 = vst [vmem:[%s278 + $0x48] sm:$0xff] %v297
                %v299 = vld [vmem:[%s277 + $0xa0] sm:$0xff]
                %300 = vst [vmem:[%s278 + $0x50] sm:$0xff] %v299
                %v301 = vld [vmem:[%s277 + $0xb0] sm:$0xff]
                %302 = vst [vmem:[%s278 + $0x58] sm:$0xff] %v301
                %v303 = vld [vmem:[%s277 + $0xc0] sm:$0xff]
                %304 = vst [vmem:[%s278 + $0x60] sm:$0xff] %v303
                %v305 = vld [vmem:[%s277 + $0xd0] sm:$0xff]
                %306 = vst [vmem:[%s278 + $0x68] sm:$0xff] %v305
                %v307 = vld [vmem:[%s277 + $0xe0] sm:$0xff]
                %308 = vst [vmem:[%s278 + $0x70] sm:$0xff] %v307
                %v309 = vld [vmem:[%s277 + $0xf0] sm:$0xff]
                %310 = vst [vmem:[%s278 + $0x78] sm:$0xff] %v309
              $region49: #{tpu_custom_call.1} parent=43 // loop_footer
                %s276 = sadd.s32 1, %s272
              $region50: #{tpu_custom_call.1} parent=43 // loop_footer_branch
                %271 = sbr.rel target = $region46
              $region51: #{tpu_custom_call.1} parent=43 // loop_exit
                _
            $region44: #{tpu_custom_call.1} parent=35 // pred_fallthru
              _
          $region36: #{tpu_custom_call.1} parent=31 // pred_fallthru
            _
          %355 = vnop
        $region32: #{tpu_custom_call.1} parent=15 // pred_fallthru
          _
        // Predicated region
        $region67: #{tpu_custom_call.1} parent=15 // pred_check
          %p356 = pneg %p154
        $region68: #{tpu_custom_call.1} parent=15 // pred_check_branch
          %358 = sbr.rel (%p356) target = $region70
        $region69: #{tpu_custom_call.1} parent=15 // pred_region
          %s359 = smul.u32 16, %s25
          %p360 = scmp.lt.s32.totalorder %s359, 31
          %s361 = scalar_select %p360, %s359, 31
          %s362 = smul.addr %s361, 8
          %s363 = scalar_lea.vmem %s4, %s362
          %s364 = smul.u32 16, %s25
        $region70: #{tpu_custom_call.1} parent=15 // pred_fallthru
          _
        // Predicated region
        $region71: #{tpu_custom_call.1} parent=15 // pred_check
          %p365 = pneg %p180
        $region72: #{tpu_custom_call.1} parent=15 // pred_check_branch
          %367 = sbr.rel (%p365) target = $region74
        $region73: #{tpu_custom_call.1} parent=15 // pred_region
          %s368 = sand.u32 %s170, 1
          %s369 = scalar_lea.sflag [#allocation12], %s368
          %s370 = sand.u32 %s170, 1
          %s371 = smul.addr %s370, 64
          %s372 = scalar_lea.vmem [#allocation11], %s371
          %s374 = ssub.s32 1024, 1024
          %375 = vsyncadd %s369, %s374
          %s376 = smul.addr %s26, 128
          %s377 = scalar_lea.hbm %s5, %s376
          %s378 = sshll.u32 %s372, 4
          %s379 = int_to_ptr.vmem [resolvable:$true] %s378
          %384 = dma.hbm_to_vmem [thread:$0]  %s377, 1024, %s379, %s369, 256, 128, 8
        $region74: #{tpu_custom_call.1} parent=15 // pred_fallthru
          _
      $region16: #{tpu_custom_call.1} parent=5 // pred_fallthru
        _
      %p385 = scmp.le.s32.totalorder 1, %s18
      %p386 = scmp.lt.s32.totalorder %s18, 5
      %p387 = pnand %p385, %p386
      %p388 = pneg %p387
      // Predicated region
      $region75: #{tpu_custom_call.1} parent=5 // pred_check
        _
      $region76: #{tpu_custom_call.1} parent=5 // pred_check_branch
        %390 = sbr.rel (%p387) target = $region78
      $region77: #{tpu_custom_call.1} parent=5 // pred_region
        %s391 = ssub.s32 %s18, 1
        %s392 = sand.u32 %s121, 1
        %s393 = sand.u32 %s121, 1
        %s394 = smul.addr %s393, 128
        %s395 = scalar_lea.vmem [#allocation10], %s394
        // Predicated region
        $region79: #{tpu_custom_call.1} parent=77 // pred_check
          %p396 = pneg %p134
        $region80: #{tpu_custom_call.1} parent=77 // pred_check_branch
          %398 = sbr.rel (%p396) target = $region82
        $region81: #{tpu_custom_call.1} parent=77 // pred_region
          _
        $region82: #{tpu_custom_call.1} parent=77 // pred_fallthru
          _
        %s399 = sand.u32 %s173, 1
        %s400 = scalar_lea.sflag [#allocation12], %s399
        %s401 = sand.u32 %s173, 1
        %s402 = smul.addr %s401, 64
        %s403 = scalar_lea.vmem [#allocation11], %s402
        // Predicated region
        $region83: #{tpu_custom_call.1} parent=77 // pred_check
          %p404 = pneg %p186
        $region84: #{tpu_custom_call.1} parent=77 // pred_check_branch
          %406 = sbr.rel (%p404) target = $region86
        $region85: #{tpu_custom_call.1} parent=77 // pred_region
          %407 = dma.done %s400, 1024
        $region86: #{tpu_custom_call.1} parent=77 // pred_fallthru
          _
        %s408 = smul.u32 16, %s27
        %p409 = scmp.lt.s32.totalorder %s408, 31
        %s410 = scalar_select %p409, %s408, 31
        %s411 = smul.addr %s410, 8
        %s412 = scalar_lea.vmem %s0, %s411
        %p413 = pneg %p56
        %p414 = pneg %p53
        %p415 = scmp.lt.s32.totalorder %s28, 1
        %s416 = scalar_select %p415, %s28, 1
        %s417 = scalar_lea.vmem %s1, %s416
        %p418 = pneg %p82
        %p419 = pneg %p79
        %s420 = smul.u32 16, %s27
        %p421 = scmp.lt.s32.totalorder %s420, 31
        %s422 = scalar_select %p421, %s420, 31
        %s423 = smul.addr %s422, 8
        %s424 = scalar_lea.vmem %s2, %s423
        %p425 = pneg %p108
        %p426 = pneg %p105
        %s427 = sand.u32 %s121, 1
        %s428 = sand.u32 %s121, 1
        %s429 = smul.addr %s428, 128
        %s430 = scalar_lea.vmem [#allocation10], %s429
        %p431 = pneg %p134
        %p432 = pneg %p131
        %s433 = smul.u32 16, %s27
        %p434 = scmp.lt.s32.totalorder %s433, 31
        %s435 = scalar_select %p434, %s433, 31
        %s436 = smul.addr %s435, 8
        %s437 = scalar_lea.vmem %s4, %s436
        %p438 = pneg %p160
        %p439 = pneg %p157
        %s440 = sand.u32 %s173, 1
        %s441 = scalar_lea.sflag [#allocation12], %s440
        %s442 = sand.u32 %s173, 1
        %s443 = smul.addr %s442, 64
        %s444 = scalar_lea.vmem [#allocation11], %s443
        %p445 = pneg %p186
        %p446 = pneg %p183
        %p447 = pneg %p212
        %p448 = pneg %p209
        %s449 = sand.u32 %s199, 1
        %s450 = scalar_lea.sflag [#allocation13], %s449
        %s451 = sand.u32 %s199, 1
        %s452 = smul.addr %s451, 8
        %s453 = scalar_lea.vmem [#allocation14], %s452
        %s454 = smul.u32 16, %s27
        %p455 = scmp.lt.s32.totalorder %s454, 31
        %s456 = scalar_select %p455, %s454, 31
        %s457 = smul.addr %s456, 8
        %s458 = scalar_lea.vmem %s0, %s457
        %s459 = smul.u32 16, %s27
        %p460 = scmp.lt.s32.totalorder %s28, 1
        %s461 = scalar_select %p460, %s28, 1
        %s462 = scalar_lea.vmem %s1, %s461
        %s463 = smul.u32 16, %s27
        %p464 = scmp.lt.s32.totalorder %s463, 31
        %s465 = scalar_select %p464, %s463, 31
        %s466 = smul.addr %s465, 8
        %s467 = scalar_lea.vmem %s2, %s466
        %s468 = smul.u32 16, %s27
        %s469 = smul.u32 16, %s27
        %p470 = scmp.lt.s32.totalorder %s469, 31
        %s471 = scalar_select %p470, %s469, 31
        %s472 = smul.addr %s471, 8
        %s473 = scalar_lea.vmem %s4, %s472
        %s474 = smul.u32 16, %s27
        %p475 = scmp.eq.s32.totalorder %s28, 0
        // Predicated region
        $region87: #{tpu_custom_call.1} parent=77 // pred_check
          %p476 = pneg %p475
        $region88: #{tpu_custom_call.1} parent=77 // pred_check_branch
          %478 = sbr.rel (%p476) target = $region90
        $region89: #{tpu_custom_call.1} parent=77 // pred_region
          %vm479 = vcmask 7168
          %480 = vst.msk [vmem:[#allocation2] sm:$0xff] %vm479, -1e+30
          %481 = vst.msk [vmem:[#allocation2 + $0x8] sm:$0xff] %vm479, -1e+30
          %482 = vst.msk [vmem:[#allocation2 + $0x10] sm:$0xff] %vm479, -1e+30
          %483 = vst.msk [vmem:[#allocation2 + $0x18] sm:$0xff] %vm479, -1e+30
          %484 = vst.msk [vmem:[#allocation2 + $0x20] sm:$0xff] %vm479, -1e+30
          %485 = vst.msk [vmem:[#allocation2 + $0x28] sm:$0xff] %vm479, -1e+30
          %486 = vst.msk [vmem:[#allocation2 + $0x30] sm:$0xff] %vm479, -1e+30
          %487 = vst.msk [vmem:[#allocation2 + $0x38] sm:$0xff] %vm479, -1e+30
          %488 = vst.msk [vmem:[#allocation2 + $0x40] sm:$0xff] %vm479, -1e+30
          %489 = vst.msk [vmem:[#allocation2 + $0x48] sm:$0xff] %vm479, -1e+30
          %490 = vst.msk [vmem:[#allocation2 + $0x50] sm:$0xff] %vm479, -1e+30
          %491 = vst.msk [vmem:[#allocation2 + $0x58] sm:$0xff] %vm479, -1e+30
          %492 = vst.msk [vmem:[#allocation2 + $0x60] sm:$0xff] %vm479, -1e+30
          %493 = vst.msk [vmem:[#allocation2 + $0x68] sm:$0xff] %vm479, -1e+30
          %494 = vst.msk [vmem:[#allocation2 + $0x70] sm:$0xff] %vm479, -1e+30
          %495 = vst.msk [vmem:[#allocation2 + $0x78] sm:$0xff] %vm479, -1e+30
          %496 = vst.msk [vmem:[#allocation4] sm:$0xff] %vm479, -1e+30
          %497 = vst.msk [vmem:[#allocation4 + $0x8] sm:$0xff] %vm479, -1e+30
          %498 = vst.msk [vmem:[#allocation4 + $0x10] sm:$0xff] %vm479, -1e+30
          %499 = vst.msk [vmem:[#allocation4 + $0x18] sm:$0xff] %vm479, -1e+30
          %500 = vst.msk [vmem:[#allocation4 + $0x20] sm:$0xff] %vm479, -1e+30
          %501 = vst.msk [vmem:[#allocation4 + $0x28] sm:$0xff] %vm479, -1e+30
          %502 = vst.msk [vmem:[#allocation4 + $0x30] sm:$0xff] %vm479, -1e+30
          %503 = vst.msk [vmem:[#allocation4 + $0x38] sm:$0xff] %vm479, -1e+30
          %504 = vst.msk [vmem:[#allocation4 + $0x40] sm:$0xff] %vm479, -1e+30
          %505 = vst.msk [vmem:[#allocation4 + $0x48] sm:$0xff] %vm479, -1e+30
          %506 = vst.msk [vmem:[#allocation4 + $0x50] sm:$0xff] %vm479, -1e+30
          %507 = vst.msk [vmem:[#allocation4 + $0x58] sm:$0xff] %vm479, -1e+30
          %508 = vst.msk [vmem:[#allocation4 + $0x60] sm:$0xff] %vm479, -1e+30
          %509 = vst.msk [vmem:[#allocation4 + $0x68] sm:$0xff] %vm479, -1e+30
          %510 = vst.msk [vmem:[#allocation4 + $0x70] sm:$0xff] %vm479, -1e+30
          %511 = vst.msk [vmem:[#allocation4 + $0x78] sm:$0xff] %vm479, -1e+30
          %512 = vst.msk [vmem:[#allocation3] sm:$0xff] %vm479, 0.0
          %513 = vst.msk [vmem:[#allocation3 + $0x8] sm:$0xff] %vm479, 0.0
          %514 = vst.msk [vmem:[#allocation3 + $0x10] sm:$0xff] %vm479, 0.0
          %515 = vst.msk [vmem:[#allocation3 + $0x18] sm:$0xff] %vm479, 0.0
          %516 = vst.msk [vmem:[#allocation3 + $0x20] sm:$0xff] %vm479, 0.0
          %517 = vst.msk [vmem:[#allocation3 + $0x28] sm:$0xff] %vm479, 0.0
          %518 = vst.msk [vmem:[#allocation3 + $0x30] sm:$0xff] %vm479, 0.0
          %519 = vst.msk [vmem:[#allocation3 + $0x38] sm:$0xff] %vm479, 0.0
          %520 = vst.msk [vmem:[#allocation3 + $0x40] sm:$0xff] %vm479, 0.0
          %521 = vst.msk [vmem:[#allocation3 + $0x48] sm:$0xff] %vm479, 0.0
          %522 = vst.msk [vmem:[#allocation3 + $0x50] sm:$0xff] %vm479, 0.0
          %523 = vst.msk [vmem:[#allocation3 + $0x58] sm:$0xff] %vm479, 0.0
          %524 = vst.msk [vmem:[#allocation3 + $0x60] sm:$0xff] %vm479, 0.0
          %525 = vst.msk [vmem:[#allocation3 + $0x68] sm:$0xff] %vm479, 0.0
          %526 = vst.msk [vmem:[#allocation3 + $0x70] sm:$0xff] %vm479, 0.0
          %527 = vst.msk [vmem:[#allocation3 + $0x78] sm:$0xff] %vm479, 0.0
          %528 = vst.msk [vmem:[#allocation5] sm:$0xff] %vm479, 0.0
          %529 = vst.msk [vmem:[#allocation5 + $0x8] sm:$0xff] %vm479, 0.0
          %530 = vst.msk [vmem:[#allocation5 + $0x10] sm:$0xff] %vm479, 0.0
          %531 = vst.msk [vmem:[#allocation5 + $0x18] sm:$0xff] %vm479, 0.0
          %532 = vst.msk [vmem:[#allocation5 + $0x20] sm:$0xff] %vm479, 0.0
          %533 = vst.msk [vmem:[#allocation5 + $0x28] sm:$0xff] %vm479, 0.0
          %534 = vst.msk [vmem:[#allocation5 + $0x30] sm:$0xff] %vm479, 0.0
          %535 = vst.msk [vmem:[#allocation5 + $0x38] sm:$0xff] %vm479, 0.0
          %536 = vst.msk [vmem:[#allocation5 + $0x40] sm:$0xff] %vm479, 0.0
          %537 = vst.msk [vmem:[#allocation5 + $0x48] sm:$0xff] %vm479, 0.0
          %538 = vst.msk [vmem:[#allocation5 + $0x50] sm:$0xff] %vm479, 0.0
          %539 = vst.msk [vmem:[#allocation5 + $0x58] sm:$0xff] %vm479, 0.0
          %540 = vst.msk [vmem:[#allocation5 + $0x60] sm:$0xff] %vm479, 0.0
          %541 = vst.msk [vmem:[#allocation5 + $0x68] sm:$0xff] %vm479, 0.0
          %542 = vst.msk [vmem:[#allocation5 + $0x70] sm:$0xff] %vm479, 0.0
          %543 = vst.msk [vmem:[#allocation5 + $0x78] sm:$0xff] %vm479, 0.0
          %544 = vst.msk [vmem:[#allocation6] sm:$0xff] %vm479, 0.0
          %545 = vst.msk [vmem:[#allocation6 + $0x8] sm:$0xff] %vm479, 0.0
          %546 = vst.msk [vmem:[#allocation6 + $0x10] sm:$0xff] %vm479, 0.0
          %547 = vst.msk [vmem:[#allocation6 + $0x18] sm:$0xff] %vm479, 0.0
          %548 = vst.msk [vmem:[#allocation6 + $0x20] sm:$0xff] %vm479, 0.0
          %549 = vst.msk [vmem:[#allocation6 + $0x28] sm:$0xff] %vm479, 0.0
          %550 = vst.msk [vmem:[#allocation6 + $0x30] sm:$0xff] %vm479, 0.0
          %551 = vst.msk [vmem:[#allocation6 + $0x38] sm:$0xff] %vm479, 0.0
          %552 = vst.msk [vmem:[#allocation6 + $0x40] sm:$0xff] %vm479, 0.0
          %553 = vst.msk [vmem:[#allocation6 + $0x48] sm:$0xff] %vm479, 0.0
          %554 = vst.msk [vmem:[#allocation6 + $0x50] sm:$0xff] %vm479, 0.0
          %555 = vst.msk [vmem:[#allocation6 + $0x58] sm:$0xff] %vm479, 0.0
          %556 = vst.msk [vmem:[#allocation6 + $0x60] sm:$0xff] %vm479, 0.0
          %557 = vst.msk [vmem:[#allocation6 + $0x68] sm:$0xff] %vm479, 0.0
          %558 = vst.msk [vmem:[#allocation6 + $0x70] sm:$0xff] %vm479, 0.0
          %559 = vst.msk [vmem:[#allocation6 + $0x78] sm:$0xff] %vm479, 0.0
          %560 = vst.msk [vmem:[#allocation7] sm:$0xff] %vm479, 0.0
          %561 = vst.msk [vmem:[#allocation7 + $0x8] sm:$0xff] %vm479, 0.0
          %562 = vst.msk [vmem:[#allocation7 + $0x10] sm:$0xff] %vm479, 0.0
          %563 = vst.msk [vmem:[#allocation7 + $0x18] sm:$0xff] %vm479, 0.0
          %564 = vst.msk [vmem:[#allocation7 + $0x20] sm:$0xff] %vm479, 0.0
          %565 = vst.msk [vmem:[#allocation7 + $0x28] sm:$0xff] %vm479, 0.0
          %566 = vst.msk [vmem:[#allocation7 + $0x30] sm:$0xff] %vm479, 0.0
          %567 = vst.msk [vmem:[#allocation7 + $0x38] sm:$0xff] %vm479, 0.0
          %568 = vst.msk [vmem:[#allocation7 + $0x40] sm:$0xff] %vm479, 0.0
          %569 = vst.msk [vmem:[#allocation7 + $0x48] sm:$0xff] %vm479, 0.0
          %570 = vst.msk [vmem:[#allocation7 + $0x50] sm:$0xff] %vm479, 0.0
          %571 = vst.msk [vmem:[#allocation7 + $0x58] sm:$0xff] %vm479, 0.0
          %572 = vst.msk [vmem:[#allocation7 + $0x60] sm:$0xff] %vm479, 0.0
          %573 = vst.msk [vmem:[#allocation7 + $0x68] sm:$0xff] %vm479, 0.0
          %574 = vst.msk [vmem:[#allocation7 + $0x70] sm:$0xff] %vm479, 0.0
          %575 = vst.msk [vmem:[#allocation7 + $0x78] sm:$0xff] %vm479, 0.0
          %576 = vst.msk [vmem:[#allocation8] sm:$0xff] %vm479, 0.0
          %577 = vst.msk [vmem:[#allocation8 + $0x8] sm:$0xff] %vm479, 0.0
          %578 = vst.msk [vmem:[#allocation8 + $0x10] sm:$0xff] %vm479, 0.0
          %579 = vst.msk [vmem:[#allocation8 + $0x18] sm:$0xff] %vm479, 0.0
          %580 = vst.msk [vmem:[#allocation8 + $0x20] sm:$0xff] %vm479, 0.0
          %581 = vst.msk [vmem:[#allocation8 + $0x28] sm:$0xff] %vm479, 0.0
          %582 = vst.msk [vmem:[#allocation8 + $0x30] sm:$0xff] %vm479, 0.0
          %583 = vst.msk [vmem:[#allocation8 + $0x38] sm:$0xff] %vm479, 0.0
          %584 = vst.msk [vmem:[#allocation8 + $0x40] sm:$0xff] %vm479, 0.0
          %585 = vst.msk [vmem:[#allocation8 + $0x48] sm:$0xff] %vm479, 0.0
          %586 = vst.msk [vmem:[#allocation8 + $0x50] sm:$0xff] %vm479, 0.0
          %587 = vst.msk [vmem:[#allocation8 + $0x58] sm:$0xff] %vm479, 0.0
          %588 = vst.msk [vmem:[#allocation8 + $0x60] sm:$0xff] %vm479, 0.0
          %589 = vst.msk [vmem:[#allocation8 + $0x68] sm:$0xff] %vm479, 0.0
          %590 = vst.msk [vmem:[#allocation8 + $0x70] sm:$0xff] %vm479, 0.0
          %591 = vst.msk [vmem:[#allocation8 + $0x78] sm:$0xff] %vm479, 0.0
          %592 = vst.msk [vmem:[#allocation9] sm:$0xff] %vm479, 0.0
          %593 = vst.msk [vmem:[#allocation9 + $0x8] sm:$0xff] %vm479, 0.0
          %594 = vst.msk [vmem:[#allocation9 + $0x10] sm:$0xff] %vm479, 0.0
          %595 = vst.msk [vmem:[#allocation9 + $0x18] sm:$0xff] %vm479, 0.0
          %596 = vst.msk [vmem:[#allocation9 + $0x20] sm:$0xff] %vm479, 0.0
          %597 = vst.msk [vmem:[#allocation9 + $0x28] sm:$0xff] %vm479, 0.0
          %598 = vst.msk [vmem:[#allocation9 + $0x30] sm:$0xff] %vm479, 0.0
          %599 = vst.msk [vmem:[#allocation9 + $0x38] sm:$0xff] %vm479, 0.0
          %600 = vst.msk [vmem:[#allocation9 + $0x40] sm:$0xff] %vm479, 0.0
          %601 = vst.msk [vmem:[#allocation9 + $0x48] sm:$0xff] %vm479, 0.0
          %602 = vst.msk [vmem:[#allocation9 + $0x50] sm:$0xff] %vm479, 0.0
          %603 = vst.msk [vmem:[#allocation9 + $0x58] sm:$0xff] %vm479, 0.0
          %604 = vst.msk [vmem:[#allocation9 + $0x60] sm:$0xff] %vm479, 0.0
          %605 = vst.msk [vmem:[#allocation9 + $0x68] sm:$0xff] %vm479, 0.0
          %606 = vst.msk [vmem:[#allocation9 + $0x70] sm:$0xff] %vm479, 0.0
          %607 = vst.msk [vmem:[#allocation9 + $0x78] sm:$0xff] %vm479, 0.0
        $region90: #{tpu_custom_call.1} parent=77 // pred_fallthru
          _
        %v608 = vld [vmem:[%s467] sm:$0xff]
        %v609 = vld [vmem:[%s467 + $0x8] sm:$0xff]
        %v610 = vld [vmem:[%s467 + $0x10] sm:$0xff]
        %v611 = vld [vmem:[%s467 + $0x18] sm:$0xff]
        %v612 = vld [vmem:[%s467 + $0x20] sm:$0xff]
        %v613 = vld [vmem:[%s467 + $0x28] sm:$0xff]
        %v614 = vld [vmem:[%s467 + $0x30] sm:$0xff]
        %v615 = vld [vmem:[%s467 + $0x38] sm:$0xff]
        %v616 = vld [vmem:[%s467 + $0x40] sm:$0xff]
        %v617 = vld [vmem:[%s467 + $0x48] sm:$0xff]
        %v618 = vld [vmem:[%s467 + $0x50] sm:$0xff]
        %v619 = vld [vmem:[%s467 + $0x58] sm:$0xff]
        %v620 = vld [vmem:[%s467 + $0x60] sm:$0xff]
        %v621 = vld [vmem:[%s467 + $0x68] sm:$0xff]
        %v622 = vld [vmem:[%s467 + $0x70] sm:$0xff]
        %v623 = vld [vmem:[%s467 + $0x78] sm:$0xff]
        %v624 = vmul.f32 %v608, 10.0
        %v625 = vmul.f32 %v609, 10.0
        %v626 = vmul.f32 %v610, 10.0
        %v627 = vmul.f32 %v611, 10.0
        %v628 = vmul.f32 %v612, 10.0
        %v629 = vmul.f32 %v613, 10.0
        %v630 = vmul.f32 %v614, 10.0
        %v631 = vmul.f32 %v615, 10.0
        %v632 = vmul.f32 %v616, 10.0
        %v633 = vmul.f32 %v617, 10.0
        %v634 = vmul.f32 %v618, 10.0
        %v635 = vmul.f32 %v619, 10.0
        %v636 = vmul.f32 %v620, 10.0
        %v637 = vmul.f32 %v621, 10.0
        %v638 = vmul.f32 %v622, 10.0
        %v639 = vmul.f32 %v623, 10.0
        %v640 = vld [vmem:[%s473] sm:$0xff]
        %v641 = vld [vmem:[%s473 + $0x8] sm:$0xff]
        %v642 = vld [vmem:[%s473 + $0x10] sm:$0xff]
        %v643 = vld [vmem:[%s473 + $0x18] sm:$0xff]
        %v644 = vld [vmem:[%s473 + $0x20] sm:$0xff]
        %v645 = vld [vmem:[%s473 + $0x28] sm:$0xff]
        %v646 = vld [vmem:[%s473 + $0x30] sm:$0xff]
        %v647 = vld [vmem:[%s473 + $0x38] sm:$0xff]
        %v648 = vld [vmem:[%s473 + $0x40] sm:$0xff]
        %v649 = vld [vmem:[%s473 + $0x48] sm:$0xff]
        %v650 = vld [vmem:[%s473 + $0x50] sm:$0xff]
        %v651 = vld [vmem:[%s473 + $0x58] sm:$0xff]
        %v652 = vld [vmem:[%s473 + $0x60] sm:$0xff]
        %v653 = vld [vmem:[%s473 + $0x68] sm:$0xff]
        %v654 = vld [vmem:[%s473 + $0x70] sm:$0xff]
        %v655 = vld [vmem:[%s473 + $0x78] sm:$0xff]
        %v656 = vmul.f32 %v640, 2.0
        %v657 = vmul.f32 %v641, 2.0
        %v658 = vmul.f32 %v642, 2.0
        %v659 = vmul.f32 %v643, 2.0
        %v660 = vmul.f32 %v644, 2.0
        %v661 = vmul.f32 %v645, 2.0
        %v662 = vmul.f32 %v646, 2.0
        %v663 = vmul.f32 %v647, 2.0
        %v664 = vmul.f32 %v648, 2.0
        %v665 = vmul.f32 %v649, 2.0
        %v666 = vmul.f32 %v650, 2.0
        %v667 = vmul.f32 %v651, 2.0
        %v668 = vmul.f32 %v652, 2.0
        %v669 = vmul.f32 %v653, 2.0
        %v670 = vmul.f32 %v654, 2.0
        %v671 = vmul.f32 %v655, 2.0
        %v672 = vld [vmem:[%s395] sm:$0xff]
        %v673 = vld [vmem:[%s395 + $0x8] sm:$0xff]
        %v674 = vld [vmem:[%s395 + $0x10] sm:$0xff]
        %v675 = vld [vmem:[%s395 + $0x18] sm:$0xff]
        %v676 = vld [vmem:[%s395 + $0x20] sm:$0xff]
        %v677 = vld [vmem:[%s395 + $0x28] sm:$0xff]
        %v678 = vld [vmem:[%s395 + $0x30] sm:$0xff]
        %v679 = vld [vmem:[%s395 + $0x38] sm:$0xff]
        %v680 = vld [vmem:[%s395 + $0x40] sm:$0xff]
        %v681 = vld [vmem:[%s395 + $0x48] sm:$0xff]
        %v682 = vld [vmem:[%s395 + $0x50] sm:$0xff]
        %v683 = vld [vmem:[%s395 + $0x58] sm:$0xff]
        %v684 = vld [vmem:[%s395 + $0x60] sm:$0xff]
        %v685 = vld [vmem:[%s395 + $0x68] sm:$0xff]
        %v686 = vld [vmem:[%s395 + $0x70] sm:$0xff]
        %v687 = vld [vmem:[%s395 + $0x78] sm:$0xff]
        %688 = vmatprep.subr.mxu0 0.0
        %689 = vmatpush1.msra.mxu0 %v672
        %690 = vmatprep.subr.mxu0 0.0
        %691 = vmatpush1.msra.mxu0 %v673
        %692 = vmatprep.subr.mxu0 0.0
        %693 = vmatpush1.msra.mxu0 %v674
        %694 = vmatprep.subr.mxu0 0.0
        %695 = vmatpush1.msra.mxu0 %v675
        %696 = vmatprep.subr.mxu0 0.0
        %697 = vmatpush1.msra.mxu0 %v676
        %698 = vmatprep.subr.mxu0 0.0
        %699 = vmatpush1.msra.mxu0 %v677
        %700 = vmatprep.subr.mxu0 0.0
        %701 = vmatpush1.msra.mxu0 %v678
        %702 = vmatprep.subr.mxu0 0.0
        %703 = vmatpush1.msra.mxu0 %v679
        %704 = vmatprep.subr.mxu0 0.0
        %705 = vmatpush1.msra.mxu0 %v680
        %706 = vmatprep.subr.mxu0 0.0
        %707 = vmatpush1.msra.mxu0 %v681
        %708 = vmatprep.subr.mxu0 0.0
        %709 = vmatpush1.msra.mxu0 %v682
        %710 = vmatprep.subr.mxu0 0.0
        %711 = vmatpush1.msra.mxu0 %v683
        %712 = vmatprep.subr.mxu0 0.0
        %713 = vmatpush1.msra.mxu0 %v684
        %714 = vmatprep.subr.mxu0 0.0
        %715 = vmatpush1.msra.mxu0 %v685
        %716 = vmatprep.subr.mxu0 0.0
        %717 = vmatpush1.msra.mxu0 %v686
        %718 = vmatprep.subr.mxu0 0.0
        %719 = vmatpush1.msra.mxu0 %v687
        %720 = vmatprep.subr.mxu0 0.0
        %721 = vmatpush1.msra.mxu0 0.0
        %722 = vmatprep.subr.mxu0 0.0
        %723 = vmatpush1.msra.mxu0 0.0
        %724 = vmatprep.subr.mxu0 0.0
        %725 = vmatpush1.msra.mxu0 0.0
        %726 = vmatprep.subr.mxu0 0.0
        %727 = vmatpush1.msra.mxu0 0.0
        %728 = vmatprep.subr.mxu0 0.0
        %729 = vmatpush1.msra.mxu0 0.0
        %730 = vmatprep.subr.mxu0 0.0
        %731 = vmatpush1.msra.mxu0 0.0
        %732 = vmatprep.subr.mxu0 0.0
        %733 = vmatpush1.msra.mxu0 0.0
        %734 = vmatprep.subr.mxu0 0.0
        %735 = vmatpush1.msra.mxu0 0.0
        %736 = vmatprep.subr.mxu0 0.0
        %737 = vmatpush1.msra.mxu0 0.0
        %738 = vmatprep.subr.mxu0 0.0
        %739 = vmatpush1.msra.mxu0 0.0
        %740 = vmatprep.subr.mxu0 0.0
        %741 = vmatpush1.msra.mxu0 0.0
        %742 = vmatprep.subr.mxu0 0.0
        %743 = vmatpush1.msra.mxu0 0.0
        %744 = vmatprep.subr.mxu0 0.0
        %745 = vmatpush1.msra.mxu0 0.0
        %746 = vmatprep.subr.mxu0 0.0
        %747 = vmatpush1.msra.mxu0 0.0
        %748 = vmatprep.subr.mxu0 0.0
        %749 = vmatpush1.msra.mxu0 0.0
        %750 = vmatprep.subr.mxu0 0.0
        %751 = vmatpush1.msra.mxu0 0.0
        %752 = vmatprep.mubr.f32.mxu0 0.0
        %753 = vmatmul.mubr.f32.gmra.mrb[0].mxu0 %v624
        %v754 = vpop.f32.mrb[0].mxu0
        %v755 = vadd.f32 0.0, %v754
        %v756 = vpop.f32.mrb[0].mxu0
        %757 = vmatprep.mubr.f32.mxu0 0.0
        %758 = vmatmul.mubr.f32.gmra.mrb[0].mxu0 %v625
        %v759 = vpop.f32.mrb[0].mxu0
        %v760 = vadd.f32 0.0, %v759
        %v761 = vpop.f32.mrb[0].mxu0
        %762 = vmatprep.mubr.f32.mxu0 0.0
        %763 = vmatmul.mubr.f32.gmra.mrb[0].mxu0 %v626
        %v764 = vpop.f32.mrb[0].mxu0
        %v765 = vadd.f32 0.0, %v764
        %v766 = vpop.f32.mrb[0].mxu0
        %767 = vmatprep.mubr.f32.mxu0 0.0
        %768 = vmatmul.mubr.f32.gmra.mrb[0].mxu0 %v627
        %v769 = vpop.f32.mrb[0].mxu0
        %v770 = vadd.f32 0.0, %v769
        %v771 = vpop.f32.mrb[0].mxu0
        %772 = vmatprep.mubr.f32.mxu0 0.0
        %773 = vmatmul.mubr.f32.gmra.mrb[0].mxu0 %v628
        %v774 = vpop.f32.mrb[0].mxu0
        %v775 = vadd.f32 0.0, %v774
        %v776 = vpop.f32.mrb[0].mxu0
        %777 = vmatprep.mubr.f32.mxu0 0.0
        %778 = vmatmul.mubr.f32.gmra.mrb[0].mxu0 %v629
        %v779 = vpop.f32.mrb[0].mxu0
        %v780 = vadd.f32 0.0, %v779
        %v781 = vpop.f32.mrb[0].mxu0
        %782 = vmatprep.mubr.f32.mxu0 0.0
        %783 = vmatmul.mubr.f32.gmra.mrb[0].mxu0 %v630
        %v784 = vpop.f32.mrb[0].mxu0
        %v785 = vadd.f32 0.0, %v784
        %v786 = vpop.f32.mrb[0].mxu0
        %787 = vmatprep.mubr.f32.mxu0 0.0
        %788 = vmatmul.mubr.f32.gmra.mrb[0].mxu0 %v631
        %v789 = vpop.f32.mrb[0].mxu0
        %v790 = vadd.f32 0.0, %v789
        %v791 = vpop.f32.mrb[0].mxu0
        %792 = vmatprep.mubr.f32.mxu0 0.0
        %793 = vmatmul.mubr.f32.gmra.mrb[0].mxu0 %v632
        %v794 = vpop.f32.mrb[0].mxu0
        %v795 = vadd.f32 0.0, %v794
        %v796 = vpop.f32.mrb[0].mxu0
        %797 = vmatprep.mubr.f32.mxu0 0.0
        %798 = vmatmul.mubr.f32.gmra.mrb[0].mxu0 %v633
        %v799 = vpop.f32.mrb[0].mxu0
        %v800 = vadd.f32 0.0, %v799
        %v801 = vpop.f32.mrb[0].mxu0
        %802 = vmatprep.mubr.f32.mxu0 0.0
        %803 = vmatmul.mubr.f32.gmra.mrb[0].mxu0 %v634
        %v804 = vpop.f32.mrb[0].mxu0
        %v805 = vadd.f32 0.0, %v804
        %v806 = vpop.f32.mrb[0].mxu0
        %807 = vmatprep.mubr.f32.mxu0 0.0
        %808 = vmatmul.mubr.f32.gmra.mrb[0].mxu0 %v635
        %v809 = vpop.f32.mrb[0].mxu0
        %v810 = vadd.f32 0.0, %v809
        %v811 = vpop.f32.mrb[0].mxu0
        %812 = vmatprep.mubr.f32.mxu0 0.0
        %813 = vmatmul.mubr.f32.gmra.mrb[0].mxu0 %v636
        %v814 = vpop.f32.mrb[0].mxu0
        %v815 = vadd.f32 0.0, %v814
        %v816 = vpop.f32.mrb[0].mxu0
        %817 = vmatprep.mubr.f32.mxu0 0.0
        %818 = vmatmul.mubr.f32.gmra.mrb[0].mxu0 %v637
        %v819 = vpop.f32.mrb[0].mxu0
        %v820 = vadd.f32 0.0, %v819
        %v821 = vpop.f32.mrb[0].mxu0
        %822 = vmatprep.mubr.f32.mxu0 0.0
        %823 = vmatmul.mubr.f32.gmra.mrb[0].mxu0 %v638
        %v824 = vpop.f32.mrb[0].mxu0
        %v825 = vadd.f32 0.0, %v824
        %v826 = vpop.f32.mrb[0].mxu0
        %827 = vmatprep.mubr.f32.mxu0 0.0
        %828 = vmatmul.mubr.f32.gmra.mrb[0].mxu0 %v639
        %v829 = vpop.f32.mrb[0].mxu0
        %v830 = vadd.f32 0.0, %v829
        %v831 = vpop.f32.mrb[0].mxu0
        %832 = vdwg.mxu0
        %v833 = vld [vmem:[%s403] sm:$0xff]
        %v834 = vld [vmem:[%s403 + $0x8] sm:$0xff]
        %v835 = vld [vmem:[%s403 + $0x10] sm:$0xff]
        %v836 = vld [vmem:[%s403 + $0x18] sm:$0xff]
        %v837 = vld [vmem:[%s403 + $0x20] sm:$0xff]
        %v838 = vld [vmem:[%s403 + $0x28] sm:$0xff]
        %v839 = vld [vmem:[%s403 + $0x30] sm:$0xff]
        %v840 = vld [vmem:[%s403 + $0x38] sm:$0xff]
        %vm841 = vcmask 523264
        %v843 = vsel %vm841, %v656, 0
        %v846 = vsel %vm841, %v657, 0
        %v849 = vsel %vm841, %v658, 0
        %v852 = vsel %vm841, %v659, 0
        %v855 = vsel %vm841, %v660, 0
        %v858 = vsel %vm841, %v661, 0
        %v861 = vsel %vm841, %v662, 0
        %v864 = vsel %vm841, %v663, 0
        %v867 = vsel %vm841, %v664, 0
        %v870 = vsel %vm841, %v665, 0
        %v873 = vsel %vm841, %v666, 0
        %v876 = vsel %vm841, %v667, 0
        %v879 = vsel %vm841, %v668, 0
        %v882 = vsel %vm841, %v669, 0
        %v885 = vsel %vm841, %v670, 0
        %v888 = vsel %vm841, %v671, 0
        %890 = vmatprep.subr.mxu0 0.0
        %891 = vmatpush1.msra.mxu0 %v833
        %892 = vmatprep.subr.mxu0 0.0
        %893 = vmatpush1.msra.mxu0 %v834
        %894 = vmatprep.subr.mxu0 0.0
        %895 = vmatpush1.msra.mxu0 %v835
        %896 = vmatprep.subr.mxu0 0.0
        %897 = vmatpush1.msra.mxu0 %v836
        %898 = vmatprep.subr.mxu0 0.0
        %899 = vmatpush1.msra.mxu0 %v837
        %900 = vmatprep.subr.mxu0 0.0
        %901 = vmatpush1.msra.mxu0 %v838
        %902 = vmatprep.subr.mxu0 0.0
        %903 = vmatpush1.msra.mxu0 %v839
        %904 = vmatprep.subr.mxu0 0.0
        %905 = vmatpush1.msra.mxu0 %v840
        %906 = vmatprep.subr.mxu0 0.0
        %907 = vmatpush1.msra.mxu0 0.0
        %908 = vmatprep.subr.mxu0 0.0
        %909 = vmatpush1.msra.mxu0 0.0
        %910 = vmatprep.subr.mxu0 0.0
        %911 = vmatpush1.msra.mxu0 0.0
        %912 = vmatprep.subr.mxu0 0.0
        %913 = vmatpush1.msra.mxu0 0.0
        %914 = vmatprep.subr.mxu0 0.0
        %915 = vmatpush1.msra.mxu0 0.0
        %916 = vmatprep.subr.mxu0 0.0
        %917 = vmatpush1.msra.mxu0 0.0
        %918 = vmatprep.subr.mxu0 0.0
        %919 = vmatpush1.msra.mxu0 0.0
        %920 = vmatprep.subr.mxu0 0.0
        %921 = vmatpush1.msra.mxu0 0.0
        %922 = vmatprep.subr.mxu0 0.0
        %923 = vmatpush1.msra.mxu0 0.0
        %924 = vmatprep.subr.mxu0 0.0
        %925 = vmatpush1.msra.mxu0 0.0
        %926 = vmatprep.subr.mxu0 0.0
        %927 = vmatpush1.msra.mxu0 0.0
        %928 = vmatprep.subr.mxu0 0.0
        %929 = vmatpush1.msra.mxu0 0.0
        %930 = vmatprep.subr.mxu0 0.0
        %931 = vmatpush1.msra.mxu0 0.0
        %932 = vmatprep.subr.mxu0 0.0
        %933 = vmatpush1.msra.mxu0 0.0
        %934 = vmatprep.subr.mxu0 0.0
        %935 = vmatpush1.msra.mxu0 0.0
        %936 = vmatprep.subr.mxu0 0.0
        %937 = vmatpush1.msra.mxu0 0.0
        %938 = vmatprep.subr.mxu0 0.0
        %939 = vmatpush1.msra.mxu0 0.0
        %940 = vmatprep.subr.mxu0 0.0
        %941 = vmatpush1.msra.mxu0 0.0
        %942 = vmatprep.subr.mxu0 0.0
        %943 = vmatpush1.msra.mxu0 0.0
        %944 = vmatprep.subr.mxu0 0.0
        %945 = vmatpush1.msra.mxu0 0.0
        %946 = vmatprep.subr.mxu0 0.0
        %947 = vmatpush1.msra.mxu0 0.0
        %948 = vmatprep.subr.mxu0 0.0
        %949 = vmatpush1.msra.mxu0 0.0
        %950 = vmatprep.subr.mxu0 0.0
        %951 = vmatpush1.msra.mxu0 0.0
        %952 = vmatprep.subr.mxu0 0.0
        %953 = vmatpush1.msra.mxu0 0.0
        %954 = vmatprep.mubr.f32.mxu0 0.0
        %955 = vmatmul.mubr.f32.gmra.mrb[0].mxu0 %v843
        %v956 = vpop.f32.mrb[0].mxu0
        %v957 = vadd.f32 0.0, %v956
        %v958 = vpop.f32.mrb[0].mxu0
        %959 = vmatprep.mubr.f32.mxu0 0.0
        %960 = vmatmul.mubr.f32.gmra.mrb[0].mxu0 %v846
        %v961 = vpop.f32.mrb[0].mxu0
        %v962 = vadd.f32 0.0, %v961
        %v963 = vpop.f32.mrb[0].mxu0
        %964 = vmatprep.mubr.f32.mxu0 0.0
        %965 = vmatmul.mubr.f32.gmra.mrb[0].mxu0 %v849
        %v966 = vpop.f32.mrb[0].mxu0
        %v967 = vadd.f32 0.0, %v966
        %v968 = vpop.f32.mrb[0].mxu0
        %969 = vmatprep.mubr.f32.mxu0 0.0
        %970 = vmatmul.mubr.f32.gmra.mrb[0].mxu0 %v852
        %v971 = vpop.f32.mrb[0].mxu0
        %v972 = vadd.f32 0.0, %v971
        %v973 = vpop.f32.mrb[0].mxu0
        %974 = vmatprep.mubr.f32.mxu0 0.0
        %975 = vmatmul.mubr.f32.gmra.mrb[0].mxu0 %v855
        %v976 = vpop.f32.mrb[0].mxu0
        %v977 = vadd.f32 0.0, %v976
        %v978 = vpop.f32.mrb[0].mxu0
        %979 = vmatprep.mubr.f32.mxu0 0.0
        %980 = vmatmul.mubr.f32.gmra.mrb[0].mxu0 %v858
        %v981 = vpop.f32.mrb[0].mxu0
        %v982 = vadd.f32 0.0, %v981
        %v983 = vpop.f32.mrb[0].mxu0
        %984 = vmatprep.mubr.f32.mxu0 0.0
        %985 = vmatmul.mubr.f32.gmra.mrb[0].mxu0 %v861
        %v986 = vpop.f32.mrb[0].mxu0
        %v987 = vadd.f32 0.0, %v986
        %v988 = vpop.f32.mrb[0].mxu0
        %989 = vmatprep.mubr.f32.mxu0 0.0
        %990 = vmatmul.mubr.f32.gmra.mrb[0].mxu0 %v864
        %v991 = vpop.f32.mrb[0].mxu0
        %v992 = vadd.f32 0.0, %v991
        %v993 = vpop.f32.mrb[0].mxu0
        %994 = vmatprep.mubr.f32.mxu0 0.0
        %995 = vmatmul.mubr.f32.gmra.mrb[0].mxu0 %v867
        %v996 = vpop.f32.mrb[0].mxu0
        %v997 = vadd.f32 0.0, %v996
        %v998 = vpop.f32.mrb[0].mxu0
        %999 = vmatprep.mubr.f32.mxu0 0.0
        %1000 = vmatmul.mubr.f32.gmra.mrb[0].mxu0 %v870
        %v1001 = vpop.f32.mrb[0].mxu0
        %v1002 = vadd.f32 0.0, %v1001
        %v1003 = vpop.f32.mrb[0].mxu0
        %1004 = vmatprep.mubr.f32.mxu0 0.0
        %1005 = vmatmul.mubr.f32.gmra.mrb[0].mxu0 %v873
        %v1006 = vpop.f32.mrb[0].mxu0
        %v1007 = vadd.f32 0.0, %v1006
        %v1008 = vpop.f32.mrb[0].mxu0
        %1009 = vmatprep.mubr.f32.mxu0 0.0
        %1010 = vmatmul.mubr.f32.gmra.mrb[0].mxu0 %v876
        %v1011 = vpop.f32.mrb[0].mxu0
        %v1012 = vadd.f32 0.0, %v1011
        %v1013 = vpop.f32.mrb[0].mxu0
        %1014 = vmatprep.mubr.f32.mxu0 0.0
        %1015 = vmatmul.mubr.f32.gmra.mrb[0].mxu0 %v879
        %v1016 = vpop.f32.mrb[0].mxu0
        %v1017 = vadd.f32 0.0, %v1016
        %v1018 = vpop.f32.mrb[0].mxu0
        %1019 = vmatprep.mubr.f32.mxu0 0.0
        %1020 = vmatmul.mubr.f32.gmra.mrb[0].mxu0 %v882
        %v1021 = vpop.f32.mrb[0].mxu0
        %v1022 = vadd.f32 0.0, %v1021
        %v1023 = vpop.f32.mrb[0].mxu0
        %1024 = vmatprep.mubr.f32.mxu0 0.0
        %1025 = vmatmul.mubr.f32.gmra.mrb[0].mxu0 %v885
        %v1026 = vpop.f32.mrb[0].mxu0
        %v1027 = vadd.f32 0.0, %v1026
        %v1028 = vpop.f32.mrb[0].mxu0
        %1029 = vmatprep.mubr.f32.mxu0 0.0
        %1030 = vmatmul.mubr.f32.gmra.mrb[0].mxu0 %v888
        %v1031 = vpop.f32.mrb[0].mxu0
        %v1032 = vadd.f32 0.0, %v1031
        %v1033 = vpop.f32.mrb[0].mxu0
        %1034 = vdwg.mxu0
        %v1035 = vld [vmem:[%s458] sm:$0xff]
        %v1036 = vld [vmem:[%s458 + $0x8] sm:$0xff]
        %v1037 = vld [vmem:[%s458 + $0x10] sm:$0xff]
        %v1038 = vld [vmem:[%s458 + $0x18] sm:$0xff]
        %v1039 = vld [vmem:[%s458 + $0x20] sm:$0xff]
        %v1040 = vld [vmem:[%s458 + $0x28] sm:$0xff]
        %v1041 = vld [vmem:[%s458 + $0x30] sm:$0xff]
        %v1042 = vld [vmem:[%s458 + $0x38] sm:$0xff]
        %v1043 = vld [vmem:[%s458 + $0x40] sm:$0xff]
        %v1044 = vld [vmem:[%s458 + $0x48] sm:$0xff]
        %v1045 = vld [vmem:[%s458 + $0x50] sm:$0xff]
        %v1046 = vld [vmem:[%s458 + $0x58] sm:$0xff]
        %v1047 = vld [vmem:[%s458 + $0x60] sm:$0xff]
        %v1048 = vld [vmem:[%s458 + $0x68] sm:$0xff]
        %v1049 = vld [vmem:[%s458 + $0x70] sm:$0xff]
        %v1050 = vld [vmem:[%s458 + $0x78] sm:$0xff]
        %v1051 = vld [vmem:[%s462] sm:$0x1]
        %1052 = vset.pattern.permute.xlu0 0
        %1053 = vperm.xlu0 %1052, %v1035
        %v1054 = vpop.permute.xlu0 %1053
        %1055 = vset.pattern.permute.xlu0 0
        %1056 = vperm.xlu0 %1055, %v1036
        %v1057 = vpop.permute.xlu0 %1056
        %1058 = vset.pattern.permute.xlu0 0
        %1059 = vperm.xlu0 %1058, %v1037
        %v1060 = vpop.permute.xlu0 %1059
        %1061 = vset.pattern.permute.xlu0 0
        %1062 = vperm.xlu0 %1061, %v1038
        %v1063 = vpop.permute.xlu0 %1062
        %1064 = vset.pattern.permute.xlu0 0
        %1065 = vperm.xlu0 %1064, %v1039
        %v1066 = vpop.permute.xlu0 %1065
        %1067 = vset.pattern.permute.xlu0 0
        %1068 = vperm.xlu0 %1067, %v1040
        %v1069 = vpop.permute.xlu0 %1068
        %1070 = vset.pattern.permute.xlu0 0
        %1071 = vperm.xlu0 %1070, %v1041
        %v1072 = vpop.permute.xlu0 %1071
        %1073 = vset.pattern.permute.xlu0 0
        %1074 = vperm.xlu0 %1073, %v1042
        %v1075 = vpop.permute.xlu0 %1074
        %1076 = vset.pattern.permute.xlu0 0
        %1077 = vperm.xlu0 %1076, %v1043
        %v1078 = vpop.permute.xlu0 %1077
        %1079 = vset.pattern.permute.xlu0 0
        %1080 = vperm.xlu0 %1079, %v1044
        %v1081 = vpop.permute.xlu0 %1080
        %1082 = vset.pattern.permute.xlu0 0
        %1083 = vperm.xlu0 %1082, %v1045
        %v1084 = vpop.permute.xlu0 %1083
        %1085 = vset.pattern.permute.xlu0 0
        %1086 = vperm.xlu0 %1085, %v1046
        %v1087 = vpop.permute.xlu0 %1086
        %1088 = vset.pattern.permute.xlu0 0
        %1089 = vperm.xlu0 %1088, %v1047
        %v1090 = vpop.permute.xlu0 %1089
        %1091 = vset.pattern.permute.xlu0 0
        %1092 = vperm.xlu0 %1091, %v1048
        %v1093 = vpop.permute.xlu0 %1092
        %1094 = vset.pattern.permute.xlu0 0
        %1095 = vperm.xlu0 %1094, %v1049
        %v1096 = vpop.permute.xlu0 %1095
        %1097 = vset.pattern.permute.xlu0 0
        %1098 = vperm.xlu0 %1097, %v1050
        %v1099 = vpop.permute.xlu0 %1098
        %v1100 = vlaneseq
        %v1101 = vshrl.u32 %v1100, 7
        %v1102 = vsub.s32 0, %v1101
        %v1103 = vrot.slane %v1051, %v1102
        %vm1104 = vcmp.eq.s32.totalorder %v1054, %v1103
        %vm1105 = vcmp.eq.s32.totalorder %v1057, %v1103
        %vm1106 = vcmp.eq.s32.totalorder %v1060, %v1103
        %vm1107 = vcmp.eq.s32.totalorder %v1063, %v1103
        %vm1108 = vcmp.eq.s32.totalorder %v1066, %v1103
        %vm1109 = vcmp.eq.s32.totalorder %v1069, %v1103
        %vm1110 = vcmp.eq.s32.totalorder %v1072, %v1103
        %vm1111 = vcmp.eq.s32.totalorder %v1075, %v1103
        %vm1112 = vcmp.eq.s32.totalorder %v1078, %v1103
        %vm1113 = vcmp.eq.s32.totalorder %v1081, %v1103
        %vm1114 = vcmp.eq.s32.totalorder %v1084, %v1103
        %vm1115 = vcmp.eq.s32.totalorder %v1087, %v1103
        %vm1116 = vcmp.eq.s32.totalorder %v1090, %v1103
        %vm1117 = vcmp.eq.s32.totalorder %v1093, %v1103
        %vm1118 = vcmp.eq.s32.totalorder %v1096, %v1103
        %vm1119 = vcmp.eq.s32.totalorder %v1099, %v1103
        %v1120 = vlaneseq
        %v1121 = vshrl.u32 %v1120, 7
        %v1122 = vadd.s32 %v1121, 8
        %v1123 = vadd.s32 %v1121, 16
        %v1124 = vadd.s32 %v1121, 24
        %v1125 = vadd.s32 %v1121, 32
        %v1126 = vadd.s32 %v1121, 40
        %v1127 = vadd.s32 %v1121, 48
        %v1128 = vadd.s32 %v1121, 56
        %v1129 = vadd.s32 %v1121, 64
        %v1130 = vadd.s32 %v1121, 72
        %v1131 = vadd.s32 %v1121, 80
        %v1132 = vadd.s32 %v1121, 88
        %v1133 = vadd.s32 %v1121, 96
        %v1134 = vadd.s32 %v1121, 104
        %v1135 = vadd.s32 %v1121, 112
        %v1136 = vadd.s32 %v1121, 120
        %s1137 = smul.u32 %s27, 128
        %v1138 = vstv %s1137
        %v1139 = vadd.s32 %v1121, %v1138
        %v1140 = vadd.s32 %v1122, %v1138
        %v1141 = vadd.s32 %v1123, %v1138
        %v1142 = vadd.s32 %v1124, %v1138
        %v1143 = vadd.s32 %v1125, %v1138
        %v1144 = vadd.s32 %v1126, %v1138
        %v1145 = vadd.s32 %v1127, %v1138
        %v1146 = vadd.s32 %v1128, %v1138
        %v1147 = vadd.s32 %v1129, %v1138
        %v1148 = vadd.s32 %v1130, %v1138
        %v1149 = vadd.s32 %v1131, %v1138
        %v1150 = vadd.s32 %v1132, %v1138
        %v1151 = vadd.s32 %v1133, %v1138
        %v1152 = vadd.s32 %v1134, %v1138
        %v1153 = vadd.s32 %v1135, %v1138
        %v1154 = vadd.s32 %v1136, %v1138
        %v1155 = vlaneseq
        %v1156 = vand.u32 %v1155, 127
        %s1157 = smul.u32 %s28, 128
        %v1158 = vstv %s1157
        %v1159 = vadd.s32 %v1156, %v1158
        %vm1160 = vcmp.eq.s32.totalorder %v1139, %v1159
        %vm1161 = vcmp.eq.s32.totalorder %v1140, %v1159
        %vm1162 = vcmp.eq.s32.totalorder %v1141, %v1159
        %vm1163 = vcmp.eq.s32.totalorder %v1142, %v1159
        %vm1164 = vcmp.eq.s32.totalorder %v1143, %v1159
        %vm1165 = vcmp.eq.s32.totalorder %v1144, %v1159
        %vm1166 = vcmp.eq.s32.totalorder %v1145, %v1159
        %vm1167 = vcmp.eq.s32.totalorder %v1146, %v1159
        %vm1168 = vcmp.eq.s32.totalorder %v1147, %v1159
        %vm1169 = vcmp.eq.s32.totalorder %v1148, %v1159
        %vm1170 = vcmp.eq.s32.totalorder %v1149, %v1159
        %vm1171 = vcmp.eq.s32.totalorder %v1150, %v1159
        %vm1172 = vcmp.eq.s32.totalorder %v1151, %v1159
        %vm1173 = vcmp.eq.s32.totalorder %v1152, %v1159
        %vm1174 = vcmp.eq.s32.totalorder %v1153, %v1159
        %vm1175 = vcmp.eq.s32.totalorder %v1154, %v1159
        %v1176 = vsel %vm1160, -1e+30, %v755
        %v1177 = vsel %vm1161, -1e+30, %v760
        %v1178 = vsel %vm1162, -1e+30, %v765
        %v1179 = vsel %vm1163, -1e+30, %v770
        %v1180 = vsel %vm1164, -1e+30, %v775
        %v1181 = vsel %vm1165, -1e+30, %v780
        %v1182 = vsel %vm1166, -1e+30, %v785
        %v1183 = vsel %vm1167, -1e+30, %v790
        %v1184 = vsel %vm1168, -1e+30, %v795
        %v1185 = vsel %vm1169, -1e+30, %v800
        %v1186 = vsel %vm1170, -1e+30, %v805
        %v1187 = vsel %vm1171, -1e+30, %v810
        %v1188 = vsel %vm1172, -1e+30, %v815
        %v1189 = vsel %vm1173, -1e+30, %v820
        %v1190 = vsel %vm1174, -1e+30, %v825
        %v1191 = vsel %vm1175, -1e+30, %v830
        %v1192 = vsel %vm1160, -1e+30, %v957
        %v1193 = vsel %vm1161, -1e+30, %v962
        %v1194 = vsel %vm1162, -1e+30, %v967
        %v1195 = vsel %vm1163, -1e+30, %v972
        %v1196 = vsel %vm1164, -1e+30, %v977
        %v1197 = vsel %vm1165, -1e+30, %v982
        %v1198 = vsel %vm1166, -1e+30, %v987
        %v1199 = vsel %vm1167, -1e+30, %v992
        %v1200 = vsel %vm1168, -1e+30, %v997
        %v1201 = vsel %vm1169, -1e+30, %v1002
        %v1202 = vsel %vm1170, -1e+30, %v1007
        %v1203 = vsel %vm1171, -1e+30, %v1012
        %v1204 = vsel %vm1172, -1e+30, %v1017
        %v1205 = vsel %vm1173, -1e+30, %v1022
        %v1206 = vsel %vm1174, -1e+30, %v1027
        %v1207 = vsel %vm1175, -1e+30, %v1032
        %v1208 = vld [vmem:[#allocation2] sm:$0xff]
        %v1209 = vld [vmem:[#allocation2 + $0x8] sm:$0xff]
        %v1210 = vld [vmem:[#allocation2 + $0x10] sm:$0xff]
        %v1211 = vld [vmem:[#allocation2 + $0x18] sm:$0xff]
        %v1212 = vld [vmem:[#allocation2 + $0x20] sm:$0xff]
        %v1213 = vld [vmem:[#allocation2 + $0x28] sm:$0xff]
        %v1214 = vld [vmem:[#allocation2 + $0x30] sm:$0xff]
        %v1215 = vld [vmem:[#allocation2 + $0x38] sm:$0xff]
        %v1216 = vld [vmem:[#allocation2 + $0x40] sm:$0xff]
        %v1217 = vld [vmem:[#allocation2 + $0x48] sm:$0xff]
        %v1218 = vld [vmem:[#allocation2 + $0x50] sm:$0xff]
        %v1219 = vld [vmem:[#allocation2 + $0x58] sm:$0xff]
        %v1220 = vld [vmem:[#allocation2 + $0x60] sm:$0xff]
        %v1221 = vld [vmem:[#allocation2 + $0x68] sm:$0xff]
        %v1222 = vld [vmem:[#allocation2 + $0x70] sm:$0xff]
        %v1223 = vld [vmem:[#allocation2 + $0x78] sm:$0xff]
        %1224 = vmax.xlane.f32.xlu0 %v1176
        %v1225 = vpop.xlane.xlu0 %1224
        %1226 = vmax.xlane.f32.xlu0 %v1177
        %v1227 = vpop.xlane.xlu0 %1226
        %1228 = vmax.xlane.f32.xlu0 %v1178
        %v1229 = vpop.xlane.xlu0 %1228
        %1230 = vmax.xlane.f32.xlu0 %v1179
        %v1231 = vpop.xlane.xlu0 %1230
        %1232 = vmax.xlane.f32.xlu0 %v1180
        %v1233 = vpop.xlane.xlu0 %1232
        %1234 = vmax.xlane.f32.xlu0 %v1181
        %v1235 = vpop.xlane.xlu0 %1234
        %1236 = vmax.xlane.f32.xlu0 %v1182
        %v1237 = vpop.xlane.xlu0 %1236
        %1238 = vmax.xlane.f32.xlu0 %v1183
        %v1239 = vpop.xlane.xlu0 %1238
        %1240 = vmax.xlane.f32.xlu0 %v1184
        %v1241 = vpop.xlane.xlu0 %1240
        %1242 = vmax.xlane.f32.xlu0 %v1185
        %v1243 = vpop.xlane.xlu0 %1242
        %1244 = vmax.xlane.f32.xlu0 %v1186
        %v1245 = vpop.xlane.xlu0 %1244
        %1246 = vmax.xlane.f32.xlu0 %v1187
        %v1247 = vpop.xlane.xlu0 %1246
        %1248 = vmax.xlane.f32.xlu0 %v1188
        %v1249 = vpop.xlane.xlu0 %1248
        %1250 = vmax.xlane.f32.xlu0 %v1189
        %v1251 = vpop.xlane.xlu0 %1250
        %1252 = vmax.xlane.f32.xlu0 %v1190
        %v1253 = vpop.xlane.xlu0 %1252
        %1254 = vmax.xlane.f32.xlu0 %v1191
        %v1255 = vpop.xlane.xlu0 %1254
        %v1256 = vmax.f32 %v1208, %v1225
        %v1257 = vmax.f32 %v1209, %v1227
        %v1258 = vmax.f32 %v1210, %v1229
        %v1259 = vmax.f32 %v1211, %v1231
        %v1260 = vmax.f32 %v1212, %v1233
        %v1261 = vmax.f32 %v1213, %v1235
        %v1262 = vmax.f32 %v1214, %v1237
        %v1263 = vmax.f32 %v1215, %v1239
        %v1264 = vmax.f32 %v1216, %v1241
        %v1265 = vmax.f32 %v1217, %v1243
        %v1266 = vmax.f32 %v1218, %v1245
        %v1267 = vmax.f32 %v1219, %v1247
        %v1268 = vmax.f32 %v1220, %v1249
        %v1269 = vmax.f32 %v1221, %v1251
        %v1270 = vmax.f32 %v1222, %v1253
        %v1271 = vmax.f32 %v1223, %v1255
        %v1272 = vld [vmem:[#allocation3] sm:$0xff]
        %v1273 = vld [vmem:[#allocation3 + $0x8] sm:$0xff]
        %v1274 = vld [vmem:[#allocation3 + $0x10] sm:$0xff]
        %v1275 = vld [vmem:[#allocation3 + $0x18] sm:$0xff]
        %v1276 = vld [vmem:[#allocation3 + $0x20] sm:$0xff]
        %v1277 = vld [vmem:[#allocation3 + $0x28] sm:$0xff]
        %v1278 = vld [vmem:[#allocation3 + $0x30] sm:$0xff]
        %v1279 = vld [vmem:[#allocation3 + $0x38] sm:$0xff]
        %v1280 = vld [vmem:[#allocation3 + $0x40] sm:$0xff]
        %v1281 = vld [vmem:[#allocation3 + $0x48] sm:$0xff]
        %v1282 = vld [vmem:[#allocation3 + $0x50] sm:$0xff]
        %v1283 = vld [vmem:[#allocation3 + $0x58] sm:$0xff]
        %v1284 = vld [vmem:[#allocation3 + $0x60] sm:$0xff]
        %v1285 = vld [vmem:[#allocation3 + $0x68] sm:$0xff]
        %v1286 = vld [vmem:[#allocation3 + $0x70] sm:$0xff]
        %v1287 = vld [vmem:[#allocation3 + $0x78] sm:$0xff]
        %v1288 = vsub.f32 %v1208, %v1256
        %v1289 = vsub.f32 %v1209, %v1257
        %v1290 = vsub.f32 %v1210, %v1258
        %v1291 = vsub.f32 %v1211, %v1259
        %v1292 = vsub.f32 %v1212, %v1260
        %v1293 = vsub.f32 %v1213, %v1261
        %v1294 = vsub.f32 %v1214, %v1262
        %v1295 = vsub.f32 %v1215, %v1263
        %v1296 = vsub.f32 %v1216, %v1264
        %v1297 = vsub.f32 %v1217, %v1265
        %v1298 = vsub.f32 %v1218, %v1266
        %v1299 = vsub.f32 %v1219, %v1267
        %v1300 = vsub.f32 %v1220, %v1268
        %v1301 = vsub.f32 %v1221, %v1269
        %v1302 = vsub.f32 %v1222, %v1270
        %v1303 = vsub.f32 %v1223, %v1271
        %v1304 = vmul.f32 %v1288, 1.442695
        %v1305 = vpow.pop %v1304
        %v1306 = vmul.f32 %v1289, 1.442695
        %v1307 = vpow.pop %v1306
        %v1308 = vmul.f32 %v1290, 1.442695
        %v1309 = vpow.pop %v1308
        %v1310 = vmul.f32 %v1291, 1.442695
        %v1311 = vpow.pop %v1310
        %v1312 = vmul.f32 %v1292, 1.442695
        %v1313 = vpow.pop %v1312
        %v1314 = vmul.f32 %v1293, 1.442695
        %v1315 = vpow.pop %v1314
        %v1316 = vmul.f32 %v1294, 1.442695
        %v1317 = vpow.pop %v1316
        %v1318 = vmul.f32 %v1295, 1.442695
        %v1319 = vpow.pop %v1318
        %v1320 = vmul.f32 %v1296, 1.442695
        %v1321 = vpow.pop %v1320
        %v1322 = vmul.f32 %v1297, 1.442695
        %v1323 = vpow.pop %v1322
        %v1324 = vmul.f32 %v1298, 1.442695
        %v1325 = vpow.pop %v1324
        %v1326 = vmul.f32 %v1299, 1.442695
        %v1327 = vpow.pop %v1326
        %v1328 = vmul.f32 %v1300, 1.442695
        %v1329 = vpow.pop %v1328
        %v1330 = vmul.f32 %v1301, 1.442695
        %v1331 = vpow.pop %v1330
        %v1332 = vmul.f32 %v1302, 1.442695
        %v1333 = vpow.pop %v1332
        %v1334 = vmul.f32 %v1303, 1.442695
        %v1335 = vpow.pop %v1334
        %v1336 = vmul.f32 %v1272, %v1305
        %v1337 = vmul.f32 %v1273, %v1307
        %v1338 = vmul.f32 %v1274, %v1309
        %v1339 = vmul.f32 %v1275, %v1311
        %v1340 = vmul.f32 %v1276, %v1313
        %v1341 = vmul.f32 %v1277, %v1315
        %v1342 = vmul.f32 %v1278, %v1317
        %v1343 = vmul.f32 %v1279, %v1319
        %v1344 = vmul.f32 %v1280, %v1321
        %v1345 = vmul.f32 %v1281, %v1323
        %v1346 = vmul.f32 %v1282, %v1325
        %v1347 = vmul.f32 %v1283, %v1327
        %v1348 = vmul.f32 %v1284, %v1329
        %v1349 = vmul.f32 %v1285, %v1331
        %v1350 = vmul.f32 %v1286, %v1333
        %v1351 = vmul.f32 %v1287, %v1335
        %1353 = vset.pattern.permute.xlu0 0
        %1354 = vperm.xlu0 %1353, %v1256
        %v1355 = vpop.permute.xlu0 %1354
        %1358 = vset.pattern.permute.xlu0 0
        %1359 = vperm.xlu0 %1358, %v1257
        %v1360 = vpop.permute.xlu0 %1359
        %1363 = vset.pattern.permute.xlu0 0
        %1364 = vperm.xlu0 %1363, %v1258
        %v1365 = vpop.permute.xlu0 %1364
        %1368 = vset.pattern.permute.xlu0 0
        %1369 = vperm.xlu0 %1368, %v1259
        %v1370 = vpop.permute.xlu0 %1369
        %1373 = vset.pattern.permute.xlu0 0
        %1374 = vperm.xlu0 %1373, %v1260
        %v1375 = vpop.permute.xlu0 %1374
        %1378 = vset.pattern.permute.xlu0 0
        %1379 = vperm.xlu0 %1378, %v1261
        %v1380 = vpop.permute.xlu0 %1379
        %1383 = vset.pattern.permute.xlu0 0
        %1384 = vperm.xlu0 %1383, %v1262
        %v1385 = vpop.permute.xlu0 %1384
        %1388 = vset.pattern.permute.xlu0 0
        %1389 = vperm.xlu0 %1388, %v1263
        %v1390 = vpop.permute.xlu0 %1389
        %1393 = vset.pattern.permute.xlu0 0
        %1394 = vperm.xlu0 %1393, %v1264
        %v1395 = vpop.permute.xlu0 %1394
        %1398 = vset.pattern.permute.xlu0 0
        %1399 = vperm.xlu0 %1398, %v1265
        %v1400 = vpop.permute.xlu0 %1399
        %1403 = vset.pattern.permute.xlu0 0
        %1404 = vperm.xlu0 %1403, %v1266
        %v1405 = vpop.permute.xlu0 %1404
        %1408 = vset.pattern.permute.xlu0 0
        %1409 = vperm.xlu0 %1408, %v1267
        %v1410 = vpop.permute.xlu0 %1409
        %1413 = vset.pattern.permute.xlu0 0
        %1414 = vperm.xlu0 %1413, %v1268
        %v1415 = vpop.permute.xlu0 %1414
        %1418 = vset.pattern.permute.xlu0 0
        %1419 = vperm.xlu0 %1418, %v1269
        %v1420 = vpop.permute.xlu0 %1419
        %1423 = vset.pattern.permute.xlu0 0
        %1424 = vperm.xlu0 %1423, %v1270
        %v1425 = vpop.permute.xlu0 %1424
        %1428 = vset.pattern.permute.xlu0 0
        %1429 = vperm.xlu0 %1428, %v1271
        %v1430 = vpop.permute.xlu0 %1429
        %v1432 = vsub.f32 %v1176, %v1355
        %v1433 = vsub.f32 %v1177, %v1360
        %v1434 = vsub.f32 %v1178, %v1365
        %v1435 = vsub.f32 %v1179, %v1370
        %v1436 = vsub.f32 %v1180, %v1375
        %v1437 = vsub.f32 %v1181, %v1380
        %v1438 = vsub.f32 %v1182, %v1385
        %v1439 = vsub.f32 %v1183, %v1390
        %v1440 = vsub.f32 %v1184, %v1395
        %v1441 = vsub.f32 %v1185, %v1400
        %v1442 = vsub.f32 %v1186, %v1405
        %v1443 = vsub.f32 %v1187, %v1410
        %v1444 = vsub.f32 %v1188, %v1415
        %v1445 = vsub.f32 %v1189, %v1420
        %v1446 = vsub.f32 %v1190, %v1425
        %v1447 = vsub.f32 %v1191, %v1430
        %v1448 = vmul.f32 %v1432, 1.442695
        %v1449 = vpow.pop %v1448
        %v1450 = vmul.f32 %v1433, 1.442695
        %v1451 = vpow.pop %v1450
        %v1452 = vmul.f32 %v1434, 1.442695
        %v1453 = vpow.pop %v1452
        %v1454 = vmul.f32 %v1435, 1.442695
        %v1455 = vpow.pop %v1454
        %v1456 = vmul.f32 %v1436, 1.442695
        %v1457 = vpow.pop %v1456
        %v1458 = vmul.f32 %v1437, 1.442695
        %v1459 = vpow.pop %v1458
        %v1460 = vmul.f32 %v1438, 1.442695
        %v1461 = vpow.pop %v1460
        %v1462 = vmul.f32 %v1439, 1.442695
        %v1463 = vpow.pop %v1462
        %v1464 = vmul.f32 %v1440, 1.442695
        %v1465 = vpow.pop %v1464
        %v1466 = vmul.f32 %v1441, 1.442695
        %v1467 = vpow.pop %v1466
        %v1468 = vmul.f32 %v1442, 1.442695
        %v1469 = vpow.pop %v1468
        %v1470 = vmul.f32 %v1443, 1.442695
        %v1471 = vpow.pop %v1470
        %v1472 = vmul.f32 %v1444, 1.442695
        %v1473 = vpow.pop %v1472
        %v1474 = vmul.f32 %v1445, 1.442695
        %v1475 = vpow.pop %v1474
        %v1476 = vmul.f32 %v1446, 1.442695
        %v1477 = vpow.pop %v1476
        %v1478 = vmul.f32 %v1447, 1.442695
        %v1479 = vpow.pop %v1478
        %1480 = vadd.xlane.f32.xlu0 %v1449
        %v1481 = vpop.xlane.xlu0 %1480
        %1482 = vadd.xlane.f32.xlu0 %v1451
        %v1483 = vpop.xlane.xlu0 %1482
        %1484 = vadd.xlane.f32.xlu0 %v1453
        %v1485 = vpop.xlane.xlu0 %1484
        %1486 = vadd.xlane.f32.xlu0 %v1455
        %v1487 = vpop.xlane.xlu0 %1486
        %1488 = vadd.xlane.f32.xlu0 %v1457
        %v1489 = vpop.xlane.xlu0 %1488
        %1490 = vadd.xlane.f32.xlu0 %v1459
        %v1491 = vpop.xlane.xlu0 %1490
        %1492 = vadd.xlane.f32.xlu0 %v1461
        %v1493 = vpop.xlane.xlu0 %1492
        %1494 = vadd.xlane.f32.xlu0 %v1463
        %v1495 = vpop.xlane.xlu0 %1494
        %1496 = vadd.xlane.f32.xlu0 %v1465
        %v1497 = vpop.xlane.xlu0 %1496
        %1498 = vadd.xlane.f32.xlu0 %v1467
        %v1499 = vpop.xlane.xlu0 %1498
        %1500 = vadd.xlane.f32.xlu0 %v1469
        %v1501 = vpop.xlane.xlu0 %1500
        %1502 = vadd.xlane.f32.xlu0 %v1471
        %v1503 = vpop.xlane.xlu0 %1502
        %1504 = vadd.xlane.f32.xlu0 %v1473
        %v1505 = vpop.xlane.xlu0 %1504
        %1506 = vadd.xlane.f32.xlu0 %v1475
        %v1507 = vpop.xlane.xlu0 %1506
        %1508 = vadd.xlane.f32.xlu0 %v1477
        %v1509 = vpop.xlane.xlu0 %1508
        %1510 = vadd.xlane.f32.xlu0 %v1479
        %v1511 = vpop.xlane.xlu0 %1510
        %v1512 = vadd.f32 %v1336, %v1481
        %v1513 = vadd.f32 %v1337, %v1483
        %v1514 = vadd.f32 %v1338, %v1485
        %v1515 = vadd.f32 %v1339, %v1487
        %v1516 = vadd.f32 %v1340, %v1489
        %v1517 = vadd.f32 %v1341, %v1491
        %v1518 = vadd.f32 %v1342, %v1493
        %v1519 = vadd.f32 %v1343, %v1495
        %v1520 = vadd.f32 %v1344, %v1497
        %v1521 = vadd.f32 %v1345, %v1499
        %v1522 = vadd.f32 %v1346, %v1501
        %v1523 = vadd.f32 %v1347, %v1503
        %v1524 = vadd.f32 %v1348, %v1505
        %v1525 = vadd.f32 %v1349, %v1507
        %v1526 = vadd.f32 %v1350, %v1509
        %v1527 = vadd.f32 %v1351, %v1511
        %vm1528 = vcmask 7168
        %1529 = vst.msk [vmem:[#allocation3] sm:$0xff] %vm1528, %v1512
        %1530 = vst.msk [vmem:[#allocation3 + $0x8] sm:$0xff] %vm1528, %v1513
        %1531 = vst.msk [vmem:[#allocation3 + $0x10] sm:$0xff] %vm1528, %v1514
        %1532 = vst.msk [vmem:[#allocation3 + $0x18] sm:$0xff] %vm1528, %v1515
        %1533 = vst.msk [vmem:[#allocation3 + $0x20] sm:$0xff] %vm1528, %v1516
        %1534 = vst.msk [vmem:[#allocation3 + $0x28] sm:$0xff] %vm1528, %v1517
        %1535 = vst.msk [vmem:[#allocation3 + $0x30] sm:$0xff] %vm1528, %v1518
        %1536 = vst.msk [vmem:[#allocation3 + $0x38] sm:$0xff] %vm1528, %v1519
        %1537 = vst.msk [vmem:[#allocation3 + $0x40] sm:$0xff] %vm1528, %v1520
        %1538 = vst.msk [vmem:[#allocation3 + $0x48] sm:$0xff] %vm1528, %v1521
        %1539 = vst.msk [vmem:[#allocation3 + $0x50] sm:$0xff] %vm1528, %v1522
        %1540 = vst.msk [vmem:[#allocation3 + $0x58] sm:$0xff] %vm1528, %v1523
        %1541 = vst.msk [vmem:[#allocation3 + $0x60] sm:$0xff] %vm1528, %v1524
        %1542 = vst.msk [vmem:[#allocation3 + $0x68] sm:$0xff] %vm1528, %v1525
        %1543 = vst.msk [vmem:[#allocation3 + $0x70] sm:$0xff] %vm1528, %v1526
        %1544 = vst.msk [vmem:[#allocation3 + $0x78] sm:$0xff] %vm1528, %v1527
        %1545 = vst.msk [vmem:[#allocation2] sm:$0xff] %vm1528, %v1256
        %1546 = vst.msk [vmem:[#allocation2 + $0x8] sm:$0xff] %vm1528, %v1257
        %1547 = vst.msk [vmem:[#allocation2 + $0x10] sm:$0xff] %vm1528, %v1258
        %1548 = vst.msk [vmem:[#allocation2 + $0x18] sm:$0xff] %vm1528, %v1259
        %1549 = vst.msk [vmem:[#allocation2 + $0x20] sm:$0xff] %vm1528, %v1260
        %1550 = vst.msk [vmem:[#allocation2 + $0x28] sm:$0xff] %vm1528, %v1261
        %1551 = vst.msk [vmem:[#allocation2 + $0x30] sm:$0xff] %vm1528, %v1262
        %1552 = vst.msk [vmem:[#allocation2 + $0x38] sm:$0xff] %vm1528, %v1263
        %1553 = vst.msk [vmem:[#allocation2 + $0x40] sm:$0xff] %vm1528, %v1264
        %1554 = vst.msk [vmem:[#allocation2 + $0x48] sm:$0xff] %vm1528, %v1265
        %1555 = vst.msk [vmem:[#allocation2 + $0x50] sm:$0xff] %vm1528, %v1266
        %1556 = vst.msk [vmem:[#allocation2 + $0x58] sm:$0xff] %vm1528, %v1267
        %1557 = vst.msk [vmem:[#allocation2 + $0x60] sm:$0xff] %vm1528, %v1268
        %1558 = vst.msk [vmem:[#allocation2 + $0x68] sm:$0xff] %vm1528, %v1269
        %1559 = vst.msk [vmem:[#allocation2 + $0x70] sm:$0xff] %vm1528, %v1270
        %1560 = vst.msk [vmem:[#allocation2 + $0x78] sm:$0xff] %vm1528, %v1271
        %v1561 = vld [vmem:[#allocation4] sm:$0xff]
        %v1562 = vld [vmem:[#allocation4 + $0x8] sm:$0xff]
        %v1563 = vld [vmem:[#allocation4 + $0x10] sm:$0xff]
        %v1564 = vld [vmem:[#allocation4 + $0x18] sm:$0xff]
        %v1565 = vld [vmem:[#allocation4 + $0x20] sm:$0xff]
        %v1566 = vld [vmem:[#allocation4 + $0x28] sm:$0xff]
        %v1567 = vld [vmem:[#allocation4 + $0x30] sm:$0xff]
        %v1568 = vld [vmem:[#allocation4 + $0x38] sm:$0xff]
        %v1569 = vld [vmem:[#allocation4 + $0x40] sm:$0xff]
        %v1570 = vld [vmem:[#allocation4 + $0x48] sm:$0xff]
        %v1571 = vld [vmem:[#allocation4 + $0x50] sm:$0xff]
        %v1572 = vld [vmem:[#allocation4 + $0x58] sm:$0xff]
        %v1573 = vld [vmem:[#allocation4 + $0x60] sm:$0xff]
        %v1574 = vld [vmem:[#allocation4 + $0x68] sm:$0xff]
        %v1575 = vld [vmem:[#allocation4 + $0x70] sm:$0xff]
        %v1576 = vld [vmem:[#allocation4 + $0x78] sm:$0xff]
        %1577 = vmax.xlane.f32.xlu0 %v1192
        %v1578 = vpop.xlane.xlu0 %1577
        %1579 = vmax.xlane.f32.xlu0 %v1193
        %v1580 = vpop.xlane.xlu0 %1579
        %1581 = vmax.xlane.f32.xlu0 %v1194
        %v1582 = vpop.xlane.xlu0 %1581
        %1583 = vmax.xlane.f32.xlu0 %v1195
        %v1584 = vpop.xlane.xlu0 %1583
        %1585 = vmax.xlane.f32.xlu0 %v1196
        %v1586 = vpop.xlane.xlu0 %1585
        %1587 = vmax.xlane.f32.xlu0 %v1197
        %v1588 = vpop.xlane.xlu0 %1587
        %1589 = vmax.xlane.f32.xlu0 %v1198
        %v1590 = vpop.xlane.xlu0 %1589
        %1591 = vmax.xlane.f32.xlu0 %v1199
        %v1592 = vpop.xlane.xlu0 %1591
        %1593 = vmax.xlane.f32.xlu0 %v1200
        %v1594 = vpop.xlane.xlu0 %1593
        %1595 = vmax.xlane.f32.xlu0 %v1201
        %v1596 = vpop.xlane.xlu0 %1595
        %1597 = vmax.xlane.f32.xlu0 %v1202
        %v1598 = vpop.xlane.xlu0 %1597
        %1599 = vmax.xlane.f32.xlu0 %v1203
        %v1600 = vpop.xlane.xlu0 %1599
        %1601 = vmax.xlane.f32.xlu0 %v1204
        %v1602 = vpop.xlane.xlu0 %1601
        %1603 = vmax.xlane.f32.xlu0 %v1205
        %v1604 = vpop.xlane.xlu0 %1603
        %1605 = vmax.xlane.f32.xlu0 %v1206
        %v1606 = vpop.xlane.xlu0 %1605
        %1607 = vmax.xlane.f32.xlu0 %v1207
        %v1608 = vpop.xlane.xlu0 %1607
        %v1609 = vmax.f32 %v1561, %v1578
        %v1610 = vmax.f32 %v1562, %v1580
        %v1611 = vmax.f32 %v1563, %v1582
        %v1612 = vmax.f32 %v1564, %v1584
        %v1613 = vmax.f32 %v1565, %v1586
        %v1614 = vmax.f32 %v1566, %v1588
        %v1615 = vmax.f32 %v1567, %v1590
        %v1616 = vmax.f32 %v1568, %v1592
        %v1617 = vmax.f32 %v1569, %v1594
        %v1618 = vmax.f32 %v1570, %v1596
        %v1619 = vmax.f32 %v1571, %v1598
        %v1620 = vmax.f32 %v1572, %v1600
        %v1621 = vmax.f32 %v1573, %v1602
        %v1622 = vmax.f32 %v1574, %v1604
        %v1623 = vmax.f32 %v1575, %v1606
        %v1624 = vmax.f32 %v1576, %v1608
        %v1625 = vld [vmem:[#allocation5] sm:$0xff]
        %v1626 = vld [vmem:[#allocation5 + $0x8] sm:$0xff]
        %v1627 = vld [vmem:[#allocation5 + $0x10] sm:$0xff]
        %v1628 = vld [vmem:[#allocation5 + $0x18] sm:$0xff]
        %v1629 = vld [vmem:[#allocation5 + $0x20] sm:$0xff]
        %v1630 = vld [vmem:[#allocation5 + $0x28] sm:$0xff]
        %v1631 = vld [vmem:[#allocation5 + $0x30] sm:$0xff]
        %v1632 = vld [vmem:[#allocation5 + $0x38] sm:$0xff]
        %v1633 = vld [vmem:[#allocation5 + $0x40] sm:$0xff]
        %v1634 = vld [vmem:[#allocation5 + $0x48] sm:$0xff]
        %v1635 = vld [vmem:[#allocation5 + $0x50] sm:$0xff]
        %v1636 = vld [vmem:[#allocation5 + $0x58] sm:$0xff]
        %v1637 = vld [vmem:[#allocation5 + $0x60] sm:$0xff]
        %v1638 = vld [vmem:[#allocation5 + $0x68] sm:$0xff]
        %v1639 = vld [vmem:[#allocation5 + $0x70] sm:$0xff]
        %v1640 = vld [vmem:[#allocation5 + $0x78] sm:$0xff]
        %v1641 = vsub.f32 %v1561, %v1609
        %v1642 = vsub.f32 %v1562, %v1610
        %v1643 = vsub.f32 %v1563, %v1611
        %v1644 = vsub.f32 %v1564, %v1612
        %v1645 = vsub.f32 %v1565, %v1613
        %v1646 = vsub.f32 %v1566, %v1614
        %v1647 = vsub.f32 %v1567, %v1615
        %v1648 = vsub.f32 %v1568, %v1616
        %v1649 = vsub.f32 %v1569, %v1617
        %v1650 = vsub.f32 %v1570, %v1618
        %v1651 = vsub.f32 %v1571, %v1619
        %v1652 = vsub.f32 %v1572, %v1620
        %v1653 = vsub.f32 %v1573, %v1621
        %v1654 = vsub.f32 %v1574, %v1622
        %v1655 = vsub.f32 %v1575, %v1623
        %v1656 = vsub.f32 %v1576, %v1624
        %v1657 = vmul.f32 %v1641, 1.442695
        %v1658 = vpow.pop %v1657
        %v1659 = vmul.f32 %v1642, 1.442695
        %v1660 = vpow.pop %v1659
        %v1661 = vmul.f32 %v1643, 1.442695
        %v1662 = vpow.pop %v1661
        %v1663 = vmul.f32 %v1644, 1.442695
        %v1664 = vpow.pop %v1663
        %v1665 = vmul.f32 %v1645, 1.442695
        %v1666 = vpow.pop %v1665
        %v1667 = vmul.f32 %v1646, 1.442695
        %v1668 = vpow.pop %v1667
        %v1669 = vmul.f32 %v1647, 1.442695
        %v1670 = vpow.pop %v1669
        %v1671 = vmul.f32 %v1648, 1.442695
        %v1672 = vpow.pop %v1671
        %v1673 = vmul.f32 %v1649, 1.442695
        %v1674 = vpow.pop %v1673
        %v1675 = vmul.f32 %v1650, 1.442695
        %v1676 = vpow.pop %v1675
        %v1677 = vmul.f32 %v1651, 1.442695
        %v1678 = vpow.pop %v1677
        %v1679 = vmul.f32 %v1652, 1.442695
        %v1680 = vpow.pop %v1679
        %v1681 = vmul.f32 %v1653, 1.442695
        %v1682 = vpow.pop %v1681
        %v1683 = vmul.f32 %v1654, 1.442695
        %v1684 = vpow.pop %v1683
        %v1685 = vmul.f32 %v1655, 1.442695
        %v1686 = vpow.pop %v1685
        %v1687 = vmul.f32 %v1656, 1.442695
        %v1688 = vpow.pop %v1687
        %v1689 = vmul.f32 %v1625, %v1658
        %v1690 = vmul.f32 %v1626, %v1660
        %v1691 = vmul.f32 %v1627, %v1662
        %v1692 = vmul.f32 %v1628, %v1664
        %v1693 = vmul.f32 %v1629, %v1666
        %v1694 = vmul.f32 %v1630, %v1668
        %v1695 = vmul.f32 %v1631, %v1670
        %v1696 = vmul.f32 %v1632, %v1672
        %v1697 = vmul.f32 %v1633, %v1674
        %v1698 = vmul.f32 %v1634, %v1676
        %v1699 = vmul.f32 %v1635, %v1678
        %v1700 = vmul.f32 %v1636, %v1680
        %v1701 = vmul.f32 %v1637, %v1682
        %v1702 = vmul.f32 %v1638, %v1684
        %v1703 = vmul.f32 %v1639, %v1686
        %v1704 = vmul.f32 %v1640, %v1688
        %1706 = vset.pattern.permute.xlu0 0
        %1707 = vperm.xlu0 %1706, %v1609
        %v1708 = vpop.permute.xlu0 %1707
        %1711 = vset.pattern.permute.xlu0 0
        %1712 = vperm.xlu0 %1711, %v1610
        %v1713 = vpop.permute.xlu0 %1712
        %1716 = vset.pattern.permute.xlu0 0
        %1717 = vperm.xlu0 %1716, %v1611
        %v1718 = vpop.permute.xlu0 %1717
        %1721 = vset.pattern.permute.xlu0 0
        %1722 = vperm.xlu0 %1721, %v1612
        %v1723 = vpop.permute.xlu0 %1722
        %1726 = vset.pattern.permute.xlu0 0
        %1727 = vperm.xlu0 %1726, %v1613
        %v1728 = vpop.permute.xlu0 %1727
        %1731 = vset.pattern.permute.xlu0 0
        %1732 = vperm.xlu0 %1731, %v1614
        %v1733 = vpop.permute.xlu0 %1732
        %1736 = vset.pattern.permute.xlu0 0
        %1737 = vperm.xlu0 %1736, %v1615
        %v1738 = vpop.permute.xlu0 %1737
        %1741 = vset.pattern.permute.xlu0 0
        %1742 = vperm.xlu0 %1741, %v1616
        %v1743 = vpop.permute.xlu0 %1742
        %1746 = vset.pattern.permute.xlu0 0
        %1747 = vperm.xlu0 %1746, %v1617
        %v1748 = vpop.permute.xlu0 %1747
        %1751 = vset.pattern.permute.xlu0 0
        %1752 = vperm.xlu0 %1751, %v1618
        %v1753 = vpop.permute.xlu0 %1752
        %1756 = vset.pattern.permute.xlu0 0
        %1757 = vperm.xlu0 %1756, %v1619
        %v1758 = vpop.permute.xlu0 %1757
        %1761 = vset.pattern.permute.xlu0 0
        %1762 = vperm.xlu0 %1761, %v1620
        %v1763 = vpop.permute.xlu0 %1762
        %1766 = vset.pattern.permute.xlu0 0
        %1767 = vperm.xlu0 %1766, %v1621
        %v1768 = vpop.permute.xlu0 %1767
        %1771 = vset.pattern.permute.xlu0 0
        %1772 = vperm.xlu0 %1771, %v1622
        %v1773 = vpop.permute.xlu0 %1772
        %1776 = vset.pattern.permute.xlu0 0
        %1777 = vperm.xlu0 %1776, %v1623
        %v1778 = vpop.permute.xlu0 %1777
        %1781 = vset.pattern.permute.xlu0 0
        %1782 = vperm.xlu0 %1781, %v1624
        %v1783 = vpop.permute.xlu0 %1782
        %v1785 = vsub.f32 %v1192, %v1708
        %v1786 = vsub.f32 %v1193, %v1713
        %v1787 = vsub.f32 %v1194, %v1718
        %v1788 = vsub.f32 %v1195, %v1723
        %v1789 = vsub.f32 %v1196, %v1728
        %v1790 = vsub.f32 %v1197, %v1733
        %v1791 = vsub.f32 %v1198, %v1738
        %v1792 = vsub.f32 %v1199, %v1743
        %v1793 = vsub.f32 %v1200, %v1748
        %v1794 = vsub.f32 %v1201, %v1753
        %v1795 = vsub.f32 %v1202, %v1758
        %v1796 = vsub.f32 %v1203, %v1763
        %v1797 = vsub.f32 %v1204, %v1768
        %v1798 = vsub.f32 %v1205, %v1773
        %v1799 = vsub.f32 %v1206, %v1778
        %v1800 = vsub.f32 %v1207, %v1783
        %v1801 = vmul.f32 %v1785, 1.442695
        %v1802 = vpow.pop %v1801
        %v1803 = vmul.f32 %v1786, 1.442695
        %v1804 = vpow.pop %v1803
        %v1805 = vmul.f32 %v1787, 1.442695
        %v1806 = vpow.pop %v1805
        %v1807 = vmul.f32 %v1788, 1.442695
        %v1808 = vpow.pop %v1807
        %v1809 = vmul.f32 %v1789, 1.442695
        %v1810 = vpow.pop %v1809
        %v1811 = vmul.f32 %v1790, 1.442695
        %v1812 = vpow.pop %v1811
        %v1813 = vmul.f32 %v1791, 1.442695
        %v1814 = vpow.pop %v1813
        %v1815 = vmul.f32 %v1792, 1.442695
        %v1816 = vpow.pop %v1815
        %v1817 = vmul.f32 %v1793, 1.442695
        %v1818 = vpow.pop %v1817
        %v1819 = vmul.f32 %v1794, 1.442695
        %v1820 = vpow.pop %v1819
        %v1821 = vmul.f32 %v1795, 1.442695
        %v1822 = vpow.pop %v1821
        %v1823 = vmul.f32 %v1796, 1.442695
        %v1824 = vpow.pop %v1823
        %v1825 = vmul.f32 %v1797, 1.442695
        %v1826 = vpow.pop %v1825
        %v1827 = vmul.f32 %v1798, 1.442695
        %v1828 = vpow.pop %v1827
        %v1829 = vmul.f32 %v1799, 1.442695
        %v1830 = vpow.pop %v1829
        %v1831 = vmul.f32 %v1800, 1.442695
        %v1832 = vpow.pop %v1831
        %1833 = vadd.xlane.f32.xlu0 %v1802
        %v1834 = vpop.xlane.xlu0 %1833
        %1835 = vadd.xlane.f32.xlu0 %v1804
        %v1836 = vpop.xlane.xlu0 %1835
        %1837 = vadd.xlane.f32.xlu0 %v1806
        %v1838 = vpop.xlane.xlu0 %1837
        %1839 = vadd.xlane.f32.xlu0 %v1808
        %v1840 = vpop.xlane.xlu0 %1839
        %1841 = vadd.xlane.f32.xlu0 %v1810
        %v1842 = vpop.xlane.xlu0 %1841
        %1843 = vadd.xlane.f32.xlu0 %v1812
        %v1844 = vpop.xlane.xlu0 %1843
        %1845 = vadd.xlane.f32.xlu0 %v1814
        %v1846 = vpop.xlane.xlu0 %1845
        %1847 = vadd.xlane.f32.xlu0 %v1816
        %v1848 = vpop.xlane.xlu0 %1847
        %1849 = vadd.xlane.f32.xlu0 %v1818
        %v1850 = vpop.xlane.xlu0 %1849
        %1851 = vadd.xlane.f32.xlu0 %v1820
        %v1852 = vpop.xlane.xlu0 %1851
        %1853 = vadd.xlane.f32.xlu0 %v1822
        %v1854 = vpop.xlane.xlu0 %1853
        %1855 = vadd.xlane.f32.xlu0 %v1824
        %v1856 = vpop.xlane.xlu0 %1855
        %1857 = vadd.xlane.f32.xlu0 %v1826
        %v1858 = vpop.xlane.xlu0 %1857
        %1859 = vadd.xlane.f32.xlu0 %v1828
        %v1860 = vpop.xlane.xlu0 %1859
        %1861 = vadd.xlane.f32.xlu0 %v1830
        %v1862 = vpop.xlane.xlu0 %1861
        %1863 = vadd.xlane.f32.xlu0 %v1832
        %v1864 = vpop.xlane.xlu0 %1863
        %v1865 = vadd.f32 %v1689, %v1834
        %v1866 = vadd.f32 %v1690, %v1836
        %v1867 = vadd.f32 %v1691, %v1838
        %v1868 = vadd.f32 %v1692, %v1840
        %v1869 = vadd.f32 %v1693, %v1842
        %v1870 = vadd.f32 %v1694, %v1844
        %v1871 = vadd.f32 %v1695, %v1846
        %v1872 = vadd.f32 %v1696, %v1848
        %v1873 = vadd.f32 %v1697, %v1850
        %v1874 = vadd.f32 %v1698, %v1852
        %v1875 = vadd.f32 %v1699, %v1854
        %v1876 = vadd.f32 %v1700, %v1856
        %v1877 = vadd.f32 %v1701, %v1858
        %v1878 = vadd.f32 %v1702, %v1860
        %v1879 = vadd.f32 %v1703, %v1862
        %v1880 = vadd.f32 %v1704, %v1864
        %1881 = vst.msk [vmem:[#allocation5] sm:$0xff] %vm1528, %v1865
        %1882 = vst.msk [vmem:[#allocation5 + $0x8] sm:$0xff] %vm1528, %v1866
        %1883 = vst.msk [vmem:[#allocation5 + $0x10] sm:$0xff] %vm1528, %v1867
        %1884 = vst.msk [vmem:[#allocation5 + $0x18] sm:$0xff] %vm1528, %v1868
        %1885 = vst.msk [vmem:[#allocation5 + $0x20] sm:$0xff] %vm1528, %v1869
        %1886 = vst.msk [vmem:[#allocation5 + $0x28] sm:$0xff] %vm1528, %v1870
        %1887 = vst.msk [vmem:[#allocation5 + $0x30] sm:$0xff] %vm1528, %v1871
        %1888 = vst.msk [vmem:[#allocation5 + $0x38] sm:$0xff] %vm1528, %v1872
        %1889 = vst.msk [vmem:[#allocation5 + $0x40] sm:$0xff] %vm1528, %v1873
        %1890 = vst.msk [vmem:[#allocation5 + $0x48] sm:$0xff] %vm1528, %v1874
        %1891 = vst.msk [vmem:[#allocation5 + $0x50] sm:$0xff] %vm1528, %v1875
        %1892 = vst.msk [vmem:[#allocation5 + $0x58] sm:$0xff] %vm1528, %v1876
        %1893 = vst.msk [vmem:[#allocation5 + $0x60] sm:$0xff] %vm1528, %v1877
        %1894 = vst.msk [vmem:[#allocation5 + $0x68] sm:$0xff] %vm1528, %v1878
        %1895 = vst.msk [vmem:[#allocation5 + $0x70] sm:$0xff] %vm1528, %v1879
        %1896 = vst.msk [vmem:[#allocation5 + $0x78] sm:$0xff] %vm1528, %v1880
        %1897 = vst.msk [vmem:[#allocation4] sm:$0xff] %vm1528, %v1609
        %1898 = vst.msk [vmem:[#allocation4 + $0x8] sm:$0xff] %vm1528, %v1610
        %1899 = vst.msk [vmem:[#allocation4 + $0x10] sm:$0xff] %vm1528, %v1611
        %1900 = vst.msk [vmem:[#allocation4 + $0x18] sm:$0xff] %vm1528, %v1612
        %1901 = vst.msk [vmem:[#allocation4 + $0x20] sm:$0xff] %vm1528, %v1613
        %1902 = vst.msk [vmem:[#allocation4 + $0x28] sm:$0xff] %vm1528, %v1614
        %1903 = vst.msk [vmem:[#allocation4 + $0x30] sm:$0xff] %vm1528, %v1615
        %1904 = vst.msk [vmem:[#allocation4 + $0x38] sm:$0xff] %vm1528, %v1616
        %1905 = vst.msk [vmem:[#allocation4 + $0x40] sm:$0xff] %vm1528, %v1617
        %1906 = vst.msk [vmem:[#allocation4 + $0x48] sm:$0xff] %vm1528, %v1618
        %1907 = vst.msk [vmem:[#allocation4 + $0x50] sm:$0xff] %vm1528, %v1619
        %1908 = vst.msk [vmem:[#allocation4 + $0x58] sm:$0xff] %vm1528, %v1620
        %1909 = vst.msk [vmem:[#allocation4 + $0x60] sm:$0xff] %vm1528, %v1621
        %1910 = vst.msk [vmem:[#allocation4 + $0x68] sm:$0xff] %vm1528, %v1622
        %1911 = vst.msk [vmem:[#allocation4 + $0x70] sm:$0xff] %vm1528, %v1623
        %1912 = vst.msk [vmem:[#allocation4 + $0x78] sm:$0xff] %vm1528, %v1624
        %vm1913 = vmxor %vm1160, 1
        %vm1914 = vmxor %vm1161, 1
        %vm1915 = vmxor %vm1162, 1
        %vm1916 = vmxor %vm1163, 1
        %vm1917 = vmxor %vm1164, 1
        %vm1918 = vmxor %vm1165, 1
        %vm1919 = vmxor %vm1166, 1
        %vm1920 = vmxor %vm1167, 1
        %vm1921 = vmxor %vm1168, 1
        %vm1922 = vmxor %vm1169, 1
        %vm1923 = vmxor %vm1170, 1
        %vm1924 = vmxor %vm1171, 1
        %vm1925 = vmxor %vm1172, 1
        %vm1926 = vmxor %vm1173, 1
        %vm1927 = vmxor %vm1174, 1
        %vm1928 = vmxor %vm1175, 1
        %vm1929 = vmand %vm1104, %vm1913
        %vm1930 = vmand %vm1105, %vm1914
        %vm1931 = vmand %vm1106, %vm1915
        %vm1932 = vmand %vm1107, %vm1916
        %vm1933 = vmand %vm1108, %vm1917
        %vm1934 = vmand %vm1109, %vm1918
        %vm1935 = vmand %vm1110, %vm1919
        %vm1936 = vmand %vm1111, %vm1920
        %vm1937 = vmand %vm1112, %vm1921
        %vm1938 = vmand %vm1113, %vm1922
        %vm1939 = vmand %vm1114, %vm1923
        %vm1940 = vmand %vm1115, %vm1924
        %vm1941 = vmand %vm1116, %vm1925
        %vm1942 = vmand %vm1117, %vm1926
        %vm1943 = vmand %vm1118, %vm1927
        %vm1944 = vmand %vm1119, %vm1928
        %v1945 = vld [vmem:[#allocation6] sm:$0xff]
        %v1946 = vld [vmem:[#allocation6 + $0x8] sm:$0xff]
        %v1947 = vld [vmem:[#allocation6 + $0x10] sm:$0xff]
        %v1948 = vld [vmem:[#allocation6 + $0x18] sm:$0xff]
        %v1949 = vld [vmem:[#allocation6 + $0x20] sm:$0xff]
        %v1950 = vld [vmem:[#allocation6 + $0x28] sm:$0xff]
        %v1951 = vld [vmem:[#allocation6 + $0x30] sm:$0xff]
        %v1952 = vld [vmem:[#allocation6 + $0x38] sm:$0xff]
        %v1953 = vld [vmem:[#allocation6 + $0x40] sm:$0xff]
        %v1954 = vld [vmem:[#allocation6 + $0x48] sm:$0xff]
        %v1955 = vld [vmem:[#allocation6 + $0x50] sm:$0xff]
        %v1956 = vld [vmem:[#allocation6 + $0x58] sm:$0xff]
        %v1957 = vld [vmem:[#allocation6 + $0x60] sm:$0xff]
        %v1958 = vld [vmem:[#allocation6 + $0x68] sm:$0xff]
        %v1959 = vld [vmem:[#allocation6 + $0x70] sm:$0xff]
        %v1960 = vld [vmem:[#allocation6 + $0x78] sm:$0xff]
        %v1961 = vsel %vm1929, %v755, 0.0
        %v1962 = vsel %vm1930, %v760, 0.0
        %v1963 = vsel %vm1931, %v765, 0.0
        %v1964 = vsel %vm1932, %v770, 0.0
        %v1965 = vsel %vm1933, %v775, 0.0
        %v1966 = vsel %vm1934, %v780, 0.0
        %v1967 = vsel %vm1935, %v785, 0.0
        %v1968 = vsel %vm1936, %v790, 0.0
        %v1969 = vsel %vm1937, %v795, 0.0
        %v1970 = vsel %vm1938, %v800, 0.0
        %v1971 = vsel %vm1939, %v805, 0.0
        %v1972 = vsel %vm1940, %v810, 0.0
        %v1973 = vsel %vm1941, %v815, 0.0
        %v1974 = vsel %vm1942, %v820, 0.0
        %v1975 = vsel %vm1943, %v825, 0.0
        %v1976 = vsel %vm1944, %v830, 0.0
        %1977 = vadd.xlane.f32.xlu0 %v1961
        %v1978 = vpop.xlane.xlu0 %1977
        %1979 = vadd.xlane.f32.xlu0 %v1962
        %v1980 = vpop.xlane.xlu0 %1979
        %1981 = vadd.xlane.f32.xlu0 %v1963
        %v1982 = vpop.xlane.xlu0 %1981
        %1983 = vadd.xlane.f32.xlu0 %v1964
        %v1984 = vpop.xlane.xlu0 %1983
        %1985 = vadd.xlane.f32.xlu0 %v1965
        %v1986 = vpop.xlane.xlu0 %1985
        %1987 = vadd.xlane.f32.xlu0 %v1966
        %v1988 = vpop.xlane.xlu0 %1987
        %1989 = vadd.xlane.f32.xlu0 %v1967
        %v1990 = vpop.xlane.xlu0 %1989
        %1991 = vadd.xlane.f32.xlu0 %v1968
        %v1992 = vpop.xlane.xlu0 %1991
        %1993 = vadd.xlane.f32.xlu0 %v1969
        %v1994 = vpop.xlane.xlu0 %1993
        %1995 = vadd.xlane.f32.xlu0 %v1970
        %v1996 = vpop.xlane.xlu0 %1995
        %1997 = vadd.xlane.f32.xlu0 %v1971
        %v1998 = vpop.xlane.xlu0 %1997
        %1999 = vadd.xlane.f32.xlu0 %v1972
        %v2000 = vpop.xlane.xlu0 %1999
        %2001 = vadd.xlane.f32.xlu0 %v1973
        %v2002 = vpop.xlane.xlu0 %2001
        %2003 = vadd.xlane.f32.xlu0 %v1974
        %v2004 = vpop.xlane.xlu0 %2003
        %2005 = vadd.xlane.f32.xlu0 %v1975
        %v2006 = vpop.xlane.xlu0 %2005
        %2007 = vadd.xlane.f32.xlu0 %v1976
        %v2008 = vpop.xlane.xlu0 %2007
        %v2009 = vadd.f32 %v1945, %v1978
        %v2010 = vadd.f32 %v1946, %v1980
        %v2011 = vadd.f32 %v1947, %v1982
        %v2012 = vadd.f32 %v1948, %v1984
        %v2013 = vadd.f32 %v1949, %v1986
        %v2014 = vadd.f32 %v1950, %v1988
        %v2015 = vadd.f32 %v1951, %v1990
        %v2016 = vadd.f32 %v1952, %v1992
        %v2017 = vadd.f32 %v1953, %v1994
        %v2018 = vadd.f32 %v1954, %v1996
        %v2019 = vadd.f32 %v1955, %v1998
        %v2020 = vadd.f32 %v1956, %v2000
        %v2021 = vadd.f32 %v1957, %v2002
        %v2022 = vadd.f32 %v1958, %v2004
        %v2023 = vadd.f32 %v1959, %v2006
        %v2024 = vadd.f32 %v1960, %v2008
        %2025 = vst.msk [vmem:[#allocation6] sm:$0xff] %vm1528, %v2009
        %2026 = vst.msk [vmem:[#allocation6 + $0x8] sm:$0xff] %vm1528, %v2010
        %2027 = vst.msk [vmem:[#allocation6 + $0x10] sm:$0xff] %vm1528, %v2011
        %2028 = vst.msk [vmem:[#allocation6 + $0x18] sm:$0xff] %vm1528, %v2012
        %2029 = vst.msk [vmem:[#allocation6 + $0x20] sm:$0xff] %vm1528, %v2013
        %2030 = vst.msk [vmem:[#allocation6 + $0x28] sm:$0xff] %vm1528, %v2014
        %2031 = vst.msk [vmem:[#allocation6 + $0x30] sm:$0xff] %vm1528, %v2015
        %2032 = vst.msk [vmem:[#allocation6 + $0x38] sm:$0xff] %vm1528, %v2016
        %2033 = vst.msk [vmem:[#allocation6 + $0x40] sm:$0xff] %vm1528, %v2017
        %2034 = vst.msk [vmem:[#allocation6 + $0x48] sm:$0xff] %vm1528, %v2018
        %2035 = vst.msk [vmem:[#allocation6 + $0x50] sm:$0xff] %vm1528, %v2019
        %2036 = vst.msk [vmem:[#allocation6 + $0x58] sm:$0xff] %vm1528, %v2020
        %2037 = vst.msk [vmem:[#allocation6 + $0x60] sm:$0xff] %vm1528, %v2021
        %2038 = vst.msk [vmem:[#allocation6 + $0x68] sm:$0xff] %vm1528, %v2022
        %2039 = vst.msk [vmem:[#allocation6 + $0x70] sm:$0xff] %vm1528, %v2023
        %2040 = vst.msk [vmem:[#allocation6 + $0x78] sm:$0xff] %vm1528, %v2024
        %v2041 = vld [vmem:[#allocation7] sm:$0xff]
        %v2042 = vld [vmem:[#allocation7 + $0x8] sm:$0xff]
        %v2043 = vld [vmem:[#allocation7 + $0x10] sm:$0xff]
        %v2044 = vld [vmem:[#allocation7 + $0x18] sm:$0xff]
        %v2045 = vld [vmem:[#allocation7 + $0x20] sm:$0xff]
        %v2046 = vld [vmem:[#allocation7 + $0x28] sm:$0xff]
        %v2047 = vld [vmem:[#allocation7 + $0x30] sm:$0xff]
        %v2048 = vld [vmem:[#allocation7 + $0x38] sm:$0xff]
        %v2049 = vld [vmem:[#allocation7 + $0x40] sm:$0xff]
        %v2050 = vld [vmem:[#allocation7 + $0x48] sm:$0xff]
        %v2051 = vld [vmem:[#allocation7 + $0x50] sm:$0xff]
        %v2052 = vld [vmem:[#allocation7 + $0x58] sm:$0xff]
        %v2053 = vld [vmem:[#allocation7 + $0x60] sm:$0xff]
        %v2054 = vld [vmem:[#allocation7 + $0x68] sm:$0xff]
        %v2055 = vld [vmem:[#allocation7 + $0x70] sm:$0xff]
        %v2056 = vld [vmem:[#allocation7 + $0x78] sm:$0xff]
        %v2057 = vsel %vm1929, 1, 0
        %v2058 = vsel %vm1930, 1, 0
        %v2059 = vsel %vm1931, 1, 0
        %v2060 = vsel %vm1932, 1, 0
        %v2061 = vsel %vm1933, 1, 0
        %v2062 = vsel %vm1934, 1, 0
        %v2063 = vsel %vm1935, 1, 0
        %v2064 = vsel %vm1936, 1, 0
        %v2065 = vsel %vm1937, 1, 0
        %v2066 = vsel %vm1938, 1, 0
        %v2067 = vsel %vm1939, 1, 0
        %v2068 = vsel %vm1940, 1, 0
        %v2069 = vsel %vm1941, 1, 0
        %v2070 = vsel %vm1942, 1, 0
        %v2071 = vsel %vm1943, 1, 0
        %v2072 = vsel %vm1944, 1, 0
        %v2073 = vcvt.s32.f32 %v2057
        %v2074 = vcvt.s32.f32 %v2058
        %v2075 = vcvt.s32.f32 %v2059
        %v2076 = vcvt.s32.f32 %v2060
        %v2077 = vcvt.s32.f32 %v2061
        %v2078 = vcvt.s32.f32 %v2062
        %v2079 = vcvt.s32.f32 %v2063
        %v2080 = vcvt.s32.f32 %v2064
        %v2081 = vcvt.s32.f32 %v2065
        %v2082 = vcvt.s32.f32 %v2066
        %v2083 = vcvt.s32.f32 %v2067
        %v2084 = vcvt.s32.f32 %v2068
        %v2085 = vcvt.s32.f32 %v2069
        %v2086 = vcvt.s32.f32 %v2070
        %v2087 = vcvt.s32.f32 %v2071
        %v2088 = vcvt.s32.f32 %v2072
        %2089 = vadd.xlane.f32.xlu0 %v2073
        %v2090 = vpop.xlane.xlu0 %2089
        %2091 = vadd.xlane.f32.xlu0 %v2074
        %v2092 = vpop.xlane.xlu0 %2091
        %2093 = vadd.xlane.f32.xlu0 %v2075
        %v2094 = vpop.xlane.xlu0 %2093
        %2095 = vadd.xlane.f32.xlu0 %v2076
        %v2096 = vpop.xlane.xlu0 %2095
        %2097 = vadd.xlane.f32.xlu0 %v2077
        %v2098 = vpop.xlane.xlu0 %2097
        %2099 = vadd.xlane.f32.xlu0 %v2078
        %v2100 = vpop.xlane.xlu0 %2099
        %2101 = vadd.xlane.f32.xlu0 %v2079
        %v2102 = vpop.xlane.xlu0 %2101
        %2103 = vadd.xlane.f32.xlu0 %v2080
        %v2104 = vpop.xlane.xlu0 %2103
        %2105 = vadd.xlane.f32.xlu0 %v2081
        %v2106 = vpop.xlane.xlu0 %2105
        %2107 = vadd.xlane.f32.xlu0 %v2082
        %v2108 = vpop.xlane.xlu0 %2107
        %2109 = vadd.xlane.f32.xlu0 %v2083
        %v2110 = vpop.xlane.xlu0 %2109
        %2111 = vadd.xlane.f32.xlu0 %v2084
        %v2112 = vpop.xlane.xlu0 %2111
        %2113 = vadd.xlane.f32.xlu0 %v2085
        %v2114 = vpop.xlane.xlu0 %2113
        %2115 = vadd.xlane.f32.xlu0 %v2086
        %v2116 = vpop.xlane.xlu0 %2115
        %2117 = vadd.xlane.f32.xlu0 %v2087
        %v2118 = vpop.xlane.xlu0 %2117
        %2119 = vadd.xlane.f32.xlu0 %v2088
        %v2120 = vpop.xlane.xlu0 %2119
        %v2121 = vadd.f32 %v2041, %v2090
        %v2122 = vadd.f32 %v2042, %v2092
        %v2123 = vadd.f32 %v2043, %v2094
        %v2124 = vadd.f32 %v2044, %v2096
        %v2125 = vadd.f32 %v2045, %v2098
        %v2126 = vadd.f32 %v2046, %v2100
        %v2127 = vadd.f32 %v2047, %v2102
        %v2128 = vadd.f32 %v2048, %v2104
        %v2129 = vadd.f32 %v2049, %v2106
        %v2130 = vadd.f32 %v2050, %v2108
        %v2131 = vadd.f32 %v2051, %v2110
        %v2132 = vadd.f32 %v2052, %v2112
        %v2133 = vadd.f32 %v2053, %v2114
        %v2134 = vadd.f32 %v2054, %v2116
        %v2135 = vadd.f32 %v2055, %v2118
        %v2136 = vadd.f32 %v2056, %v2120
        %2137 = vst.msk [vmem:[#allocation7] sm:$0xff] %vm1528, %v2121
        %2138 = vst.msk [vmem:[#allocation7 + $0x8] sm:$0xff] %vm1528, %v2122
        %2139 = vst.msk [vmem:[#allocation7 + $0x10] sm:$0xff] %vm1528, %v2123
        %2140 = vst.msk [vmem:[#allocation7 + $0x18] sm:$0xff] %vm1528, %v2124
        %2141 = vst.msk [vmem:[#allocation7 + $0x20] sm:$0xff] %vm1528, %v2125
        %2142 = vst.msk [vmem:[#allocation7 + $0x28] sm:$0xff] %vm1528, %v2126
        %2143 = vst.msk [vmem:[#allocation7 + $0x30] sm:$0xff] %vm1528, %v2127
        %2144 = vst.msk [vmem:[#allocation7 + $0x38] sm:$0xff] %vm1528, %v2128
        %2145 = vst.msk [vmem:[#allocation7 + $0x40] sm:$0xff] %vm1528, %v2129
        %2146 = vst.msk [vmem:[#allocation7 + $0x48] sm:$0xff] %vm1528, %v2130
        %2147 = vst.msk [vmem:[#allocation7 + $0x50] sm:$0xff] %vm1528, %v2131
        %2148 = vst.msk [vmem:[#allocation7 + $0x58] sm:$0xff] %vm1528, %v2132
        %2149 = vst.msk [vmem:[#allocation7 + $0x60] sm:$0xff] %vm1528, %v2133
        %2150 = vst.msk [vmem:[#allocation7 + $0x68] sm:$0xff] %vm1528, %v2134
        %2151 = vst.msk [vmem:[#allocation7 + $0x70] sm:$0xff] %vm1528, %v2135
        %2152 = vst.msk [vmem:[#allocation7 + $0x78] sm:$0xff] %vm1528, %v2136
        %v2153 = vsub.f32 %v755, %v957
        %v2154 = vsub.f32 %v760, %v962
        %v2155 = vsub.f32 %v765, %v967
        %v2156 = vsub.f32 %v770, %v972
        %v2157 = vsub.f32 %v775, %v977
        %v2158 = vsub.f32 %v780, %v982
        %v2159 = vsub.f32 %v785, %v987
        %v2160 = vsub.f32 %v790, %v992
        %v2161 = vsub.f32 %v795, %v997
        %v2162 = vsub.f32 %v800, %v1002
        %v2163 = vsub.f32 %v805, %v1007
        %v2164 = vsub.f32 %v810, %v1012
        %v2165 = vsub.f32 %v815, %v1017
        %v2166 = vsub.f32 %v820, %v1022
        %v2167 = vsub.f32 %v825, %v1027
        %v2168 = vsub.f32 %v830, %v1032
        %v2169 = vsel %vm1104, 0.0, %v2153
        %v2170 = vsel %vm1105, 0.0, %v2154
        %v2171 = vsel %vm1106, 0.0, %v2155
        %v2172 = vsel %vm1107, 0.0, %v2156
        %v2173 = vsel %vm1108, 0.0, %v2157
        %v2174 = vsel %vm1109, 0.0, %v2158
        %v2175 = vsel %vm1110, 0.0, %v2159
        %v2176 = vsel %vm1111, 0.0, %v2160
        %v2177 = vsel %vm1112, 0.0, %v2161
        %v2178 = vsel %vm1113, 0.0, %v2162
        %v2179 = vsel %vm1114, 0.0, %v2163
        %v2180 = vsel %vm1115, 0.0, %v2164
        %v2181 = vsel %vm1116, 0.0, %v2165
        %v2182 = vsel %vm1117, 0.0, %v2166
        %v2183 = vsel %vm1118, 0.0, %v2167
        %v2184 = vsel %vm1119, 0.0, %v2168
        %v2185 = vld [vmem:[#allocation8] sm:$0xff]
        %v2186 = vld [vmem:[#allocation8 + $0x8] sm:$0xff]
        %v2187 = vld [vmem:[#allocation8 + $0x10] sm:$0xff]
        %v2188 = vld [vmem:[#allocation8 + $0x18] sm:$0xff]
        %v2189 = vld [vmem:[#allocation8 + $0x20] sm:$0xff]
        %v2190 = vld [vmem:[#allocation8 + $0x28] sm:$0xff]
        %v2191 = vld [vmem:[#allocation8 + $0x30] sm:$0xff]
        %v2192 = vld [vmem:[#allocation8 + $0x38] sm:$0xff]
        %v2193 = vld [vmem:[#allocation8 + $0x40] sm:$0xff]
        %v2194 = vld [vmem:[#allocation8 + $0x48] sm:$0xff]
        %v2195 = vld [vmem:[#allocation8 + $0x50] sm:$0xff]
        %v2196 = vld [vmem:[#allocation8 + $0x58] sm:$0xff]
        %v2197 = vld [vmem:[#allocation8 + $0x60] sm:$0xff]
        %v2198 = vld [vmem:[#allocation8 + $0x68] sm:$0xff]
        %v2199 = vld [vmem:[#allocation8 + $0x70] sm:$0xff]
        %v2200 = vld [vmem:[#allocation8 + $0x78] sm:$0xff]
        %2201 = vadd.xlane.f32.xlu0 %v2169
        %v2202 = vpop.xlane.xlu0 %2201
        %2203 = vadd.xlane.f32.xlu0 %v2170
        %v2204 = vpop.xlane.xlu0 %2203
        %2205 = vadd.xlane.f32.xlu0 %v2171
        %v2206 = vpop.xlane.xlu0 %2205
        %2207 = vadd.xlane.f32.xlu0 %v2172
        %v2208 = vpop.xlane.xlu0 %2207
        %2209 = vadd.xlane.f32.xlu0 %v2173
        %v2210 = vpop.xlane.xlu0 %2209
        %2211 = vadd.xlane.f32.xlu0 %v2174
        %v2212 = vpop.xlane.xlu0 %2211
        %2213 = vadd.xlane.f32.xlu0 %v2175
        %v2214 = vpop.xlane.xlu0 %2213
        %2215 = vadd.xlane.f32.xlu0 %v2176
        %v2216 = vpop.xlane.xlu0 %2215
        %2217 = vadd.xlane.f32.xlu0 %v2177
        %v2218 = vpop.xlane.xlu0 %2217
        %2219 = vadd.xlane.f32.xlu0 %v2178
        %v2220 = vpop.xlane.xlu0 %2219
        %2221 = vadd.xlane.f32.xlu0 %v2179
        %v2222 = vpop.xlane.xlu0 %2221
        %2223 = vadd.xlane.f32.xlu0 %v2180
        %v2224 = vpop.xlane.xlu0 %2223
        %2225 = vadd.xlane.f32.xlu0 %v2181
        %v2226 = vpop.xlane.xlu0 %2225
        %2227 = vadd.xlane.f32.xlu0 %v2182
        %v2228 = vpop.xlane.xlu0 %2227
        %2229 = vadd.xlane.f32.xlu0 %v2183
        %v2230 = vpop.xlane.xlu0 %2229
        %2231 = vadd.xlane.f32.xlu0 %v2184
        %v2232 = vpop.xlane.xlu0 %2231
        %v2233 = vadd.f32 %v2185, %v2202
        %v2234 = vadd.f32 %v2186, %v2204
        %v2235 = vadd.f32 %v2187, %v2206
        %v2236 = vadd.f32 %v2188, %v2208
        %v2237 = vadd.f32 %v2189, %v2210
        %v2238 = vadd.f32 %v2190, %v2212
        %v2239 = vadd.f32 %v2191, %v2214
        %v2240 = vadd.f32 %v2192, %v2216
        %v2241 = vadd.f32 %v2193, %v2218
        %v2242 = vadd.f32 %v2194, %v2220
        %v2243 = vadd.f32 %v2195, %v2222
        %v2244 = vadd.f32 %v2196, %v2224
        %v2245 = vadd.f32 %v2197, %v2226
        %v2246 = vadd.f32 %v2198, %v2228
        %v2247 = vadd.f32 %v2199, %v2230
        %v2248 = vadd.f32 %v2200, %v2232
        %2249 = vst.msk [vmem:[#allocation8] sm:$0xff] %vm1528, %v2233
        %2250 = vst.msk [vmem:[#allocation8 + $0x8] sm:$0xff] %vm1528, %v2234
        %2251 = vst.msk [vmem:[#allocation8 + $0x10] sm:$0xff] %vm1528, %v2235
        %2252 = vst.msk [vmem:[#allocation8 + $0x18] sm:$0xff] %vm1528, %v2236
        %2253 = vst.msk [vmem:[#allocation8 + $0x20] sm:$0xff] %vm1528, %v2237
        %2254 = vst.msk [vmem:[#allocation8 + $0x28] sm:$0xff] %vm1528, %v2238
        %2255 = vst.msk [vmem:[#allocation8 + $0x30] sm:$0xff] %vm1528, %v2239
        %2256 = vst.msk [vmem:[#allocation8 + $0x38] sm:$0xff] %vm1528, %v2240
        %2257 = vst.msk [vmem:[#allocation8 + $0x40] sm:$0xff] %vm1528, %v2241
        %2258 = vst.msk [vmem:[#allocation8 + $0x48] sm:$0xff] %vm1528, %v2242
        %2259 = vst.msk [vmem:[#allocation8 + $0x50] sm:$0xff] %vm1528, %v2243
        %2260 = vst.msk [vmem:[#allocation8 + $0x58] sm:$0xff] %vm1528, %v2244
        %2261 = vst.msk [vmem:[#allocation8 + $0x60] sm:$0xff] %vm1528, %v2245
        %2262 = vst.msk [vmem:[#allocation8 + $0x68] sm:$0xff] %vm1528, %v2246
        %2263 = vst.msk [vmem:[#allocation8 + $0x70] sm:$0xff] %vm1528, %v2247
        %2264 = vst.msk [vmem:[#allocation8 + $0x78] sm:$0xff] %vm1528, %v2248
        %v2265 = vld [vmem:[#allocation9] sm:$0xff]
        %v2266 = vld [vmem:[#allocation9 + $0x8] sm:$0xff]
        %v2267 = vld [vmem:[#allocation9 + $0x10] sm:$0xff]
        %v2268 = vld [vmem:[#allocation9 + $0x18] sm:$0xff]
        %v2269 = vld [vmem:[#allocation9 + $0x20] sm:$0xff]
        %v2270 = vld [vmem:[#allocation9 + $0x28] sm:$0xff]
        %v2271 = vld [vmem:[#allocation9 + $0x30] sm:$0xff]
        %v2272 = vld [vmem:[#allocation9 + $0x38] sm:$0xff]
        %v2273 = vld [vmem:[#allocation9 + $0x40] sm:$0xff]
        %v2274 = vld [vmem:[#allocation9 + $0x48] sm:$0xff]
        %v2275 = vld [vmem:[#allocation9 + $0x50] sm:$0xff]
        %v2276 = vld [vmem:[#allocation9 + $0x58] sm:$0xff]
        %v2277 = vld [vmem:[#allocation9 + $0x60] sm:$0xff]
        %v2278 = vld [vmem:[#allocation9 + $0x68] sm:$0xff]
        %v2279 = vld [vmem:[#allocation9 + $0x70] sm:$0xff]
        %v2280 = vld [vmem:[#allocation9 + $0x78] sm:$0xff]
        %v2281 = vmul.f32 %v2169, %v2153
        %v2282 = vmul.f32 %v2170, %v2154
        %v2283 = vmul.f32 %v2171, %v2155
        %v2284 = vmul.f32 %v2172, %v2156
        %v2285 = vmul.f32 %v2173, %v2157
        %v2286 = vmul.f32 %v2174, %v2158
        %v2287 = vmul.f32 %v2175, %v2159
        %v2288 = vmul.f32 %v2176, %v2160
        %v2289 = vmul.f32 %v2177, %v2161
        %v2290 = vmul.f32 %v2178, %v2162
        %v2291 = vmul.f32 %v2179, %v2163
        %v2292 = vmul.f32 %v2180, %v2164
        %v2293 = vmul.f32 %v2181, %v2165
        %v2294 = vmul.f32 %v2182, %v2166
        %v2295 = vmul.f32 %v2183, %v2167
        %v2296 = vmul.f32 %v2184, %v2168
        %2297 = vadd.xlane.f32.xlu0 %v2281
        %v2298 = vpop.xlane.xlu0 %2297
        %2299 = vadd.xlane.f32.xlu0 %v2282
        %v2300 = vpop.xlane.xlu0 %2299
        %2301 = vadd.xlane.f32.xlu0 %v2283
        %v2302 = vpop.xlane.xlu0 %2301
        %2303 = vadd.xlane.f32.xlu0 %v2284
        %v2304 = vpop.xlane.xlu0 %2303
        %2305 = vadd.xlane.f32.xlu0 %v2285
        %v2306 = vpop.xlane.xlu0 %2305
        %2307 = vadd.xlane.f32.xlu0 %v2286
        %v2308 = vpop.xlane.xlu0 %2307
        %2309 = vadd.xlane.f32.xlu0 %v2287
        %v2310 = vpop.xlane.xlu0 %2309
        %2311 = vadd.xlane.f32.xlu0 %v2288
        %v2312 = vpop.xlane.xlu0 %2311
        %2313 = vadd.xlane.f32.xlu0 %v2289
        %v2314 = vpop.xlane.xlu0 %2313
        %2315 = vadd.xlane.f32.xlu0 %v2290
        %v2316 = vpop.xlane.xlu0 %2315
        %2317 = vadd.xlane.f32.xlu0 %v2291
        %v2318 = vpop.xlane.xlu0 %2317
        %2319 = vadd.xlane.f32.xlu0 %v2292
        %v2320 = vpop.xlane.xlu0 %2319
        %2321 = vadd.xlane.f32.xlu0 %v2293
        %v2322 = vpop.xlane.xlu0 %2321
        %2323 = vadd.xlane.f32.xlu0 %v2294
        %v2324 = vpop.xlane.xlu0 %2323
        %2325 = vadd.xlane.f32.xlu0 %v2295
        %v2326 = vpop.xlane.xlu0 %2325
        %2327 = vadd.xlane.f32.xlu0 %v2296
        %v2328 = vpop.xlane.xlu0 %2327
        %v2329 = vadd.f32 %v2265, %v2298
        %v2330 = vadd.f32 %v2266, %v2300
        %v2331 = vadd.f32 %v2267, %v2302
        %v2332 = vadd.f32 %v2268, %v2304
        %v2333 = vadd.f32 %v2269, %v2306
        %v2334 = vadd.f32 %v2270, %v2308
        %v2335 = vadd.f32 %v2271, %v2310
        %v2336 = vadd.f32 %v2272, %v2312
        %v2337 = vadd.f32 %v2273, %v2314
        %v2338 = vadd.f32 %v2274, %v2316
        %v2339 = vadd.f32 %v2275, %v2318
        %v2340 = vadd.f32 %v2276, %v2320
        %v2341 = vadd.f32 %v2277, %v2322
        %v2342 = vadd.f32 %v2278, %v2324
        %v2343 = vadd.f32 %v2279, %v2326
        %v2344 = vadd.f32 %v2280, %v2328
        %2345 = vst.msk [vmem:[#allocation9] sm:$0xff] %vm1528, %v2329
        %2346 = vst.msk [vmem:[#allocation9 + $0x8] sm:$0xff] %vm1528, %v2330
        %2347 = vst.msk [vmem:[#allocation9 + $0x10] sm:$0xff] %vm1528, %v2331
        %2348 = vst.msk [vmem:[#allocation9 + $0x18] sm:$0xff] %vm1528, %v2332
        %2349 = vst.msk [vmem:[#allocation9 + $0x20] sm:$0xff] %vm1528, %v2333
        %2350 = vst.msk [vmem:[#allocation9 + $0x28] sm:$0xff] %vm1528, %v2334
        %2351 = vst.msk [vmem:[#allocation9 + $0x30] sm:$0xff] %vm1528, %v2335
        %2352 = vst.msk [vmem:[#allocation9 + $0x38] sm:$0xff] %vm1528, %v2336
        %2353 = vst.msk [vmem:[#allocation9 + $0x40] sm:$0xff] %vm1528, %v2337
        %2354 = vst.msk [vmem:[#allocation9 + $0x48] sm:$0xff] %vm1528, %v2338
        %2355 = vst.msk [vmem:[#allocation9 + $0x50] sm:$0xff] %vm1528, %v2339
        %2356 = vst.msk [vmem:[#allocation9 + $0x58] sm:$0xff] %vm1528, %v2340
        %2357 = vst.msk [vmem:[#allocation9 + $0x60] sm:$0xff] %vm1528, %v2341
        %2358 = vst.msk [vmem:[#allocation9 + $0x68] sm:$0xff] %vm1528, %v2342
        %2359 = vst.msk [vmem:[#allocation9 + $0x70] sm:$0xff] %vm1528, %v2343
        %2360 = vst.msk [vmem:[#allocation9 + $0x78] sm:$0xff] %vm1528, %v2344
        %p2361 = scmp.eq.s32.totalorder %s28, 1
        // Predicated region
        $region91: #{tpu_custom_call.1} parent=77 // pred_check
          %p2362 = pneg %p2361
        $region92: #{tpu_custom_call.1} parent=77 // pred_check_branch
          %2364 = sbr.rel (%p2362) target = $region94
        $region93: #{tpu_custom_call.1} parent=77 // pred_region
          %v2365 = vld [vmem:[#allocation2] sm:$0xff]
          %v2366 = vld [vmem:[#allocation2 + $0x8] sm:$0xff]
          %v2367 = vld [vmem:[#allocation2 + $0x10] sm:$0xff]
          %v2368 = vld [vmem:[#allocation2 + $0x18] sm:$0xff]
          %v2369 = vld [vmem:[#allocation2 + $0x20] sm:$0xff]
          %v2370 = vld [vmem:[#allocation2 + $0x28] sm:$0xff]
          %v2371 = vld [vmem:[#allocation2 + $0x30] sm:$0xff]
          %v2372 = vld [vmem:[#allocation2 + $0x38] sm:$0xff]
          %v2373 = vld [vmem:[#allocation2 + $0x40] sm:$0xff]
          %v2374 = vld [vmem:[#allocation2 + $0x48] sm:$0xff]
          %v2375 = vld [vmem:[#allocation2 + $0x50] sm:$0xff]
          %v2376 = vld [vmem:[#allocation2 + $0x58] sm:$0xff]
          %v2377 = vld [vmem:[#allocation2 + $0x60] sm:$0xff]
          %v2378 = vld [vmem:[#allocation2 + $0x68] sm:$0xff]
          %v2379 = vld [vmem:[#allocation2 + $0x70] sm:$0xff]
          %v2380 = vld [vmem:[#allocation2 + $0x78] sm:$0xff]
          %v2381 = vld [vmem:[#allocation3] sm:$0xff]
          %v2382 = vld [vmem:[#allocation3 + $0x8] sm:$0xff]
          %v2383 = vld [vmem:[#allocation3 + $0x10] sm:$0xff]
          %v2384 = vld [vmem:[#allocation3 + $0x18] sm:$0xff]
          %v2385 = vld [vmem:[#allocation3 + $0x20] sm:$0xff]
          %v2386 = vld [vmem:[#allocation3 + $0x28] sm:$0xff]
          %v2387 = vld [vmem:[#allocation3 + $0x30] sm:$0xff]
          %v2388 = vld [vmem:[#allocation3 + $0x38] sm:$0xff]
          %v2389 = vld [vmem:[#allocation3 + $0x40] sm:$0xff]
          %v2390 = vld [vmem:[#allocation3 + $0x48] sm:$0xff]
          %v2391 = vld [vmem:[#allocation3 + $0x50] sm:$0xff]
          %v2392 = vld [vmem:[#allocation3 + $0x58] sm:$0xff]
          %v2393 = vld [vmem:[#allocation3 + $0x60] sm:$0xff]
          %v2394 = vld [vmem:[#allocation3 + $0x68] sm:$0xff]
          %v2395 = vld [vmem:[#allocation3 + $0x70] sm:$0xff]
          %v2396 = vld [vmem:[#allocation3 + $0x78] sm:$0xff]
          %v2397 = vlog2.pop %v2381
          %v2398 = vmul.f32 %v2397, 0.6931472
          %v2399 = vlog2.pop %v2382
          %v2400 = vmul.f32 %v2399, 0.6931472
          %v2401 = vlog2.pop %v2383
          %v2402 = vmul.f32 %v2401, 0.6931472
          %v2403 = vlog2.pop %v2384
          %v2404 = vmul.f32 %v2403, 0.6931472
          %v2405 = vlog2.pop %v2385
          %v2406 = vmul.f32 %v2405, 0.6931472
          %v2407 = vlog2.pop %v2386
          %v2408 = vmul.f32 %v2407, 0.6931472
          %v2409 = vlog2.pop %v2387
          %v2410 = vmul.f32 %v2409, 0.6931472
          %v2411 = vlog2.pop %v2388
          %v2412 = vmul.f32 %v2411, 0.6931472
          %v2413 = vlog2.pop %v2389
          %v2414 = vmul.f32 %v2413, 0.6931472
          %v2415 = vlog2.pop %v2390
          %v2416 = vmul.f32 %v2415, 0.6931472
          %v2417 = vlog2.pop %v2391
          %v2418 = vmul.f32 %v2417, 0.6931472
          %v2419 = vlog2.pop %v2392
          %v2420 = vmul.f32 %v2419, 0.6931472
          %v2421 = vlog2.pop %v2393
          %v2422 = vmul.f32 %v2421, 0.6931472
          %v2423 = vlog2.pop %v2394
          %v2424 = vmul.f32 %v2423, 0.6931472
          %v2425 = vlog2.pop %v2395
          %v2426 = vmul.f32 %v2425, 0.6931472
          %v2427 = vlog2.pop %v2396
          %v2428 = vmul.f32 %v2427, 0.6931472
          %v2429 = vadd.f32 %v2365, %v2398
          %v2430 = vadd.f32 %v2366, %v2400
          %v2431 = vadd.f32 %v2367, %v2402
          %v2432 = vadd.f32 %v2368, %v2404
          %v2433 = vadd.f32 %v2369, %v2406
          %v2434 = vadd.f32 %v2370, %v2408
          %v2435 = vadd.f32 %v2371, %v2410
          %v2436 = vadd.f32 %v2372, %v2412
          %v2437 = vadd.f32 %v2373, %v2414
          %v2438 = vadd.f32 %v2374, %v2416
          %v2439 = vadd.f32 %v2375, %v2418
          %v2440 = vadd.f32 %v2376, %v2420
          %v2441 = vadd.f32 %v2377, %v2422
          %v2442 = vadd.f32 %v2378, %v2424
          %v2443 = vadd.f32 %v2379, %v2426
          %v2444 = vadd.f32 %v2380, %v2428
          %v2445 = vld [vmem:[#allocation4] sm:$0xff]
          %v2446 = vld [vmem:[#allocation4 + $0x8] sm:$0xff]
          %v2447 = vld [vmem:[#allocation4 + $0x10] sm:$0xff]
          %v2448 = vld [vmem:[#allocation4 + $0x18] sm:$0xff]
          %v2449 = vld [vmem:[#allocation4 + $0x20] sm:$0xff]
          %v2450 = vld [vmem:[#allocation4 + $0x28] sm:$0xff]
          %v2451 = vld [vmem:[#allocation4 + $0x30] sm:$0xff]
          %v2452 = vld [vmem:[#allocation4 + $0x38] sm:$0xff]
          %v2453 = vld [vmem:[#allocation4 + $0x40] sm:$0xff]
          %v2454 = vld [vmem:[#allocation4 + $0x48] sm:$0xff]
          %v2455 = vld [vmem:[#allocation4 + $0x50] sm:$0xff]
          %v2456 = vld [vmem:[#allocation4 + $0x58] sm:$0xff]
          %v2457 = vld [vmem:[#allocation4 + $0x60] sm:$0xff]
          %v2458 = vld [vmem:[#allocation4 + $0x68] sm:$0xff]
          %v2459 = vld [vmem:[#allocation4 + $0x70] sm:$0xff]
          %v2460 = vld [vmem:[#allocation4 + $0x78] sm:$0xff]
          %v2461 = vld [vmem:[#allocation5] sm:$0xff]
          %v2462 = vld [vmem:[#allocation5 + $0x8] sm:$0xff]
          %v2463 = vld [vmem:[#allocation5 + $0x10] sm:$0xff]
          %v2464 = vld [vmem:[#allocation5 + $0x18] sm:$0xff]
          %v2465 = vld [vmem:[#allocation5 + $0x20] sm:$0xff]
          %v2466 = vld [vmem:[#allocation5 + $0x28] sm:$0xff]
          %v2467 = vld [vmem:[#allocation5 + $0x30] sm:$0xff]
          %v2468 = vld [vmem:[#allocation5 + $0x38] sm:$0xff]
          %v2469 = vld [vmem:[#allocation5 + $0x40] sm:$0xff]
          %v2470 = vld [vmem:[#allocation5 + $0x48] sm:$0xff]
          %v2471 = vld [vmem:[#allocation5 + $0x50] sm:$0xff]
          %v2472 = vld [vmem:[#allocation5 + $0x58] sm:$0xff]
          %v2473 = vld [vmem:[#allocation5 + $0x60] sm:$0xff]
          %v2474 = vld [vmem:[#allocation5 + $0x68] sm:$0xff]
          %v2475 = vld [vmem:[#allocation5 + $0x70] sm:$0xff]
          %v2476 = vld [vmem:[#allocation5 + $0x78] sm:$0xff]
          %v2477 = vlog2.pop %v2461
          %v2478 = vmul.f32 %v2477, 0.6931472
          %v2479 = vlog2.pop %v2462
          %v2480 = vmul.f32 %v2479, 0.6931472
          %v2481 = vlog2.pop %v2463
          %v2482 = vmul.f32 %v2481, 0.6931472
          %v2483 = vlog2.pop %v2464
          %v2484 = vmul.f32 %v2483, 0.6931472
          %v2485 = vlog2.pop %v2465
          %v2486 = vmul.f32 %v2485, 0.6931472
          %v2487 = vlog2.pop %v2466
          %v2488 = vmul.f32 %v2487, 0.6931472
          %v2489 = vlog2.pop %v2467
          %v2490 = vmul.f32 %v2489, 0.6931472
          %v2491 = vlog2.pop %v2468
          %v2492 = vmul.f32 %v2491, 0.6931472
          %v2493 = vlog2.pop %v2469
          %v2494 = vmul.f32 %v2493, 0.6931472
          %v2495 = vlog2.pop %v2470
          %v2496 = vmul.f32 %v2495, 0.6931472
          %v2497 = vlog2.pop %v2471
          %v2498 = vmul.f32 %v2497, 0.6931472
          %v2499 = vlog2.pop %v2472
          %v2500 = vmul.f32 %v2499, 0.6931472
          %v2501 = vlog2.pop %v2473
          %v2502 = vmul.f32 %v2501, 0.6931472
          %v2503 = vlog2.pop %v2474
          %v2504 = vmul.f32 %v2503, 0.6931472
          %v2505 = vlog2.pop %v2475
          %v2506 = vmul.f32 %v2505, 0.6931472
          %v2507 = vlog2.pop %v2476
          %v2508 = vmul.f32 %v2507, 0.6931472
          %v2509 = vadd.f32 %v2445, %v2478
          %v2510 = vadd.f32 %v2446, %v2480
          %v2511 = vadd.f32 %v2447, %v2482
          %v2512 = vadd.f32 %v2448, %v2484
          %v2513 = vadd.f32 %v2449, %v2486
          %v2514 = vadd.f32 %v2450, %v2488
          %v2515 = vadd.f32 %v2451, %v2490
          %v2516 = vadd.f32 %v2452, %v2492
          %v2517 = vadd.f32 %v2453, %v2494
          %v2518 = vadd.f32 %v2454, %v2496
          %v2519 = vadd.f32 %v2455, %v2498
          %v2520 = vadd.f32 %v2456, %v2500
          %v2521 = vadd.f32 %v2457, %v2502
          %v2522 = vadd.f32 %v2458, %v2504
          %v2523 = vadd.f32 %v2459, %v2506
          %v2524 = vadd.f32 %v2460, %v2508
          %v2525 = vld [vmem:[#allocation7] sm:$0xff]
          %v2526 = vld [vmem:[#allocation7 + $0x8] sm:$0xff]
          %v2527 = vld [vmem:[#allocation7 + $0x10] sm:$0xff]
          %v2528 = vld [vmem:[#allocation7 + $0x18] sm:$0xff]
          %v2529 = vld [vmem:[#allocation7 + $0x20] sm:$0xff]
          %v2530 = vld [vmem:[#allocation7 + $0x28] sm:$0xff]
          %v2531 = vld [vmem:[#allocation7 + $0x30] sm:$0xff]
          %v2532 = vld [vmem:[#allocation7 + $0x38] sm:$0xff]
          %v2533 = vld [vmem:[#allocation7 + $0x40] sm:$0xff]
          %v2534 = vld [vmem:[#allocation7 + $0x48] sm:$0xff]
          %v2535 = vld [vmem:[#allocation7 + $0x50] sm:$0xff]
          %v2536 = vld [vmem:[#allocation7 + $0x58] sm:$0xff]
          %v2537 = vld [vmem:[#allocation7 + $0x60] sm:$0xff]
          %v2538 = vld [vmem:[#allocation7 + $0x68] sm:$0xff]
          %v2539 = vld [vmem:[#allocation7 + $0x70] sm:$0xff]
          %v2540 = vld [vmem:[#allocation7 + $0x78] sm:$0xff]
          %vm2541 = vcmp.eq.f32.partialorder %v2525, 0.0
          %vm2542 = vcmp.eq.f32.partialorder %v2526, 0.0
          %vm2543 = vcmp.eq.f32.partialorder %v2527, 0.0
          %vm2544 = vcmp.eq.f32.partialorder %v2528, 0.0
          %vm2545 = vcmp.eq.f32.partialorder %v2529, 0.0
          %vm2546 = vcmp.eq.f32.partialorder %v2530, 0.0
          %vm2547 = vcmp.eq.f32.partialorder %v2531, 0.0
          %vm2548 = vcmp.eq.f32.partialorder %v2532, 0.0
          %vm2549 = vcmp.eq.f32.partialorder %v2533, 0.0
          %vm2550 = vcmp.eq.f32.partialorder %v2534, 0.0
          %vm2551 = vcmp.eq.f32.partialorder %v2535, 0.0
          %vm2552 = vcmp.eq.f32.partialorder %v2536, 0.0
          %vm2553 = vcmp.eq.f32.partialorder %v2537, 0.0
          %vm2554 = vcmp.eq.f32.partialorder %v2538, 0.0
          %vm2555 = vcmp.eq.f32.partialorder %v2539, 0.0
          %vm2556 = vcmp.eq.f32.partialorder %v2540, 0.0
          %v2557 = vsel %vm2541, 1, 0
          %v2558 = vsel %vm2542, 1, 0
          %v2559 = vsel %vm2543, 1, 0
          %v2560 = vsel %vm2544, 1, 0
          %v2561 = vsel %vm2545, 1, 0
          %v2562 = vsel %vm2546, 1, 0
          %v2563 = vsel %vm2547, 1, 0
          %v2564 = vsel %vm2548, 1, 0
          %v2565 = vsel %vm2549, 1, 0
          %v2566 = vsel %vm2550, 1, 0
          %v2567 = vsel %vm2551, 1, 0
          %v2568 = vsel %vm2552, 1, 0
          %v2569 = vsel %vm2553, 1, 0
          %v2570 = vsel %vm2554, 1, 0
          %v2571 = vsel %vm2555, 1, 0
          %v2572 = vsel %vm2556, 1, 0
          %v2573 = vcvt.s32.f32 %v2557
          %v2574 = vcvt.s32.f32 %v2558
          %v2575 = vcvt.s32.f32 %v2559
          %v2576 = vcvt.s32.f32 %v2560
          %v2577 = vcvt.s32.f32 %v2561
          %v2578 = vcvt.s32.f32 %v2562
          %v2579 = vcvt.s32.f32 %v2563
          %v2580 = vcvt.s32.f32 %v2564
          %v2581 = vcvt.s32.f32 %v2565
          %v2582 = vcvt.s32.f32 %v2566
          %v2583 = vcvt.s32.f32 %v2567
          %v2584 = vcvt.s32.f32 %v2568
          %v2585 = vcvt.s32.f32 %v2569
          %v2586 = vcvt.s32.f32 %v2570
          %v2587 = vcvt.s32.f32 %v2571
          %v2588 = vcvt.s32.f32 %v2572
          %v2589 = vadd.f32 %v2525, %v2573
          %v2590 = vadd.f32 %v2526, %v2574
          %v2591 = vadd.f32 %v2527, %v2575
          %v2592 = vadd.f32 %v2528, %v2576
          %v2593 = vadd.f32 %v2529, %v2577
          %v2594 = vadd.f32 %v2530, %v2578
          %v2595 = vadd.f32 %v2531, %v2579
          %v2596 = vadd.f32 %v2532, %v2580
          %v2597 = vadd.f32 %v2533, %v2581
          %v2598 = vadd.f32 %v2534, %v2582
          %v2599 = vadd.f32 %v2535, %v2583
          %v2600 = vadd.f32 %v2536, %v2584
          %v2601 = vadd.f32 %v2537, %v2585
          %v2602 = vadd.f32 %v2538, %v2586
          %v2603 = vadd.f32 %v2539, %v2587
          %v2604 = vadd.f32 %v2540, %v2588
          %v2605 = vrcp.pop %v2589
          %v2606 = vrcp.pop %v2590
          %v2607 = vrcp.pop %v2591
          %v2608 = vrcp.pop %v2592
          %v2609 = vrcp.pop %v2593
          %v2610 = vrcp.pop %v2594
          %v2611 = vrcp.pop %v2595
          %v2612 = vrcp.pop %v2596
          %v2613 = vrcp.pop %v2597
          %v2614 = vrcp.pop %v2598
          %v2615 = vrcp.pop %v2599
          %v2616 = vrcp.pop %v2600
          %v2617 = vrcp.pop %v2601
          %v2618 = vrcp.pop %v2602
          %v2619 = vrcp.pop %v2603
          %v2620 = vrcp.pop %v2604
          %v2621 = vmul.f32 %v2589, %v2605
          %v2622 = vmul.f32 %v2590, %v2606
          %v2623 = vmul.f32 %v2591, %v2607
          %v2624 = vmul.f32 %v2592, %v2608
          %v2625 = vmul.f32 %v2593, %v2609
          %v2626 = vmul.f32 %v2594, %v2610
          %v2627 = vmul.f32 %v2595, %v2611
          %v2628 = vmul.f32 %v2596, %v2612
          %v2629 = vmul.f32 %v2597, %v2613
          %v2630 = vmul.f32 %v2598, %v2614
          %v2631 = vmul.f32 %v2599, %v2615
          %v2632 = vmul.f32 %v2600, %v2616
          %v2633 = vmul.f32 %v2601, %v2617
          %v2634 = vmul.f32 %v2602, %v2618
          %v2635 = vmul.f32 %v2603, %v2619
          %v2636 = vmul.f32 %v2604, %v2620
          %v2637 = vsub.f32 2.0, %v2621
          %v2638 = vsub.f32 2.0, %v2622
          %v2639 = vsub.f32 2.0, %v2623
          %v2640 = vsub.f32 2.0, %v2624
          %v2641 = vsub.f32 2.0, %v2625
          %v2642 = vsub.f32 2.0, %v2626
          %v2643 = vsub.f32 2.0, %v2627
          %v2644 = vsub.f32 2.0, %v2628
          %v2645 = vsub.f32 2.0, %v2629
          %v2646 = vsub.f32 2.0, %v2630
          %v2647 = vsub.f32 2.0, %v2631
          %v2648 = vsub.f32 2.0, %v2632
          %v2649 = vsub.f32 2.0, %v2633
          %v2650 = vsub.f32 2.0, %v2634
          %v2651 = vsub.f32 2.0, %v2635
          %v2652 = vsub.f32 2.0, %v2636
          %v2653 = vmul.f32 %v2605, %v2637
          %v2654 = vmul.f32 %v2606, %v2638
          %v2655 = vmul.f32 %v2607, %v2639
          %v2656 = vmul.f32 %v2608, %v2640
          %v2657 = vmul.f32 %v2609, %v2641
          %v2658 = vmul.f32 %v2610, %v2642
          %v2659 = vmul.f32 %v2611, %v2643
          %v2660 = vmul.f32 %v2612, %v2644
          %v2661 = vmul.f32 %v2613, %v2645
          %v2662 = vmul.f32 %v2614, %v2646
          %v2663 = vmul.f32 %v2615, %v2647
          %v2664 = vmul.f32 %v2616, %v2648
          %v2665 = vmul.f32 %v2617, %v2649
          %v2666 = vmul.f32 %v2618, %v2650
          %v2667 = vmul.f32 %v2619, %v2651
          %v2668 = vmul.f32 %v2620, %v2652
          %v2669 = vmul.f32 %v2589, %v2653
          %v2670 = vmul.f32 %v2590, %v2654
          %v2671 = vmul.f32 %v2591, %v2655
          %v2672 = vmul.f32 %v2592, %v2656
          %v2673 = vmul.f32 %v2593, %v2657
          %v2674 = vmul.f32 %v2594, %v2658
          %v2675 = vmul.f32 %v2595, %v2659
          %v2676 = vmul.f32 %v2596, %v2660
          %v2677 = vmul.f32 %v2597, %v2661
          %v2678 = vmul.f32 %v2598, %v2662
          %v2679 = vmul.f32 %v2599, %v2663
          %v2680 = vmul.f32 %v2600, %v2664
          %v2681 = vmul.f32 %v2601, %v2665
          %v2682 = vmul.f32 %v2602, %v2666
          %v2683 = vmul.f32 %v2603, %v2667
          %v2684 = vmul.f32 %v2604, %v2668
          %v2685 = vsub.f32 2.0, %v2669
          %v2686 = vsub.f32 2.0, %v2670
          %v2687 = vsub.f32 2.0, %v2671
          %v2688 = vsub.f32 2.0, %v2672
          %v2689 = vsub.f32 2.0, %v2673
          %v2690 = vsub.f32 2.0, %v2674
          %v2691 = vsub.f32 2.0, %v2675
          %v2692 = vsub.f32 2.0, %v2676
          %v2693 = vsub.f32 2.0, %v2677
          %v2694 = vsub.f32 2.0, %v2678
          %v2695 = vsub.f32 2.0, %v2679
          %v2696 = vsub.f32 2.0, %v2680
          %v2697 = vsub.f32 2.0, %v2681
          %v2698 = vsub.f32 2.0, %v2682
          %v2699 = vsub.f32 2.0, %v2683
          %v2700 = vsub.f32 2.0, %v2684
          %v2701 = vmul.f32 %v2653, %v2685
          %v2702 = vmul.f32 %v2654, %v2686
          %v2703 = vmul.f32 %v2655, %v2687
          %v2704 = vmul.f32 %v2656, %v2688
          %v2705 = vmul.f32 %v2657, %v2689
          %v2706 = vmul.f32 %v2658, %v2690
          %v2707 = vmul.f32 %v2659, %v2691
          %v2708 = vmul.f32 %v2660, %v2692
          %v2709 = vmul.f32 %v2661, %v2693
          %v2710 = vmul.f32 %v2662, %v2694
          %v2711 = vmul.f32 %v2663, %v2695
          %v2712 = vmul.f32 %v2664, %v2696
          %v2713 = vmul.f32 %v2665, %v2697
          %v2714 = vmul.f32 %v2666, %v2698
          %v2715 = vmul.f32 %v2667, %v2699
          %v2716 = vmul.f32 %v2668, %v2700
          %v2717 = vld [vmem:[#allocation6] sm:$0xff]
          %v2718 = vld [vmem:[#allocation6 + $0x8] sm:$0xff]
          %v2719 = vld [vmem:[#allocation6 + $0x10] sm:$0xff]
          %v2720 = vld [vmem:[#allocation6 + $0x18] sm:$0xff]
          %v2721 = vld [vmem:[#allocation6 + $0x20] sm:$0xff]
          %v2722 = vld [vmem:[#allocation6 + $0x28] sm:$0xff]
          %v2723 = vld [vmem:[#allocation6 + $0x30] sm:$0xff]
          %v2724 = vld [vmem:[#allocation6 + $0x38] sm:$0xff]
          %v2725 = vld [vmem:[#allocation6 + $0x40] sm:$0xff]
          %v2726 = vld [vmem:[#allocation6 + $0x48] sm:$0xff]
          %v2727 = vld [vmem:[#allocation6 + $0x50] sm:$0xff]
          %v2728 = vld [vmem:[#allocation6 + $0x58] sm:$0xff]
          %v2729 = vld [vmem:[#allocation6 + $0x60] sm:$0xff]
          %v2730 = vld [vmem:[#allocation6 + $0x68] sm:$0xff]
          %v2731 = vld [vmem:[#allocation6 + $0x70] sm:$0xff]
          %v2732 = vld [vmem:[#allocation6 + $0x78] sm:$0xff]
          %v2733 = vmul.f32 %v2525, %v2429
          %v2734 = vmul.f32 %v2526, %v2430
          %v2735 = vmul.f32 %v2527, %v2431
          %v2736 = vmul.f32 %v2528, %v2432
          %v2737 = vmul.f32 %v2529, %v2433
          %v2738 = vmul.f32 %v2530, %v2434
          %v2739 = vmul.f32 %v2531, %v2435
          %v2740 = vmul.f32 %v2532, %v2436
          %v2741 = vmul.f32 %v2533, %v2437
          %v2742 = vmul.f32 %v2534, %v2438
          %v2743 = vmul.f32 %v2535, %v2439
          %v2744 = vmul.f32 %v2536, %v2440
          %v2745 = vmul.f32 %v2537, %v2441
          %v2746 = vmul.f32 %v2538, %v2442
          %v2747 = vmul.f32 %v2539, %v2443
          %v2748 = vmul.f32 %v2540, %v2444
          %v2749 = vsub.f32 %v2717, %v2733
          %v2750 = vsub.f32 %v2718, %v2734
          %v2751 = vsub.f32 %v2719, %v2735
          %v2752 = vsub.f32 %v2720, %v2736
          %v2753 = vsub.f32 %v2721, %v2737
          %v2754 = vsub.f32 %v2722, %v2738
          %v2755 = vsub.f32 %v2723, %v2739
          %v2756 = vsub.f32 %v2724, %v2740
          %v2757 = vsub.f32 %v2725, %v2741
          %v2758 = vsub.f32 %v2726, %v2742
          %v2759 = vsub.f32 %v2727, %v2743
          %v2760 = vsub.f32 %v2728, %v2744
          %v2761 = vsub.f32 %v2729, %v2745
          %v2762 = vsub.f32 %v2730, %v2746
          %v2763 = vsub.f32 %v2731, %v2747
          %v2764 = vsub.f32 %v2732, %v2748
          %v2765 = vmul.f32 %v2749, %v2701
          %v2766 = vmul.f32 %v2750, %v2702
          %v2767 = vmul.f32 %v2751, %v2703
          %v2768 = vmul.f32 %v2752, %v2704
          %v2769 = vmul.f32 %v2753, %v2705
          %v2770 = vmul.f32 %v2754, %v2706
          %v2771 = vmul.f32 %v2755, %v2707
          %v2772 = vmul.f32 %v2756, %v2708
          %v2773 = vmul.f32 %v2757, %v2709
          %v2774 = vmul.f32 %v2758, %v2710
          %v2775 = vmul.f32 %v2759, %v2711
          %v2776 = vmul.f32 %v2760, %v2712
          %v2777 = vmul.f32 %v2761, %v2713
          %v2778 = vmul.f32 %v2762, %v2714
          %v2779 = vmul.f32 %v2763, %v2715
          %v2780 = vmul.f32 %v2764, %v2716
          %v2781 = vsub.f32 0.0, %v2765
          %v2782 = vsub.f32 0.0, %v2766
          %v2783 = vsub.f32 0.0, %v2767
          %v2784 = vsub.f32 0.0, %v2768
          %v2785 = vsub.f32 0.0, %v2769
          %v2786 = vsub.f32 0.0, %v2770
          %v2787 = vsub.f32 0.0, %v2771
          %v2788 = vsub.f32 0.0, %v2772
          %v2789 = vsub.f32 0.0, %v2773
          %v2790 = vsub.f32 0.0, %v2774
          %v2791 = vsub.f32 0.0, %v2775
          %v2792 = vsub.f32 0.0, %v2776
          %v2793 = vsub.f32 0.0, %v2777
          %v2794 = vsub.f32 0.0, %v2778
          %v2795 = vsub.f32 0.0, %v2779
          %v2796 = vsub.f32 0.0, %v2780
          %v2797 = vsub.f32 1.0, %v2573
          %v2798 = vsub.f32 1.0, %v2574
          %v2799 = vsub.f32 1.0, %v2575
          %v2800 = vsub.f32 1.0, %v2576
          %v2801 = vsub.f32 1.0, %v2577
          %v2802 = vsub.f32 1.0, %v2578
          %v2803 = vsub.f32 1.0, %v2579
          %v2804 = vsub.f32 1.0, %v2580
          %v2805 = vsub.f32 1.0, %v2581
          %v2806 = vsub.f32 1.0, %v2582
          %v2807 = vsub.f32 1.0, %v2583
          %v2808 = vsub.f32 1.0, %v2584
          %v2809 = vsub.f32 1.0, %v2585
          %v2810 = vsub.f32 1.0, %v2586
          %v2811 = vsub.f32 1.0, %v2587
          %v2812 = vsub.f32 1.0, %v2588
          %v2813 = vmul.f32 %v2781, %v2797
          %v2814 = vmul.f32 %v2782, %v2798
          %v2815 = vmul.f32 %v2783, %v2799
          %v2816 = vmul.f32 %v2784, %v2800
          %v2817 = vmul.f32 %v2785, %v2801
          %v2818 = vmul.f32 %v2786, %v2802
          %v2819 = vmul.f32 %v2787, %v2803
          %v2820 = vmul.f32 %v2788, %v2804
          %v2821 = vmul.f32 %v2789, %v2805
          %v2822 = vmul.f32 %v2790, %v2806
          %v2823 = vmul.f32 %v2791, %v2807
          %v2824 = vmul.f32 %v2792, %v2808
          %v2825 = vmul.f32 %v2793, %v2809
          %v2826 = vmul.f32 %v2794, %v2810
          %v2827 = vmul.f32 %v2795, %v2811
          %v2828 = vmul.f32 %v2796, %v2812
          %v2829 = vsub.f32 255.0, %v2525
          %v2830 = vsub.f32 255.0, %v2526
          %v2831 = vsub.f32 255.0, %v2527
          %v2832 = vsub.f32 255.0, %v2528
          %v2833 = vsub.f32 255.0, %v2529
          %v2834 = vsub.f32 255.0, %v2530
          %v2835 = vsub.f32 255.0, %v2531
          %v2836 = vsub.f32 255.0, %v2532
          %v2837 = vsub.f32 255.0, %v2533
          %v2838 = vsub.f32 255.0, %v2534
          %v2839 = vsub.f32 255.0, %v2535
          %v2840 = vsub.f32 255.0, %v2536
          %v2841 = vsub.f32 255.0, %v2537
          %v2842 = vsub.f32 255.0, %v2538
          %v2843 = vsub.f32 255.0, %v2539
          %v2844 = vsub.f32 255.0, %v2540
          %v2845 = vsub.f32 %v2429, %v2509
          %v2846 = vsub.f32 %v2430, %v2510
          %v2847 = vsub.f32 %v2431, %v2511
          %v2848 = vsub.f32 %v2432, %v2512
          %v2849 = vsub.f32 %v2433, %v2513
          %v2850 = vsub.f32 %v2434, %v2514
          %v2851 = vsub.f32 %v2435, %v2515
          %v2852 = vsub.f32 %v2436, %v2516
          %v2853 = vsub.f32 %v2437, %v2517
          %v2854 = vsub.f32 %v2438, %v2518
          %v2855 = vsub.f32 %v2439, %v2519
          %v2856 = vsub.f32 %v2440, %v2520
          %v2857 = vsub.f32 %v2441, %v2521
          %v2858 = vsub.f32 %v2442, %v2522
          %v2859 = vsub.f32 %v2443, %v2523
          %v2860 = vsub.f32 %v2444, %v2524
          %v2861 = vld [vmem:[#allocation9] sm:$0xff]
          %v2862 = vld [vmem:[#allocation9 + $0x8] sm:$0xff]
          %v2863 = vld [vmem:[#allocation9 + $0x10] sm:$0xff]
          %v2864 = vld [vmem:[#allocation9 + $0x18] sm:$0xff]
          %v2865 = vld [vmem:[#allocation9 + $0x20] sm:$0xff]
          %v2866 = vld [vmem:[#allocation9 + $0x28] sm:$0xff]
          %v2867 = vld [vmem:[#allocation9 + $0x30] sm:$0xff]
          %v2868 = vld [vmem:[#allocation9 + $0x38] sm:$0xff]
          %v2869 = vld [vmem:[#allocation9 + $0x40] sm:$0xff]
          %v2870 = vld [vmem:[#allocation9 + $0x48] sm:$0xff]
          %v2871 = vld [vmem:[#allocation9 + $0x50] sm:$0xff]
          %v2872 = vld [vmem:[#allocation9 + $0x58] sm:$0xff]
          %v2873 = vld [vmem:[#allocation9 + $0x60] sm:$0xff]
          %v2874 = vld [vmem:[#allocation9 + $0x68] sm:$0xff]
          %v2875 = vld [vmem:[#allocation9 + $0x70] sm:$0xff]
          %v2876 = vld [vmem:[#allocation9 + $0x78] sm:$0xff]
          %v2877 = vmul.f32 %v2845, 2.0
          %v2878 = vmul.f32 %v2846, 2.0
          %v2879 = vmul.f32 %v2847, 2.0
          %v2880 = vmul.f32 %v2848, 2.0
          %v2881 = vmul.f32 %v2849, 2.0
          %v2882 = vmul.f32 %v2850, 2.0
          %v2883 = vmul.f32 %v2851, 2.0
          %v2884 = vmul.f32 %v2852, 2.0
          %v2885 = vmul.f32 %v2853, 2.0
          %v2886 = vmul.f32 %v2854, 2.0
          %v2887 = vmul.f32 %v2855, 2.0
          %v2888 = vmul.f32 %v2856, 2.0
          %v2889 = vmul.f32 %v2857, 2.0
          %v2890 = vmul.f32 %v2858, 2.0
          %v2891 = vmul.f32 %v2859, 2.0
          %v2892 = vmul.f32 %v2860, 2.0
          %v2893 = vld [vmem:[#allocation8] sm:$0xff]
          %v2894 = vld [vmem:[#allocation8 + $0x8] sm:$0xff]
          %v2895 = vld [vmem:[#allocation8 + $0x10] sm:$0xff]
          %v2896 = vld [vmem:[#allocation8 + $0x18] sm:$0xff]
          %v2897 = vld [vmem:[#allocation8 + $0x20] sm:$0xff]
          %v2898 = vld [vmem:[#allocation8 + $0x28] sm:$0xff]
          %v2899 = vld [vmem:[#allocation8 + $0x30] sm:$0xff]
          %v2900 = vld [vmem:[#allocation8 + $0x38] sm:$0xff]
          %v2901 = vld [vmem:[#allocation8 + $0x40] sm:$0xff]
          %v2902 = vld [vmem:[#allocation8 + $0x48] sm:$0xff]
          %v2903 = vld [vmem:[#allocation8 + $0x50] sm:$0xff]
          %v2904 = vld [vmem:[#allocation8 + $0x58] sm:$0xff]
          %v2905 = vld [vmem:[#allocation8 + $0x60] sm:$0xff]
          %v2906 = vld [vmem:[#allocation8 + $0x68] sm:$0xff]
          %v2907 = vld [vmem:[#allocation8 + $0x70] sm:$0xff]
          %v2908 = vld [vmem:[#allocation8 + $0x78] sm:$0xff]
          %v2909 = vmul.f32 %v2877, %v2893
          %v2910 = vmul.f32 %v2878, %v2894
          %v2911 = vmul.f32 %v2879, %v2895
          %v2912 = vmul.f32 %v2880, %v2896
          %v2913 = vmul.f32 %v2881, %v2897
          %v2914 = vmul.f32 %v2882, %v2898
          %v2915 = vmul.f32 %v2883, %v2899
          %v2916 = vmul.f32 %v2884, %v2900
          %v2917 = vmul.f32 %v2885, %v2901
          %v2918 = vmul.f32 %v2886, %v2902
          %v2919 = vmul.f32 %v2887, %v2903
          %v2920 = vmul.f32 %v2888, %v2904
          %v2921 = vmul.f32 %v2889, %v2905
          %v2922 = vmul.f32 %v2890, %v2906
          %v2923 = vmul.f32 %v2891, %v2907
          %v2924 = vmul.f32 %v2892, %v2908
          %v2925 = vsub.f32 %v2861, %v2909
          %v2926 = vsub.f32 %v2862, %v2910
          %v2927 = vsub.f32 %v2863, %v2911
          %v2928 = vsub.f32 %v2864, %v2912
          %v2929 = vsub.f32 %v2865, %v2913
          %v2930 = vsub.f32 %v2866, %v2914
          %v2931 = vsub.f32 %v2867, %v2915
          %v2932 = vsub.f32 %v2868, %v2916
          %v2933 = vsub.f32 %v2869, %v2917
          %v2934 = vsub.f32 %v2870, %v2918
          %v2935 = vsub.f32 %v2871, %v2919
          %v2936 = vsub.f32 %v2872, %v2920
          %v2937 = vsub.f32 %v2873, %v2921
          %v2938 = vsub.f32 %v2874, %v2922
          %v2939 = vsub.f32 %v2875, %v2923
          %v2940 = vsub.f32 %v2876, %v2924
          %v2941 = vmul.f32 %v2829, %v2845
          %v2942 = vmul.f32 %v2830, %v2846
          %v2943 = vmul.f32 %v2831, %v2847
          %v2944 = vmul.f32 %v2832, %v2848
          %v2945 = vmul.f32 %v2833, %v2849
          %v2946 = vmul.f32 %v2834, %v2850
          %v2947 = vmul.f32 %v2835, %v2851
          %v2948 = vmul.f32 %v2836, %v2852
          %v2949 = vmul.f32 %v2837, %v2853
          %v2950 = vmul.f32 %v2838, %v2854
          %v2951 = vmul.f32 %v2839, %v2855
          %v2952 = vmul.f32 %v2840, %v2856
          %v2953 = vmul.f32 %v2841, %v2857
          %v2954 = vmul.f32 %v2842, %v2858
          %v2955 = vmul.f32 %v2843, %v2859
          %v2956 = vmul.f32 %v2844, %v2860
          %v2957 = vmul.f32 %v2941, %v2845
          %v2958 = vmul.f32 %v2942, %v2846
          %v2959 = vmul.f32 %v2943, %v2847
          %v2960 = vmul.f32 %v2944, %v2848
          %v2961 = vmul.f32 %v2945, %v2849
          %v2962 = vmul.f32 %v2946, %v2850
          %v2963 = vmul.f32 %v2947, %v2851
          %v2964 = vmul.f32 %v2948, %v2852
          %v2965 = vmul.f32 %v2949, %v2853
          %v2966 = vmul.f32 %v2950, %v2854
          %v2967 = vmul.f32 %v2951, %v2855
          %v2968 = vmul.f32 %v2952, %v2856
          %v2969 = vmul.f32 %v2953, %v2857
          %v2970 = vmul.f32 %v2954, %v2858
          %v2971 = vmul.f32 %v2955, %v2859
          %v2972 = vmul.f32 %v2956, %v2860
          %v2973 = vadd.f32 %v2925, %v2957
          %v2974 = vadd.f32 %v2926, %v2958
          %v2975 = vadd.f32 %v2927, %v2959
          %v2976 = vadd.f32 %v2928, %v2960
          %v2977 = vadd.f32 %v2929, %v2961
          %v2978 = vadd.f32 %v2930, %v2962
          %v2979 = vadd.f32 %v2931, %v2963
          %v2980 = vadd.f32 %v2932, %v2964
          %v2981 = vadd.f32 %v2933, %v2965
          %v2982 = vadd.f32 %v2934, %v2966
          %v2983 = vadd.f32 %v2935, %v2967
          %v2984 = vadd.f32 %v2936, %v2968
          %v2985 = vadd.f32 %v2937, %v2969
          %v2986 = vadd.f32 %v2938, %v2970
          %v2987 = vadd.f32 %v2939, %v2971
          %v2988 = vadd.f32 %v2940, %v2972
          %v2989 = vsel %vm1528, %v2813, 0.0
          %v2990 = vsel %vm1528, %v2814, 0.0
          %v2991 = vadd.f32 %v2989, %v2990
          %v2992 = vsel %vm1528, %v2815, 0.0
          %v2993 = vadd.f32 %v2991, %v2992
          %v2994 = vsel %vm1528, %v2816, 0.0
          %v2995 = vadd.f32 %v2993, %v2994
          %v2996 = vsel %vm1528, %v2817, 0.0
          %v2997 = vadd.f32 %v2995, %v2996
          %v2998 = vsel %vm1528, %v2818, 0.0
          %v2999 = vadd.f32 %v2997, %v2998
          %v3000 = vsel %vm1528, %v2819, 0.0
          %v3001 = vadd.f32 %v2999, %v3000
          %v3002 = vsel %vm1528, %v2820, 0.0
          %v3003 = vadd.f32 %v3001, %v3002
          %v3004 = vsel %vm1528, %v2821, 0.0
          %v3005 = vadd.f32 %v3003, %v3004
          %v3006 = vsel %vm1528, %v2822, 0.0
          %v3007 = vadd.f32 %v3005, %v3006
          %v3008 = vsel %vm1528, %v2823, 0.0
          %v3009 = vadd.f32 %v3007, %v3008
          %v3010 = vsel %vm1528, %v2824, 0.0
          %v3011 = vadd.f32 %v3009, %v3010
          %v3012 = vsel %vm1528, %v2825, 0.0
          %v3013 = vadd.f32 %v3011, %v3012
          %v3014 = vsel %vm1528, %v2826, 0.0
          %v3015 = vadd.f32 %v3013, %v3014
          %v3016 = vsel %vm1528, %v2827, 0.0
          %v3017 = vadd.f32 %v3015, %v3016
          %v3018 = vsel %vm1528, %v2828, 0.0
          %v3019 = vadd.f32 %v3017, %v3018
          %3020 = vadd.xlane.f32.xlu0 %v3019
          %v3021 = vpop.xlane.xlu0 %3020
          %v3022 = vrot.slane %v3021, 4
          %v3023 = vadd.f32 %v3021, %v3022
          %v3024 = vrot.slane %v3023, 2
          %v3025 = vadd.f32 %v3023, %v3024
          %v3026 = vrot.slane %v3025, 1
          %v3027 = vadd.f32 %v3025, %v3026
          %s3028 = vtos %v3027
          %v3029 = vsel %vm1528, %v2573, 0.0
          %v3030 = vsel %vm1528, %v2574, 0.0
          %v3031 = vadd.f32 %v3029, %v3030
          %v3032 = vsel %vm1528, %v2575, 0.0
          %v3033 = vadd.f32 %v3031, %v3032
          %v3034 = vsel %vm1528, %v2576, 0.0
          %v3035 = vadd.f32 %v3033, %v3034
          %v3036 = vsel %vm1528, %v2577, 0.0
          %v3037 = vadd.f32 %v3035, %v3036
          %v3038 = vsel %vm1528, %v2578, 0.0
          %v3039 = vadd.f32 %v3037, %v3038
          %v3040 = vsel %vm1528, %v2579, 0.0
          %v3041 = vadd.f32 %v3039, %v3040
          %v3042 = vsel %vm1528, %v2580, 0.0
          %v3043 = vadd.f32 %v3041, %v3042
          %v3044 = vsel %vm1528, %v2581, 0.0
          %v3045 = vadd.f32 %v3043, %v3044
          %v3046 = vsel %vm1528, %v2582, 0.0
          %v3047 = vadd.f32 %v3045, %v3046
          %v3048 = vsel %vm1528, %v2583, 0.0
          %v3049 = vadd.f32 %v3047, %v3048
          %v3050 = vsel %vm1528, %v2584, 0.0
          %v3051 = vadd.f32 %v3049, %v3050
          %v3052 = vsel %vm1528, %v2585, 0.0
          %v3053 = vadd.f32 %v3051, %v3052
          %v3054 = vsel %vm1528, %v2586, 0.0
          %v3055 = vadd.f32 %v3053, %v3054
          %v3056 = vsel %vm1528, %v2587, 0.0
          %v3057 = vadd.f32 %v3055, %v3056
          %v3058 = vsel %vm1528, %v2588, 0.0
          %v3059 = vadd.f32 %v3057, %v3058
          %3060 = vadd.xlane.f32.xlu0 %v3059
          %v3061 = vpop.xlane.xlu0 %3060
          %v3062 = vrot.slane %v3061, 4
          %v3063 = vadd.f32 %v3061, %v3062
          %v3064 = vrot.slane %v3063, 2
          %v3065 = vadd.f32 %v3063, %v3064
          %v3066 = vrot.slane %v3065, 1
          %v3067 = vadd.f32 %v3065, %v3066
          %s3068 = vtos %v3067
          %v3069 = vsel %vm1528, %v2973, 0.0
          %v3070 = vsel %vm1528, %v2974, 0.0
          %v3071 = vadd.f32 %v3069, %v3070
          %v3072 = vsel %vm1528, %v2975, 0.0
          %v3073 = vadd.f32 %v3071, %v3072
          %v3074 = vsel %vm1528, %v2976, 0.0
          %v3075 = vadd.f32 %v3073, %v3074
          %v3076 = vsel %vm1528, %v2977, 0.0
          %v3077 = vadd.f32 %v3075, %v3076
          %v3078 = vsel %vm1528, %v2978, 0.0
          %v3079 = vadd.f32 %v3077, %v3078
          %v3080 = vsel %vm1528, %v2979, 0.0
          %v3081 = vadd.f32 %v3079, %v3080
          %v3082 = vsel %vm1528, %v2980, 0.0
          %v3083 = vadd.f32 %v3081, %v3082
          %v3084 = vsel %vm1528, %v2981, 0.0
          %v3085 = vadd.f32 %v3083, %v3084
          %v3086 = vsel %vm1528, %v2982, 0.0
          %v3087 = vadd.f32 %v3085, %v3086
          %v3088 = vsel %vm1528, %v2983, 0.0
          %v3089 = vadd.f32 %v3087, %v3088
          %v3090 = vsel %vm1528, %v2984, 0.0
          %v3091 = vadd.f32 %v3089, %v3090
          %v3092 = vsel %vm1528, %v2985, 0.0
          %v3093 = vadd.f32 %v3091, %v3092
          %v3094 = vsel %vm1528, %v2986, 0.0
          %v3095 = vadd.f32 %v3093, %v3094
          %v3096 = vsel %vm1528, %v2987, 0.0
          %v3097 = vadd.f32 %v3095, %v3096
          %v3098 = vsel %vm1528, %v2988, 0.0
          %v3099 = vadd.f32 %v3097, %v3098
          %3100 = vadd.xlane.f32.xlu0 %v3099
          %v3101 = vpop.xlane.xlu0 %3100
          %v3102 = vrot.slane %v3101, 4
          %v3103 = vadd.f32 %v3101, %v3102
          %v3104 = vrot.slane %v3103, 2
          %v3105 = vadd.f32 %v3103, %v3104
          %v3106 = vrot.slane %v3105, 1
          %v3107 = vadd.f32 %v3105, %v3106
          %s3108 = vtos %v3107
          %vm3109 = vcmp.eq.s32.totalorder %v1156, 0
          %vm3110 = vcmp.eq.s32.totalorder %v1156, 1
          %vm3111 = vcmp.eq.s32.totalorder %v1156, 2
          %v3112 = vstv %s3108
          %v3113 = vsel %vm3111, %v3112, 0.0
          %v3114 = vstv %s3068
          %v3115 = vsel %vm3110, %v3114, %v3113
          %v3116 = vstv %s3028
          %v3117 = vsel %vm3109, %v3116, %v3115
          %3118 = vst [vmem:[%s453] sm:$0xff] %v3117
        $region94: #{tpu_custom_call.1} parent=77 // pred_fallthru
          _
        %s3119 = sand.u32 %s199, 1
        %s3120 = scalar_lea.sflag [#allocation13], %s3119
        %s3121 = sand.u32 %s199, 1
        %s3122 = smul.addr %s3121, 8
        %s3123 = scalar_lea.vmem [#allocation14], %s3122
        // Predicated region
        $region95: #{tpu_custom_call.1} parent=77 // pred_check
          %p3124 = pneg %p209
        $region96: #{tpu_custom_call.1} parent=77 // pred_check_branch
          %3126 = sbr.rel (%p3124) target = $region98
        $region97: #{tpu_custom_call.1} parent=77 // pred_region
          %s3128 = ssub.s32 128, 128
          %3129 = vsyncadd %s3120, %s3128
          %s3130 = smul.addr %s27, 128
          %s3131 = scalar_lea.hbm %s6, %s3130
          %s3133 = sshll.u32 %s3123, 4
          %s3134 = int_to_ptr.vmem [resolvable:$true] %s3133
          %3136 = dma.vmem_to_hbm [thread:$0]  %s3134, 128, %s3131, %s3120
        $region98: #{tpu_custom_call.1} parent=77 // pred_fallthru
          _
      $region78: #{tpu_custom_call.1} parent=5 // pred_fallthru
        _
      %p3137 = scmp.le.s32.totalorder 2, %s18
      // Predicated region
      $region99: #{tpu_custom_call.1} parent=5 // pred_check
        %p3138 = pneg %p3137
      $region100: #{tpu_custom_call.1} parent=5 // pred_check_branch
        %3140 = sbr.rel (%p3138) target = $region102
      $region101: #{tpu_custom_call.1} parent=5 // pred_region
        %s3141 = ssub.s32 %s18, 2
        // Predicated region
        $region103: #{tpu_custom_call.1} parent=101 // pred_check
          %p3142 = pneg %p215
        $region104: #{tpu_custom_call.1} parent=101 // pred_check_branch
          %3144 = sbr.rel (%p3142) target = $region106
        $region105: #{tpu_custom_call.1} parent=101 // pred_region
          %s3145 = sand.u32 %s200, 1
          %s3146 = scalar_lea.sflag [#allocation13], %s3145
          %s3147 = sand.u32 %s200, 1
          %s3148 = smul.addr %s3147, 8
          %s3149 = scalar_lea.vmem [#allocation14], %s3148
          %3150 = dma.done %s3146, 128
        $region106: #{tpu_custom_call.1} parent=101 // pred_fallthru
          _
      $region102: #{tpu_custom_call.1} parent=5 // pred_fallthru
        _
    $region6: #{tpu_custom_call.1} parent=1 // loop_footer
      %s22 = sadd.s32 1, %s18
    $region7: #{tpu_custom_call.1} parent=1 // loop_footer_branch
      %17 = sbr.rel target = $region3
    $region8: #{tpu_custom_call.1} parent=1 // loop_exit
      _
    %3151 = vsyncpa [#allocation12], 1
    %s3152 = scalar_lea.sflag [#allocation12], 1
    %3153 = vsyncpa %s3152, 1
    %3154 = vsyncpa [#allocation13], 1
    %s3155 = scalar_lea.sflag [#allocation13], 1
    %3156 = vsyncpa %s3155, 1

</llo_original>
